<compile_context>
chip_gen: v6e
topology: v6e:2x2x1
jax: 0.10.0
libtpu: 0.0.40
codegen_flags: <defaults>
</compile_context>

<pallas_src>
import functools

import jax
import jax.numpy as jnp
import numpy as np
from jax import lax
from jax.experimental import pallas as pl
from jax.experimental.pallas import tpu as pltpu

EPS = 1e-5
LANE = 128          # channels > 128 are padded to a multiple of this
TM = 256            # row tile for the im2col stem matmul
TN = 256            # output-channel tile for the stem matmul
ROW_TARGET = 1024   # target flattened rows per in-kernel dwsep row tile
# Explicit scoped-VMEM cap: well above v5e/v6e defaults (16/32 MiB), safely
# below v7x's 64 MiB physical VMEM.
VMEM_LIMIT = 48 * 1024 * 1024


def _rup(x, m):
    return ((x + m - 1) // m) * m


def _pad_c(c):
    """Lane-pad only channel counts above one vreg width (review: early
    small-channel layers are memory-bound; 128-padding them wastes traffic)."""
    return c if c <= LANE else _rup(c, LANE)


# ----------------------------- Pallas kernels -----------------------------

def _matmul_bn_act_kernel(a_ref, b_ref, s_ref, c_ref, o_ref, *, relu):
    acc = jnp.dot(a_ref[...], b_ref[...], preferred_element_type=jnp.float32)
    acc = acc * s_ref[...] + c_ref[...]
    if relu:
        acc = jnp.maximum(acc, 0.0)
    o_ref[...] = acc.astype(o_ref.dtype)


def matmul_bn_act(a, b, scale, bias, *, relu, out_dtype):
    """relu?((a @ b) * scale + bias).  a:(M,K) bf16, b:(K,Np) bf16,
    scale/bias:(1,Np) f32.  Row tile chosen with minimal padding."""
    a = a.astype(jnp.bfloat16)
    M, K = a.shape
    Kb, Np = b.shape
    assert K == Kb
    tn = TN if Np % TN == 0 else (LANE if Np % LANE == 0 else Np)
    nm = pl.cdiv(M, TM)
    tm = _rup(-(-M // nm), 8)          # minimal-pad row tile (392 -> 400)
    Mp = tm * nm
    if Mp != M:
        a = jnp.pad(a, ((0, Mp - M), (0, 0)))
    out = pl.pallas_call(
        functools.partial(_matmul_bn_act_kernel, relu=relu),
        out_shape=jax.ShapeDtypeStruct((Mp, Np), out_dtype),
        grid=(Mp // tm, Np // tn),
        in_specs=[
            pl.BlockSpec((tm, K), lambda i, j: (i, 0)),
            pl.BlockSpec((K, tn), lambda i, j: (0, j)),
            pl.BlockSpec((1, tn), lambda i, j: (0, j)),
            pl.BlockSpec((1, tn), lambda i, j: (0, j)),
        ],
        out_specs=pl.BlockSpec((tm, tn), lambda i, j: (i, j)),
        compiler_params=pltpu.CompilerParams(
            dimension_semantics=("parallel", "parallel"),
            vmem_limit_bytes=VMEM_LIMIT),
    )(a, b, scale, bias)
    return out[:M]


def _dwsep_block_kernel(x_ref, dww_ref, dws_ref, dwb_ref,
                        pww_ref, pws_ref, pwb_ref, o_ref,
                        *, stride, wq, wo, ho, row_tile):
    """Fused depthwise3x3 + BN + ReLU + pointwise1x1 + BN + ReLU for one image.

    x_ref : (1, s*s, Mq, Cin) bf16 -- polyphase-decomposed, spatially
            flattened, zero-padded activation (VMEM-resident for the step).
    o_ref : (1, Ho+3, Wo+2, Cout) bf16 -- written already zero-padded for the
            next block (1-px halo + 1 spare bottom row); valid region lives at
            rows [1, 1+Ho) and cols [1, 1+Wo).
    Compute is tiled over output rows so f32 temporaries stay small (VMEM/
    spill control); the tile loop is a static Python unroll because the last
    tile may be ragged."""
    s = stride
    off = 2 // s                          # max tap offset in the phase grid
    cout = o_ref.shape[-1]

    # hoisted parameter loads (reused by every row tile)
    dw_w = dww_ref[...]                   # (16, Cin) f32; rows 0..8 = taps
    dw_s, dw_b = dws_ref[...], dwb_ref[...]
    pw_w = pww_ref[...]                   # (Cin, Cout) bf16
    pw_s, pw_b = pws_ref[...], pwb_ref[...]

    o_ref[...] = jnp.zeros_like(o_ref)    # zero the halo / spare rows

    for r0 in range(0, ho, row_tile):     # static unroll over row tiles
        rt = min(row_tile, ho - r0)
        lw = rt * wq                      # "wide grid" rows of this tile
        win = off * (wq + 1) + lw         # slab window incl. tap overrun
        # one bf16->f32 cast per phase window (not per tap; v5e-friendly)
        xw = [x_ref[0, p, r0 * wq:r0 * wq + win, :].astype(jnp.float32)
              for p in range(s * s)]
        acc = None
        for kh in range(3):               # 9 taps, fully unrolled
            for kw in range(3):
                p = (kh % s) * s + (kw % s)
                st = (kh // s) * wq + (kw // s)
                k = kh * 3 + kw
                t = xw[p][st:st + lw, :] * dw_w[k:k + 1, :]
                acc = t if acc is None else acc + t
        dw = jnp.maximum(acc * dw_s + dw_b, 0.0)
        # fused 1x1 pointwise conv straight off VMEM (bf16 MXU, f32 acc)
        y = jnp.dot(dw.astype(jnp.bfloat16), pw_w,
                    preferred_element_type=jnp.float32)
        y = jnp.maximum(y * pw_s + pw_b, 0.0)
        # keep only the Wo valid columns of the wide grid and store them into
        # the padded output at [1+r0 : 1+r0+rt, 1 : 1+Wo]  (lane dim = Cout
        # stays dense).
        yw = y.reshape(rt, wq, cout)[:, :wo, :].astype(o_ref.dtype)
        o_ref[0, 1 + r0:1 + r0 + rt, 1:1 + wo, :] = yw


def dwsep_block(xpad, blk, stride):
    """xpad: (N, H+3, W+2, Cin) bf16 -- activation already zero-padded with a
    1-px halo plus one spare bottom row (produced by the previous block or the
    stem glue).  Returns the next padded activation (N, Ho+3, Wo+2, Cout)."""
    dw_w, dw_s, dw_b, pw_w, pw_s, pw_b = blk
    N, Hp1, Wp, Cp = xpad.shape
    H, W = Hp1 - 3, Wp - 2
    s = stride
    # standard MobileNet shapes only: stride-2 blocks need even padded dims.
    assert (H + 2) % s == 0 and (W + 2) % s == 0
    Ho = (H + 2 - 3) // s + 1
    Wo = (W + 2 - 3) // s + 1
    Cout = pw_w.shape[1]

    if s == 1:
        # previous kernel's padded output is consumed by a pure reshape:
        # zero HBM glue passes for stride-1 blocks.
        Wq = W + 2
        slab = xpad.reshape(N, 1, Hp1 * Wp, Cp)
    else:
        # stride 2: polyphase-decompose (no tap duplication) in one glue pass.
        Hq, Wq = (H + 2) // s, (W + 2) // s
        ph = xpad[:, :H + 2, :, :].reshape(N, Hq, s, Wq, s, Cp)
        slab = ph.transpose(0, 2, 4, 1, 3, 5).reshape(N, s * s, Hq * Wq, Cp)
    Mq = slab.shape[2]

    # Max flat row any tap window touches (garbage columns of the wide grid
    # may overrun the valid region by a couple of rows) -- assert/pad so every
    # in-kernel window slice is in bounds.
    off = 2 // s
    need = Ho * Wq + off * (Wq + 1)
    if need > Mq:                          # only stride 2; <= 8 rows
        extra = _rup(need - Mq, 8)
        slab = jnp.pad(slab, ((0, 0), (0, 0), (0, extra), (0, 0)))
        Mq += extra
    assert Mq >= need

    row_tile = max(1, min(Ho, ROW_TARGET // Wq))

    out = pl.pallas_call(
        functools.partial(_dwsep_block_kernel, stride=s, wq=Wq, wo=Wo, ho=Ho,
                          row_tile=row_tile),
        out_shape=jax.ShapeDtypeStruct((N, Ho + 3, Wo + 2, Cout), jnp.bfloat16),
        grid=(N,),
        in_specs=[
            pl.BlockSpec((1, s * s, Mq, Cp), lambda n: (n, 0, 0, 0)),
            pl.BlockSpec((16, Cp), lambda n: (0, 0)),
            pl.BlockSpec((1, Cp), lambda n: (0, 0)),
            pl.BlockSpec((1, Cp), lambda n: (0, 0)),
            pl.BlockSpec((Cp, Cout), lambda n: (0, 0)),
            pl.BlockSpec((1, Cout), lambda n: (0, 0)),
            pl.BlockSpec((1, Cout), lambda n: (0, 0)),
        ],
        out_specs=pl.BlockSpec((1, Ho + 3, Wo + 2, Cout),
                               lambda n: (n, 0, 0, 0)),
        compiler_params=pltpu.CompilerParams(
            dimension_semantics=("parallel",),   # batch splits across TCs
            vmem_limit_bytes=VMEM_LIMIT),
    )(slab, dw_w, dw_s, dw_b, pw_w, pw_s, pw_b)
    return out


def _pool_fc_kernel(x_ref, w_ref, b_ref, o_ref):
    pooled = jnp.mean(x_ref[...].astype(jnp.float32), axis=1)       # (N, Cp)
    y = jnp.dot(pooled.astype(jnp.bfloat16), w_ref[...],
                preferred_element_type=jnp.float32)
    o_ref[...] = y + b_ref[...]


def pool_fc(x, w, b):
    """Fused AvgPool2d(7) + Linear in a SINGLE grid step (pooling is not
    recomputed per output tile; the whole (Cp, Np) bf16 weight fits VMEM)."""
    N, HW, Cp = x.shape
    _, Np = w.shape
    return pl.pallas_call(
        _pool_fc_kernel,
        out_shape=jax.ShapeDtypeStruct((N, Np), jnp.float32),
        grid=(1,),
        in_specs=[
            pl.BlockSpec((N, HW, Cp), lambda i: (0, 0, 0)),
            pl.BlockSpec((Cp, Np), lambda i: (0, 0)),
            pl.BlockSpec((1, Np), lambda i: (0, 0)),
        ],
        out_specs=pl.BlockSpec((N, Np), lambda i: (0, 0)),
        compiler_params=pltpu.CompilerParams(
            dimension_semantics=("arbitrary",),
            vmem_limit_bytes=VMEM_LIMIT),
    )(x, w, b)


# ------------------------------ JAX glue ------------------------------

def _im2col_3x3_s2(x):
    """x: (N,H,W,C) -> (N*Ho*Wo, 9*C) patches for the 3x3 / stride-2 / pad-1
    stem conv (C=3, so the 9x duplication here is negligible)."""
    N, H, W, C = x.shape
    xp = jnp.pad(x, ((0, 0), (1, 1), (1, 1), (0, 0)))
    Ho = (H - 1) // 2 + 1
    Wo = (W - 1) // 2 + 1
    views = []
    for kh in range(3):
        for kw in range(3):
            views.append(xp[:, kh:kh + 2 * (Ho - 1) + 1:2,
                            kw:kw + 2 * (Wo - 1) + 1:2, :])
    A = jnp.stack(views, axis=3).reshape(N * Ho * Wo, 9 * C)
    return A, Ho, Wo


def init_params(key, init_features, channels):
    """Raw synthetic params (conv weights HWIO, BN folded to scale/bias)."""
    ks = iter(jax.random.split(key, 64))

    def nrm(shape, s=0.1):
        return s * jax.random.normal(next(ks), shape, jnp.float32)

    def bn(c):
        gamma = 1.0 + nrm((c,))
        beta = nrm((c,))
        mean = nrm((c,))
        var = 1.0 + jnp.abs(nrm((c,)))
        scale = gamma / jnp.sqrt(var + EPS)
        bias = beta - mean * scale
        return scale, bias

    params = {"conv0_w": nrm((3, 3, 3, init_features)),
              "bn0": bn(init_features)}
    in_c = init_features
    blocks = []
    for out_c in channels:
        blocks.append((nrm((3, 3, in_c)), bn(in_c),
                       nrm((in_c, out_c)), bn(out_c)))
        in_c = out_c
    params["blocks"] = blocks
    params["fc_w"] = nrm((in_c, 1000), 0.05)
    params["fc_b"] = nrm((1000,))
    return params


def prepare_params(params, init_features, channels):
    """One-time layout prep: pad channels to lane multiples ONLY above 128,
    cast matmul weights to bf16, put depthwise taps in a dense (16, C) slab,
    shape BN affines as (1, C)."""
    def pad_vec(v, n):
        return jnp.pad(v, (0, n - v.shape[0])).reshape(1, n).astype(jnp.float32)

    Fp = _pad_c(init_features)
    k0 = 9 * 3
    Kp = _rup(k0, 16)                       # bf16 sublane packing
    w0 = params["conv0_w"].reshape(k0, init_features)
    w0 = jnp.pad(w0, ((0, Kp - k0), (0, Fp - init_features))).astype(jnp.bfloat16)
    prep = {"conv0_w": w0,
            "bn0_s": pad_vec(params["bn0"][0], Fp),
            "bn0_b": pad_vec(params["bn0"][1], Fp)}
    in_c, in_p = init_features, Fp
    blocks = []
    for (dw_w, dw_bn, pw_w, pw_bn), out_c in zip(params["blocks"], channels):
        out_p = _pad_c(out_c)
        dww = jnp.pad(dw_w.reshape(9, in_c),
                      ((0, 16 - 9), (0, in_p - in_c))).astype(jnp.float32)
        pww = jnp.pad(pw_w, ((0, in_p - in_c),
                             (0, out_p - out_c))).astype(jnp.bfloat16)
        blocks.append((dww,
                       pad_vec(dw_bn[0], in_p), pad_vec(dw_bn[1], in_p),
                       pww,
                       pad_vec(pw_bn[0], out_p), pad_vec(pw_bn[1], out_p)))
        in_c, in_p = out_c, out_p
    prep["blocks"] = blocks
    Np = _rup(1000, LANE)
    prep["fc_w"] = jnp.pad(params["fc_w"],
                           ((0, in_p - in_c), (0, Np - 1000))).astype(jnp.bfloat16)
    prep["fc_b"] = pad_vec(params["fc_b"], Np)
    return prep


def mobilenet_forward(x_nchw, prep, strides):
    x = jnp.transpose(x_nchw, (0, 2, 3, 1)).astype(jnp.bfloat16)  # NCHW -> NHWC
    N = x.shape[0]

    # conv_0: 3x3 stride-2 pad-1 conv as im2col + fused matmul/BN/ReLU
    A, Ho, Wo = _im2col_3x3_s2(x)
    Kp = prep["conv0_w"].shape[0]
    A = jnp.pad(A, ((0, 0), (0, Kp - A.shape[1])))
    y = matmul_bn_act(A, prep["conv0_w"], prep["bn0_s"], prep["bn0_b"],
                      relu=True, out_dtype=jnp.bfloat16)
    x = y.reshape(N, Ho, Wo, -1)
    # hand the first block an already-padded map (1-px halo + 1 spare row);
    # every dwsep block emits its output in this layout so later stride-1
    # blocks chain with zero XLA glue.
    xpad = jnp.pad(x, ((0, 0), (1, 2), (1, 1), (0, 0)))

    # fused depthwise(3x3)+BN+ReLU+pointwise(1x1)+BN+ReLU blocks
    for blk, stride in zip(prep["blocks"], strides):
        xpad = dwsep_block(xpad, blk, stride)

    # AvgPool2d(7) fused into the Linear classifier
    Nb, Hp1, Wp, Cp = xpad.shape
    H, W = Hp1 - 3, Wp - 2
    assert H == 7 and W == 7, "final feature map must be 7x7 for AvgPool2d(7)"
    feat = xpad[:, 1:1 + H, 1:1 + W, :].reshape(Nb, H * W, Cp)
    logits = pool_fc(feat, prep["fc_w"], prep["fc_b"])
    return logits[:, :1000]


# --------------------------- pure-JAX reference ---------------------------

def ref_forward(x_nchw, params, strides):
    def bn_apply(x, sb):
        s, b = sb
        return x * s.reshape(1, -1, 1, 1) + b.reshape(1, -1, 1, 1)

    x = x_nchw.astype(jnp.float32)
    x = lax.conv_general_dilated(x, params["conv0_w"], (2, 2), ((1, 1), (1, 1)),
                                 dimension_numbers=("NCHW", "HWIO", "NCHW"))
    x = jnp.maximum(bn_apply(x, params["bn0"]), 0.0)
    for (dw_w, dw_bn, pw_w, pw_bn), stride in zip(params["blocks"], strides):
        C = x.shape[1]
        x = lax.conv_general_dilated(x, dw_w.reshape(3, 3, 1, C),
                                     (stride, stride), ((1, 1), (1, 1)),
                                     dimension_numbers=("NCHW", "HWIO", "NCHW"),
                                     feature_group_count=C)
        x = jnp.maximum(bn_apply(x, dw_bn), 0.0)
        x = lax.conv_general_dilated(x, pw_w.reshape(1, 1, *pw_w.shape),
                                     (1, 1), ((0, 0), (0, 0)),
                                     dimension_numbers=("NCHW", "HWIO", "NCHW"))
        x = jnp.maximum(bn_apply(x, pw_bn), 0.0)
    x = jnp.mean(x, axis=(2, 3))
    return x @ params["fc_w"] + params["fc_b"]


# ------------------------------- main -------------------------------

if __name__ == "__main__":
    key = jax.random.PRNGKey(0)
    kx, kp = jax.random.split(key)

    init_features = 8
    channels = (16, 32)
    strides = (1, 2)
    # 28x28 input -> conv_0 (s2) 14x14 -> block0 (s1) 14x14 -> block1 (s2) 7x7,
    # so AvgPool2d(7) exactly covers the final feature map (as in MobileNet).
    x = jax.random.normal(kx, (2, 3, 28, 28), jnp.float32)
    params = init_params(kp, init_features, channels)
    prep = prepare_params(params, init_features, channels)

    fwd = jax.jit(functools.partial(mobilenet_forward, strides=strides))
    out = jax.block_until_ready(fwd(x, prep))
    ref = jax.block_until_ready(ref_forward(x, params, strides))

    assert out.shape == (2, 1000)
    # bf16 MXU operands / bf16 inter-layer activations => looser tolerance.
    np.testing.assert_allclose(np.asarray(out), np.asarray(ref),
                               rtol=2e-2, atol=2e-2)
    print("KERNEL_OK")
</pallas_src>

<mosaic_0001>
module attributes {stable_mosaic.version = 11 : i64} {
  func.func @_matmul_bn_act_kernel(%arg0: i32, %arg1: i32, %arg2: memref<200x32xbf16, #tpu.memory_space<vmem>>, %arg3: memref<32x8xbf16, #tpu.memory_space<vmem>>, %arg4: memref<1x8xf32, #tpu.memory_space<vmem>>, %arg5: memref<1x8xf32, #tpu.memory_space<vmem>>, %arg6: memref<200x8xbf16, #tpu.memory_space<vmem>>) attributes {dimension_semantics = [#tpu.dimension_semantics<parallel>, #tpu.dimension_semantics<parallel>], iteration_bounds = array<i64: 2, 1>, scalar_prefetch = 0 : i64, scratch_operands = 0 : i64, tpu.core_type = #tpu.core_type<tc>, window_params = [{transform_indices = @transform_0, window_bounds = array<i64: 200, 32>}, {transform_indices = @transform_1, window_bounds = array<i64: 32, 8>}, {transform_indices = @transform_2, window_bounds = array<i64: 1, 8>}, {transform_indices = @transform_3, window_bounds = array<i64: 1, 8>}, {transform_indices = @transform_4, window_bounds = array<i64: 200, 8>}]} {
    %c0 = arith.constant 0 : index
    %c0_0 = arith.constant 0 : index
    %0 = vector.load %arg2[%c0, %c0_0] : memref<200x32xbf16, #tpu.memory_space<vmem>>, vector<200x32xbf16>
    %c0_1 = arith.constant 0 : index
    %c0_2 = arith.constant 0 : index
    %1 = vector.load %arg3[%c0_1, %c0_2] : memref<32x8xbf16, #tpu.memory_space<vmem>>, vector<32x8xbf16>
    %cst = arith.constant dense<0.000000e+00> : vector<200x8xf32>
    %2 = tpu.matmul %0, %1, %cst {dimension_numbers = #tpu.dot_dimension_numbers<[1], [0], [0], [1], [0, 0, 1, 1], [], []>} : vector<200x32xbf16>, vector<32x8xbf16>, vector<200x8xf32> -> vector<200x8xf32>
    %c0_3 = arith.constant 0 : index
    %c0_4 = arith.constant 0 : index
    %3 = vector.load %arg4[%c0_3, %c0_4] : memref<1x8xf32, #tpu.memory_space<vmem>>, vector<1x8xf32>
    %4 = vector.broadcast %3 : vector<1x8xf32> to vector<200x8xf32>
    %5 = arith.mulf %2, %4 : vector<200x8xf32>
    %c0_5 = arith.constant 0 : index
    %c0_6 = arith.constant 0 : index
    %6 = vector.load %arg5[%c0_5, %c0_6] : memref<1x8xf32, #tpu.memory_space<vmem>>, vector<1x8xf32>
    %7 = vector.broadcast %6 : vector<1x8xf32> to vector<200x8xf32>
    %8 = arith.addf %5, %7 : vector<200x8xf32>
    %cst_7 = arith.constant 0.000000e+00 : f32
    %9 = vector.broadcast %cst_7 : f32 to vector<200x8xf32>
    %10 = arith.maximumf %8, %9 : vector<200x8xf32>
    %11 = arith.truncf %10 : vector<200x8xf32> to vector<200x8xbf16>
    %c0_8 = arith.constant 0 : index
    %c0_9 = arith.constant 0 : index
    %12 = vector.load %arg6[%c0_8, %c0_9] : memref<200x8xbf16, #tpu.memory_space<vmem>>, vector<200x8xbf16>
    tpu.vector_store %arg6[%c0_8, %c0_9], %11 {strides = array<i32>} : memref<200x8xbf16, #tpu.memory_space<vmem>>, vector<200x8xbf16>,
    return
  }
  func.func @transform_0(%arg0: i32, %arg1: i32) -> (i32, i32) {
    %c0_i32 = arith.constant 0 : i32
    %c0_i32_0 = arith.constant 0 : i32
    return %arg0, %c0_i32 : i32, i32
  }
  func.func @transform_1(%arg0: i32, %arg1: i32) -> (i32, i32) {
    %c0_i32 = arith.constant 0 : i32
    %c0_i32_0 = arith.constant 0 : i32
    return %c0_i32, %arg1 : i32, i32
  }
  func.func @transform_2(%arg0: i32, %arg1: i32) -> (i32, i32) {
    %c0_i32 = arith.constant 0 : i32
    %c0_i32_0 = arith.constant 0 : i32
    return %c0_i32, %arg1 : i32, i32
  }
  func.func @transform_3(%arg0: i32, %arg1: i32) -> (i32, i32) {
    %c0_i32 = arith.constant 0 : i32
    %c0_i32_0 = arith.constant 0 : i32
    return %c0_i32, %arg1 : i32, i32
  }
  func.func @transform_4(%arg0: i32, %arg1: i32) -> (i32, i32) {
    %c0_i32 = arith.constant 0 : i32
    return %arg0, %arg1 : i32, i32
  }
}

module attributes {stable_mosaic.version = 11 : i64} {
  func.func @_dwsep_block_kernel(%arg0: i32, %arg1: memref<1x1x272x8xbf16, #tpu.memory_space<vmem>>, %arg2: memref<16x8xf32, #tpu.memory_space<vmem>>, %arg3: memref<1x8xf32, #tpu.memory_space<vmem>>, %arg4: memref<1x8xf32, #tpu.memory_space<vmem>>, %arg5: memref<8x16xbf16, #tpu.memory_space<vmem>>, %arg6: memref<1x16xf32, #tpu.memory_space<vmem>>, %arg7: memref<1x16xf32, #tpu.memory_space<vmem>>, %arg8: memref<1x17x16x16xbf16, #tpu.memory_space<vmem>>) attributes {dimension_semantics = [#tpu.dimension_semantics<parallel>], iteration_bounds = array<i64: 2>, scalar_prefetch = 0 : i64, scratch_operands = 0 : i64, tpu.core_type = #tpu.core_type<tc>, window_params = [{transform_indices = @transform_0, window_bounds = array<i64: 1, 1, 272, 8>}, {pipeline_mode = #tpu.pipeline_mode<synchronous>, transform_indices = @transform_1, window_bounds = array<i64: 16, 8>}, {pipeline_mode = #tpu.pipeline_mode<synchronous>, transform_indices = @transform_2, window_bounds = array<i64: 1, 8>}, {pipeline_mode = #tpu.pipeline_mode<synchronous>, transform_indices = @transform_3, window_bounds = array<i64: 1, 8>}, {pipeline_mode = #tpu.pipeline_mode<synchronous>, transform_indices = @transform_4, window_bounds = array<i64: 8, 16>}, {pipeline_mode = #tpu.pipeline_mode<synchronous>, transform_indices = @transform_5, window_bounds = array<i64: 1, 16>}, {pipeline_mode = #tpu.pipeline_mode<synchronous>, transform_indices = @transform_6, window_bounds = array<i64: 1, 16>}, {transform_indices = @transform_7, window_bounds = array<i64: 1, 17, 16, 16>}]} {
    %c0 = arith.constant 0 : index
    %c0_0 = arith.constant 0 : index
    %0 = vector.load %arg2[%c0, %c0_0] : memref<16x8xf32, #tpu.memory_space<vmem>>, vector<16x8xf32>
    %c0_1 = arith.constant 0 : index
    %c0_2 = arith.constant 0 : index
    %1 = vector.load %arg3[%c0_1, %c0_2] : memref<1x8xf32, #tpu.memory_space<vmem>>, vector<1x8xf32>
    %c0_3 = arith.constant 0 : index
    %c0_4 = arith.constant 0 : index
    %2 = vector.load %arg4[%c0_3, %c0_4] : memref<1x8xf32, #tpu.memory_space<vmem>>, vector<1x8xf32>
    %c0_5 = arith.constant 0 : index
    %c0_6 = arith.constant 0 : index
    %3 = vector.load %arg5[%c0_5, %c0_6] : memref<8x16xbf16, #tpu.memory_space<vmem>>, vector<8x16xbf16>
    %c0_7 = arith.constant 0 : index
    %c0_8 = arith.constant 0 : index
    %4 = vector.load %arg6[%c0_7, %c0_8] : memref<1x16xf32, #tpu.memory_space<vmem>>, vector<1x16xf32>
    %c0_9 = arith.constant 0 : index
    %c0_10 = arith.constant 0 : index
    %5 = vector.load %arg7[%c0_9, %c0_10] : memref<1x16xf32, #tpu.memory_space<vmem>>, vector<1x16xf32>
    %cst = arith.constant 0.000000e+00 : bf16
    %6 = vector.broadcast %cst : bf16 to vector<1x17x16x16xbf16>
    %c0_11 = arith.constant 0 : index
    %c0_12 = arith.constant 0 : index
    %c0_13 = arith.constant 0 : index
    %c0_14 = arith.constant 0 : index
    %7 = vector.load %arg8[%c0_11, %c0_12, %c0_13, %c0_14] : memref<1x17x16x16xbf16, #tpu.memory_space<vmem>>, vector<1x17x16x16xbf16>
    tpu.vector_store %arg8[%c0_11, %c0_12, %c0_13, %c0_14], %6 {strides = array<i32>} : memref<1x17x16x16xbf16, #tpu.memory_space<vmem>>, vector<1x17x16x16xbf16>,
    %c0_15 = arith.constant 0 : index
    %c0_16 = arith.constant 0 : index
    %c0_17 = arith.constant 0 : index
    %c0_18 = arith.constant 0 : index
    %8 = vector.load %arg1[%c0_15, %c0_16, %c0_17, %c0_18] : memref<1x1x272x8xbf16, #tpu.memory_space<vmem>>, vector<1x1x258x8xbf16>
    %9 = vector.shape_cast %8 : vector<1x1x258x8xbf16> to vector<258x8xbf16>
    %10 = arith.extf %9 : vector<258x8xbf16> to vector<258x8xf32>
    %11 = vector.extract_strided_slice %10 {offsets = [0, 0], sizes = [224, 8], strides = [1, 1]} : vector<258x8xf32> to vector<224x8xf32>
    %12 = vector.extract_strided_slice %0 {offsets = [0, 0], sizes = [1, 8], strides = [1, 1]} : vector<16x8xf32> to vector<1x8xf32>
    %13 = vector.broadcast %12 : vector<1x8xf32> to vector<224x8xf32>
    %14 = arith.mulf %11, %13 : vector<224x8xf32>
    %15 = vector.extract_strided_slice %10 {offsets = [1, 0], sizes = [224, 8], strides = [1, 1]} : vector<258x8xf32> to vector<224x8xf32>
    %16 = vector.extract_strided_slice %0 {offsets = [1, 0], sizes = [1, 8], strides = [1, 1]} : vector<16x8xf32> to vector<1x8xf32>
    %17 = vector.broadcast %16 : vector<1x8xf32> to vector<224x8xf32>
    %18 = arith.mulf %15, %17 : vector<224x8xf32>
    %19 = arith.addf %14, %18 : vector<224x8xf32>
    %20 = vector.extract_strided_slice %10 {offsets = [2, 0], sizes = [224, 8], strides = [1, 1]} : vector<258x8xf32> to vector<224x8xf32>
    %21 = vector.extract_strided_slice %0 {offsets = [2, 0], sizes = [1, 8], strides = [1, 1]} : vector<16x8xf32> to vector<1x8xf32>
    %22 = vector.broadcast %21 : vector<1x8xf32> to vector<224x8xf32>
    %23 = arith.mulf %20, %22 : vector<224x8xf32>
    %24 = arith.addf %19, %23 : vector<224x8xf32>
    %25 = vector.extract_strided_slice %10 {offsets = [16, 0], sizes = [224, 8], strides = [1, 1]} : vector<258x8xf32> to vector<224x8xf32>
    %26 = vector.extract_strided_slice %0 {offsets = [3, 0], sizes = [1, 8], strides = [1, 1]} : vector<16x8xf32> to vector<1x8xf32>
    %27 = vector.broadcast %26 : vector<1x8xf32> to vector<224x8xf32>
    %28 = arith.mulf %25, %27 : vector<224x8xf32>
    %29 = arith.addf %24, %28 : vector<224x8xf32>
    %30 = vector.extract_strided_slice %10 {offsets = [17, 0], sizes = [224, 8], strides = [1, 1]} : vector<258x8xf32> to vector<224x8xf32>
    %31 = vector.extract_strided_slice %0 {offsets = [4, 0], sizes = [1, 8], strides = [1, 1]} : vector<16x8xf32> to vector<1x8xf32>
    %32 = vector.broadcast %31 : vector<1x8xf32> to vector<224x8xf32>
    %33 = arith.mulf %30, %32 : vector<224x8xf32>
    %34 = arith.addf %29, %33 : vector<224x8xf32>
    %35 = vector.extract_strided_slice %10 {offsets = [18, 0], sizes = [224, 8], strides = [1, 1]} : vector<258x8xf32> to vector<224x8xf32>
    %36 = vector.extract_strided_slice %0 {offsets = [5, 0], sizes = [1, 8], strides = [1, 1]} : vector<16x8xf32> to vector<1x8xf32>
    %37 = vector.broadcast %36 : vector<1x8xf32> to vector<224x8xf32>
    %38 = arith.mulf %35, %37 : vector<224x8xf32>
    %39 = arith.addf %34, %38 : vector<224x8xf32>
    %40 = vector.extract_strided_slice %10 {offsets = [32, 0], sizes = [224, 8], strides = [1, 1]} : vector<258x8xf32> to vector<224x8xf32>
    %41 = vector.extract_strided_slice %0 {offsets = [6, 0], sizes = [1, 8], strides = [1, 1]} : vector<16x8xf32> to vector<1x8xf32>
    %42 = vector.broadcast %41 : vector<1x8xf32> to vector<224x8xf32>
    %43 = arith.mulf %40, %42 : vector<224x8xf32>
    %44 = arith.addf %39, %43 : vector<224x8xf32>
    %45 = vector.extract_strided_slice %10 {offsets = [33, 0], sizes = [224, 8], strides = [1, 1]} : vector<258x8xf32> to vector<224x8xf32>
    %46 = vector.extract_strided_slice %0 {offsets = [7, 0], sizes = [1, 8], strides = [1, 1]} : vector<16x8xf32> to vector<1x8xf32>
    %47 = vector.broadcast %46 : vector<1x8xf32> to vector<224x8xf32>
    %48 = arith.mulf %45, %47 : vector<224x8xf32>
    %49 = arith.addf %44, %48 : vector<224x8xf32>
    %50 = vector.extract_strided_slice %10 {offsets = [34, 0], sizes = [224, 8], strides = [1, 1]} : vector<258x8xf32> to vector<224x8xf32>
    %51 = vector.extract_strided_slice %0 {offsets = [8, 0], sizes = [1, 8], strides = [1, 1]} : vector<16x8xf32> to vector<1x8xf32>
    %52 = vector.broadcast %51 : vector<1x8xf32> to vector<224x8xf32>
    %53 = arith.mulf %50, %52 : vector<224x8xf32>
    %54 = arith.addf %49, %53 : vector<224x8xf32>
    %55 = vector.broadcast %1 : vector<1x8xf32> to vector<224x8xf32>
    %56 = arith.mulf %54, %55 : vector<224x8xf32>
    %57 = vector.broadcast %2 : vector<1x8xf32> to vector<224x8xf32>
    %58 = arith.addf %56, %57 : vector<224x8xf32>
    %cst_19 = arith.constant 0.000000e+00 : f32
    %59 = vector.broadcast %cst_19 : f32 to vector<224x8xf32>
    %60 = arith.maximumf %58, %59 : vector<224x8xf32>
    %61 = arith.truncf %60 : vector<224x8xf32> to vector<224x8xbf16>
    %cst_20 = arith.constant dense<0.000000e+00> : vector<224x16xf32>
    %62 = tpu.matmul %61, %3, %cst_20 {dimension_numbers = #tpu.dot_dimension_numbers<[1], [0], [0], [1], [0, 0, 1, 1], [], []>} : vector<224x8xbf16>, vector<8x16xbf16>, vector<224x16xf32> -> vector<224x16xf32>
    %63 = vector.broadcast %4 : vector<1x16xf32> to vector<224x16xf32>
    %64 = arith.mulf %62, %63 : vector<224x16xf32>
    %65 = vector.broadcast %5 : vector<1x16xf32> to vector<224x16xf32>
    %66 = arith.addf %64, %65 : vector<224x16xf32>
    %cst_21 = arith.constant 0.000000e+00 : f32
    %67 = vector.broadcast %cst_21 : f32 to vector<224x16xf32>
    %68 = arith.maximumf %66, %67 : vector<224x16xf32>
    %69 = vector.shape_cast %68 : vector<224x16xf32> to vector<14x16x16xf32>
    %70 = vector.extract_strided_slice %69 {offsets = [0, 0, 0], sizes = [14, 14, 16], strides = [1, 1, 1]} : vector<14x16x16xf32> to vector<14x14x16xf32>
    %71 = arith.truncf %70 : vector<14x14x16xf32> to vector<14x14x16xbf16>
    %c0_22 = arith.constant 0 : index
    %c1 = arith.constant 1 : index
    %c1_23 = arith.constant 1 : index
    %c0_24 = arith.constant 0 : index
    %72 = vector.load %arg8[%c0_22, %c1, %c1_23, %c0_24] : memref<1x17x16x16xbf16, #tpu.memory_space<vmem>>, vector<1x14x14x16xbf16>
    %73 = vector.shape_cast %72 : vector<1x14x14x16xbf16> to vector<14x14x16xbf16>
    %74 = vector.shape_cast %71 : vector<14x14x16xbf16> to vector<1x14x14x16xbf16>
    tpu.vector_store %arg8[%c0_22, %c1, %c1_23, %c0_24], %74 {strides = array<i32>} : memref<1x17x16x16xbf16, #tpu.memory_space<vmem>>, vector<1x14x14x16xbf16>,
    return
  }
  func.func @transform_0(%arg0: i32) -> (i32, i32, i32, i32) {
    %c0_i32 = arith.constant 0 : i32
    %c0_i32_0 = arith.constant 0 : i32
    %c0_i32_1 = arith.constant 0 : i32
    %c0_i32_2 = arith.constant 0 : i32
    return %arg0, %c0_i32, %c0_i32_0, %c0_i32_1 : i32, i32, i32, i32
  }
  func.func @transform_1(%arg0: i32) -> (i32, i32) {
    %c0_i32 = arith.constant 0 : i32
    %c0_i32_0 = arith.constant 0 : i32
    %c0_i32_1 = arith.constant 0 : i32
    return %c0_i32, %c0_i32_0 : i32, i32
  }
  func.func @transform_2(%arg0: i32) -> (i32, i32) {
    %c0_i32 = arith.constant 0 : i32
    %c0_i32_0 = arith.constant 0 : i32
    %c0_i32_1 = arith.constant 0 : i32
    return %c0_i32, %c0_i32_0 : i32, i32
  }
  func.func @transform_3(%arg0: i32) -> (i32, i32) {
    %c0_i32 = arith.constant 0 : i32
    %c0_i32_0 = arith.constant 0 : i32
    %c0_i32_1 = arith.constant 0 : i32
    return %c0_i32, %c0_i32_0 : i32, i32
  }
  func.func @transform_4(%arg0: i32) -> (i32, i32) {
    %c0_i32 = arith.constant 0 : i32
    %c0_i32_0 = arith.constant 0 : i32
    %c0_i32_1 = arith.constant 0 : i32
    return %c0_i32, %c0_i32_0 : i32, i32
  }
  func.func @transform_5(%arg0: i32) -> (i32, i32) {
    %c0_i32 = arith.constant 0 : i32
    %c0_i32_0 = arith.constant 0 : i32
    %c0_i32_1 = arith.constant 0 : i32
    return %c0_i32, %c0_i32_0 : i32, i32
  }
  func.func @transform_6(%arg0: i32) -> (i32, i32) {
    %c0_i32 = arith.constant 0 : i32
    %c0_i32_0 = arith.constant 0 : i32
    %c0_i32_1 = arith.constant 0 : i32
    return %c0_i32, %c0_i32_0 : i32, i32
  }
  func.func @transform_7(%arg0: i32) -> (i32, i32, i32, i32) {
    %c0_i32 = arith.constant 0 : i32
    %c0_i32_0 = arith.constant 0 : i32
    %c0_i32_1 = arith.constant 0 : i32
    %c0_i32_2 = arith.constant 0 : i32
    return %arg0, %c0_i32, %c0_i32_0, %c0_i32_1 : i32, i32, i32, i32
  }
}

module attributes {stable_mosaic.version = 11 : i64} {
  func.func @_dwsep_block_kernel(%arg0: i32, %arg1: memref<1x4x72x16xbf16, #tpu.memory_space<vmem>>, %arg2: memref<16x16xf32, #tpu.memory_space<vmem>>, %arg3: memref<1x16xf32, #tpu.memory_space<vmem>>, %arg4: memref<1x16xf32, #tpu.memory_space<vmem>>, %arg5: memref<16x32xbf16, #tpu.memory_space<vmem>>, %arg6: memref<1x32xf32, #tpu.memory_space<vmem>>, %arg7: memref<1x32xf32, #tpu.memory_space<vmem>>, %arg8: memref<1x10x9x32xbf16, #tpu.memory_space<vmem>>) attributes {dimension_semantics = [#tpu.dimension_semantics<parallel>], iteration_bounds = array<i64: 2>, scalar_prefetch = 0 : i64, scratch_operands = 0 : i64, tpu.core_type = #tpu.core_type<tc>, window_params = [{transform_indices = @transform_0, window_bounds = array<i64: 1, 4, 72, 16>}, {pipeline_mode = #tpu.pipeline_mode<synchronous>, transform_indices = @transform_1, window_bounds = array<i64: 16, 16>}, {pipeline_mode = #tpu.pipeline_mode<synchronous>, transform_indices = @transform_2, window_bounds = array<i64: 1, 16>}, {pipeline_mode = #tpu.pipeline_mode<synchronous>, transform_indices = @transform_3, window_bounds = array<i64: 1, 16>}, {pipeline_mode = #tpu.pipeline_mode<synchronous>, transform_indices = @transform_4, window_bounds = array<i64: 16, 32>}, {pipeline_mode = #tpu.pipeline_mode<synchronous>, transform_indices = @transform_5, window_bounds = array<i64: 1, 32>}, {pipeline_mode = #tpu.pipeline_mode<synchronous>, transform_indices = @transform_6, window_bounds = array<i64: 1, 32>}, {transform_indices = @transform_7, window_bounds = array<i64: 1, 10, 9, 32>}]} {
    %c0 = arith.constant 0 : index
    %c0_0 = arith.constant 0 : index
    %0 = vector.load %arg2[%c0, %c0_0] : memref<16x16xf32, #tpu.memory_space<vmem>>, vector<16x16xf32>
    %c0_1 = arith.constant 0 : index
    %c0_2 = arith.constant 0 : index
    %1 = vector.load %arg3[%c0_1, %c0_2] : memref<1x16xf32, #tpu.memory_space<vmem>>, vector<1x16xf32>
    %c0_3 = arith.constant 0 : index
    %c0_4 = arith.constant 0 : index
    %2 = vector.load %arg4[%c0_3, %c0_4] : memref<1x16xf32, #tpu.memory_space<vmem>>, vector<1x16xf32>
    %c0_5 = arith.constant 0 : index
    %c0_6 = arith.constant 0 : index
    %3 = vector.load %arg5[%c0_5, %c0_6] : memref<16x32xbf16, #tpu.memory_space<vmem>>, vector<16x32xbf16>
    %c0_7 = arith.constant 0 : index
    %c0_8 = arith.constant 0 : index
    %4 = vector.load %arg6[%c0_7, %c0_8] : memref<1x32xf32, #tpu.memory_space<vmem>>, vector<1x32xf32>
    %c0_9 = arith.constant 0 : index
    %c0_10 = arith.constant 0 : index
    %5 = vector.load %arg7[%c0_9, %c0_10] : memref<1x32xf32, #tpu.memory_space<vmem>>, vector<1x32xf32>
    %cst = arith.constant 0.000000e+00 : bf16
    %6 = vector.broadcast %cst : bf16 to vector<1x10x9x32xbf16>
    %c0_11 = arith.constant 0 : index
    %c0_12 = arith.constant 0 : index
    %c0_13 = arith.constant 0 : index
    %c0_14 = arith.constant 0 : index
    %7 = vector.load %arg8[%c0_11, %c0_12, %c0_13, %c0_14] : memref<1x10x9x32xbf16, #tpu.memory_space<vmem>>, vector<1x10x9x32xbf16>
    tpu.vector_store %arg8[%c0_11, %c0_12, %c0_13, %c0_14], %6 {strides = array<i32>} : memref<1x10x9x32xbf16, #tpu.memory_space<vmem>>, vector<1x10x9x32xbf16>,
    %c0_15 = arith.constant 0 : index
    %c0_16 = arith.constant 0 : index
    %c0_17 = arith.constant 0 : index
    %c0_18 = arith.constant 0 : index
    %8 = vector.load %arg1[%c0_15, %c0_16, %c0_17, %c0_18] : memref<1x4x72x16xbf16, #tpu.memory_space<vmem>>, vector<1x1x65x16xbf16>
    %9 = vector.shape_cast %8 : vector<1x1x65x16xbf16> to vector<65x16xbf16>
    %10 = arith.extf %9 : vector<65x16xbf16> to vector<65x16xf32>
    %c0_19 = arith.constant 0 : index
    %c1 = arith.constant 1 : index
    %c0_20 = arith.constant 0 : index
    %c0_21 = arith.constant 0 : index
    %11 = vector.load %arg1[%c0_19, %c1, %c0_20, %c0_21] : memref<1x4x72x16xbf16, #tpu.memory_space<vmem>>, vector<1x1x65x16xbf16>
    %12 = vector.shape_cast %11 : vector<1x1x65x16xbf16> to vector<65x16xbf16>
    %13 = arith.extf %12 : vector<65x16xbf16> to vector<65x16xf32>
    %c0_22 = arith.constant 0 : index
    %c2 = arith.constant 2 : index
    %c0_23 = arith.constant 0 : index
    %c0_24 = arith.constant 0 : index
    %14 = vector.load %arg1[%c0_22, %c2, %c0_23, %c0_24] : memref<1x4x72x16xbf16, #tpu.memory_space<vmem>>, vector<1x1x65x16xbf16>
    %15 = vector.shape_cast %14 : vector<1x1x65x16xbf16> to vector<65x16xbf16>
    %16 = arith.extf %15 : vector<65x16xbf16> to vector<65x16xf32>
    %c0_25 = arith.constant 0 : index
    %c3 = arith.constant 3 : index
    %c0_26 = arith.constant 0 : index
    %c0_27 = arith.constant 0 : index
    %17 = vector.load %arg1[%c0_25, %c3, %c0_26, %c0_27] : memref<1x4x72x16xbf16, #tpu.memory_space<vmem>>, vector<1x1x65x16xbf16>
    %18 = vector.shape_cast %17 : vector<1x1x65x16xbf16> to vector<65x16xbf16>
    %19 = arith.extf %18 : vector<65x16xbf16> to vector<65x16xf32>
    %20 = vector.extract_strided_slice %10 {offsets = [0, 0], sizes = [56, 16], strides = [1, 1]} : vector<65x16xf32> to vector<56x16xf32>
    %21 = vector.extract_strided_slice %0 {offsets = [0, 0], sizes = [1, 16], strides = [1, 1]} : vector<16x16xf32> to vector<1x16xf32>
    %22 = vector.broadcast %21 : vector<1x16xf32> to vector<56x16xf32>
    %23 = arith.mulf %20, %22 : vector<56x16xf32>
    %24 = vector.extract_strided_slice %13 {offsets = [0, 0], sizes = [56, 16], strides = [1, 1]} : vector<65x16xf32> to vector<56x16xf32>
    %25 = vector.extract_strided_slice %0 {offsets = [1, 0], sizes = [1, 16], strides = [1, 1]} : vector<16x16xf32> to vector<1x16xf32>
    %26 = vector.broadcast %25 : vector<1x16xf32> to vector<56x16xf32>
    %27 = arith.mulf %24, %26 : vector<56x16xf32>
    %28 = arith.addf %23, %27 : vector<56x16xf32>
    %29 = vector.extract_strided_slice %10 {offsets = [1, 0], sizes = [56, 16], strides = [1, 1]} : vector<65x16xf32> to vector<56x16xf32>
    %30 = vector.extract_strided_slice %0 {offsets = [2, 0], sizes = [1, 16], strides = [1, 1]} : vector<16x16xf32> to vector<1x16xf32>
    %31 = vector.broadcast %30 : vector<1x16xf32> to vector<56x16xf32>
    %32 = arith.mulf %29, %31 : vector<56x16xf32>
    %33 = arith.addf %28, %32 : vector<56x16xf32>
    %34 = vector.extract_strided_slice %16 {offsets = [0, 0], sizes = [56, 16], strides = [1, 1]} : vector<65x16xf32> to vector<56x16xf32>
    %35 = vector.extract_strided_slice %0 {offsets = [3, 0], sizes = [1, 16], strides = [1, 1]} : vector<16x16xf32> to vector<1x16xf32>
    %36 = vector.broadcast %35 : vector<1x16xf32> to vector<56x16xf32>
    %37 = arith.mulf %34, %36 : vector<56x16xf32>
    %38 = arith.addf %33, %37 : vector<56x16xf32>
    %39 = vector.extract_strided_slice %19 {offsets = [0, 0], sizes = [56, 16], strides = [1, 1]} : vector<65x16xf32> to vector<56x16xf32>
    %40 = vector.extract_strided_slice %0 {offsets = [4, 0], sizes = [1, 16], strides = [1, 1]} : vector<16x16xf32> to vector<1x16xf32>
    %41 = vector.broadcast %40 : vector<1x16xf32> to vector<56x16xf32>
    %42 = arith.mulf %39, %41 : vector<56x16xf32>
    %43 = arith.addf %38, %42 : vector<56x16xf32>
    %44 = vector.extract_strided_slice %16 {offsets = [1, 0], sizes = [56, 16], strides = [1, 1]} : vector<65x16xf32> to vector<56x16xf32>
    %45 = vector.extract_strided_slice %0 {offsets = [5, 0], sizes = [1, 16], strides = [1, 1]} : vector<16x16xf32> to vector<1x16xf32>
    %46 = vector.broadcast %45 : vector<1x16xf32> to vector<56x16xf32>
    %47 = arith.mulf %44, %46 : vector<56x16xf32>
    %48 = arith.addf %43, %47 : vector<56x16xf32>
    %49 = vector.extract_strided_slice %10 {offsets = [8, 0], sizes = [56, 16], strides = [1, 1]} : vector<65x16xf32> to vector<56x16xf32>
    %50 = vector.extract_strided_slice %0 {offsets = [6, 0], sizes = [1, 16], strides = [1, 1]} : vector<16x16xf32> to vector<1x16xf32>
    %51 = vector.broadcast %50 : vector<1x16xf32> to vector<56x16xf32>
    %52 = arith.mulf %49, %51 : vector<56x16xf32>
    %53 = arith.addf %48, %52 : vector<56x16xf32>
    %54 = vector.extract_strided_slice %13 {offsets = [8, 0], sizes = [56, 16], strides = [1, 1]} : vector<65x16xf32> to vector<56x16xf32>
    %55 = vector.extract_strided_slice %0 {offsets = [7, 0], sizes = [1, 16], strides = [1, 1]} : vector<16x16xf32> to vector<1x16xf32>
    %56 = vector.broadcast %55 : vector<1x16xf32> to vector<56x16xf32>
    %57 = arith.mulf %54, %56 : vector<56x16xf32>
    %58 = arith.addf %53, %57 : vector<56x16xf32>
    %59 = vector.extract_strided_slice %10 {offsets = [9, 0], sizes = [56, 16], strides = [1, 1]} : vector<65x16xf32> to vector<56x16xf32>
    %60 = vector.extract_strided_slice %0 {offsets = [8, 0], sizes = [1, 16], strides = [1, 1]} : vector<16x16xf32> to vector<1x16xf32>
    %61 = vector.broadcast %60 : vector<1x16xf32> to vector<56x16xf32>
    %62 = arith.mulf %59, %61 : vector<56x16xf32>
    %63 = arith.addf %58, %62 : vector<56x16xf32>
    %64 = vector.broadcast %1 : vector<1x16xf32> to vector<56x16xf32>
    %65 = arith.mulf %63, %64 : vector<56x16xf32>
    %66 = vector.broadcast %2 : vector<1x16xf32> to vector<56x16xf32>
    %67 = arith.addf %65, %66 : vector<56x16xf32>
    %cst_28 = arith.constant 0.000000e+00 : f32
    %68 = vector.broadcast %cst_28 : f32 to vector<56x16xf32>
    %69 = arith.maximumf %67, %68 : vector<56x16xf32>
    %70 = arith.truncf %69 : vector<56x16xf32> to vector<56x16xbf16>
    %cst_29 = arith.constant dense<0.000000e+00> : vector<56x32xf32>
    %71 = tpu.matmul %70, %3, %cst_29 {dimension_numbers = #tpu.dot_dimension_numbers<[1], [0], [0], [1], [0, 0, 1, 1], [], []>} : vector<56x16xbf16>, vector<16x32xbf16>, vector<56x32xf32> -> vector<56x32xf32>
    %72 = vector.broadcast %4 : vector<1x32xf32> to vector<56x32xf32>
    %73 = arith.mulf %71, %72 : vector<56x32xf32>
    %74 = vector.broadcast %5 : vector<1x32xf32> to vector<56x32xf32>
    %75 = arith.addf %73, %74 : vector<56x32xf32>
    %cst_30 = arith.constant 0.000000e+00 : f32
    %76 = vector.broadcast %cst_30 : f32 to vector<56x32xf32>
    %77 = arith.maximumf %75, %76 : vector<56x32xf32>
    %78 = vector.shape_cast %77 : vector<56x32xf32> to vector<7x8x32xf32>
    %79 = vector.extract_strided_slice %78 {offsets = [0, 0, 0], sizes = [7, 7, 32], strides = [1, 1, 1]} : vector<7x8x32xf32> to vector<7x7x32xf32>
    %80 = arith.truncf %79 : vector<7x7x32xf32> to vector<7x7x32xbf16>
    %c0_31 = arith.constant 0 : index
    %c1_32 = arith.constant 1 : index
    %c1_33 = arith.constant 1 : index
    %c0_34 = arith.constant 0 : index
    %81 = vector.load %arg8[%c0_31, %c1_32, %c1_33, %c0_34] : memref<1x10x9x32xbf16, #tpu.memory_space<vmem>>, vector<1x7x7x32xbf16>
    %82 = vector.shape_cast %81 : vector<1x7x7x32xbf16> to vector<7x7x32xbf16>
    %83 = vector.shape_cast %80 : vector<7x7x32xbf16> to vector<1x7x7x32xbf16>
    tpu.vector_store %arg8[%c0_31, %c1_32, %c1_33, %c0_34], %83 {strides = array<i32>} : memref<1x10x9x32xbf16, #tpu.memory_space<vmem>>, vector<1x7x7x32xbf16>,
    return
  }
  func.func @transform_0(%arg0: i32) -> (i32, i32, i32, i32) {
    %c0_i32 = arith.constant 0 : i32
    %c0_i32_0 = arith.constant 0 : i32
    %c0_i32_1 = arith.constant 0 : i32
    %c0_i32_2 = arith.constant 0 : i32
    return %arg0, %c0_i32, %c0_i32_0, %c0_i32_1 : i32, i32, i32, i32
  }
  func.func @transform_1(%arg0: i32) -> (i32, i32) {
    %c0_i32 = arith.constant 0 : i32
    %c0_i32_0 = arith.constant 0 : i32
    %c0_i32_1 = arith.constant 0 : i32
    return %c0_i32, %c0_i32_0 : i32, i32
  }
  func.func @transform_2(%arg0: i32) -> (i32, i32) {
    %c0_i32 = arith.constant 0 : i32
    %c0_i32_0 = arith.constant 0 : i32
    %c0_i32_1 = arith.constant 0 : i32
    return %c0_i32, %c0_i32_0 : i32, i32
  }
  func.func @transform_3(%arg0: i32) -> (i32, i32) {
    %c0_i32 = arith.constant 0 : i32
    %c0_i32_0 = arith.constant 0 : i32
    %c0_i32_1 = arith.constant 0 : i32
    return %c0_i32, %c0_i32_0 : i32, i32
  }
  func.func @transform_4(%arg0: i32) -> (i32, i32) {
    %c0_i32 = arith.constant 0 : i32
    %c0_i32_0 = arith.constant 0 : i32
    %c0_i32_1 = arith.constant 0 : i32
    return %c0_i32, %c0_i32_0 : i32, i32
  }
  func.func @transform_5(%arg0: i32) -> (i32, i32) {
    %c0_i32 = arith.constant 0 : i32
    %c0_i32_0 = arith.constant 0 : i32
    %c0_i32_1 = arith.constant 0 : i32
    return %c0_i32, %c0_i32_0 : i32, i32
  }
  func.func @transform_6(%arg0: i32) -> (i32, i32) {
    %c0_i32 = arith.constant 0 : i32
    %c0_i32_0 = arith.constant 0 : i32
    %c0_i32_1 = arith.constant 0 : i32
    return %c0_i32, %c0_i32_0 : i32, i32
  }
  func.func @transform_7(%arg0: i32) -> (i32, i32, i32, i32) {
    %c0_i32 = arith.constant 0 : i32
    %c0_i32_0 = arith.constant 0 : i32
    %c0_i32_1 = arith.constant 0 : i32
    %c0_i32_2 = arith.constant 0 : i32
    return %arg0, %c0_i32, %c0_i32_0, %c0_i32_1 : i32, i32, i32, i32
  }
}

module attributes {stable_mosaic.version = 11 : i64} {
  func.func @_pool_fc_kernel(%arg0: i32, %arg1: memref<2x49x32xbf16, #tpu.memory_space<vmem>>, %arg2: memref<32x1024xbf16, #tpu.memory_space<vmem>>, %arg3: memref<1x1024xf32, #tpu.memory_space<vmem>>, %arg4: memref<2x1024xf32, #tpu.memory_space<vmem>>) attributes {dimension_semantics = [#tpu.dimension_semantics<arbitrary>], iteration_bounds = array<i64: 1>, scalar_prefetch = 0 : i64, scratch_operands = 0 : i64, tpu.core_type = #tpu.core_type<tc>, window_params = [{pipeline_mode = #tpu.pipeline_mode<synchronous>, transform_indices = @transform_0, window_bounds = array<i64: 2, 49, 32>}, {pipeline_mode = #tpu.pipeline_mode<synchronous>, transform_indices = @transform_1, window_bounds = array<i64: 32, 1024>}, {pipeline_mode = #tpu.pipeline_mode<synchronous>, transform_indices = @transform_2, window_bounds = array<i64: 1, 1024>}, {pipeline_mode = #tpu.pipeline_mode<synchronous>, transform_indices = @transform_3, window_bounds = array<i64: 2, 1024>}]} {
    %c0 = arith.constant 0 : index
    %c0_0 = arith.constant 0 : index
    %c0_1 = arith.constant 0 : index
    %0 = vector.load %arg1[%c0, %c0_0, %c0_1] : memref<2x49x32xbf16, #tpu.memory_space<vmem>>, vector<2x49x32xbf16>
    %1 = arith.extf %0 : vector<2x49x32xbf16> to vector<2x49x32xf32>
    %cst = arith.constant dense<0.000000e+00> : vector<2x32xf32>
    %2 = vector.multi_reduction <add>, %1, %cst [1] : vector<2x49x32xf32> to vector<2x32xf32>
    %cst_2 = arith.constant 4.900000e+01 : f32
    %3 = vector.broadcast %cst_2 : f32 to vector<2x32xf32>
    %4 = arith.divf %2, %3 : vector<2x32xf32>
    %5 = arith.truncf %4 : vector<2x32xf32> to vector<2x32xbf16>
    %c0_3 = arith.constant 0 : index
    %c0_4 = arith.constant 0 : index
    %6 = vector.load %arg2[%c0_3, %c0_4] : memref<32x1024xbf16, #tpu.memory_space<vmem>>, vector<32x1024xbf16>
    %cst_5 = arith.constant dense<0.000000e+00> : vector<2x1024xf32>
    %7 = tpu.matmul %5, %6, %cst_5 {dimension_numbers = #tpu.dot_dimension_numbers<[1], [0], [0], [1], [0, 0, 1, 1], [], []>} : vector<2x32xbf16>, vector<32x1024xbf16>, vector<2x1024xf32> -> vector<2x1024xf32>
    %c0_6 = arith.constant 0 : index
    %c0_7 = arith.constant 0 : index
    %8 = vector.load %arg3[%c0_6, %c0_7] : memref<1x1024xf32, #tpu.memory_space<vmem>>, vector<1x1024xf32>
    %9 = vector.broadcast %8 : vector<1x1024xf32> to vector<2x1024xf32>
    %10 = arith.addf %7, %9 : vector<2x1024xf32>
    %c0_8 = arith.constant 0 : index
    %c0_9 = arith.constant 0 : index
    %11 = vector.load %arg4[%c0_8, %c0_9] : memref<2x1024xf32, #tpu.memory_space<vmem>>, vector<2x1024xf32>
    tpu.vector_store %arg4[%c0_8, %c0_9], %10 {strides = array<i32>} : memref<2x1024xf32, #tpu.memory_space<vmem>>, vector<2x1024xf32>,
    return
  }
  func.func @transform_0(%arg0: i32) -> (i32, i32, i32) {
    %c0_i32 = arith.constant 0 : i32
    %c0_i32_0 = arith.constant 0 : i32
    %c0_i32_1 = arith.constant 0 : i32
    %c0_i32_2 = arith.constant 0 : i32
    return %c0_i32, %c0_i32_0, %c0_i32_1 : i32, i32, i32
  }
  func.func @transform_1(%arg0: i32) -> (i32, i32) {
    %c0_i32 = arith.constant 0 : i32
    %c0_i32_0 = arith.constant 0 : i32
    %c0_i32_1 = arith.constant 0 : i32
    return %c0_i32, %c0_i32_0 : i32, i32
  }
  func.func @transform_2(%arg0: i32) -> (i32, i32) {
    %c0_i32 = arith.constant 0 : i32
    %c0_i32_0 = arith.constant 0 : i32
    %c0_i32_1 = arith.constant 0 : i32
    return %c0_i32, %c0_i32_0 : i32, i32
  }
  func.func @transform_3(%arg0: i32) -> (i32, i32) {
    %c0_i32 = arith.constant 0 : i32
    %c0_i32_0 = arith.constant 0 : i32
    %c0_i32_1 = arith.constant 0 : i32
    return %c0_i32, %c0_i32_0 : i32, i32
  }
}

</mosaic_0001>

<llo_original>
// kernel: mobilenet_forward.4
$region0: #{mobilenet_forward.4}
  #allocation0 [shape = 'u32[]', space=smem, size = 0x4, offset = 0x4, fixed_abs, tag = 'smem constant byte address 0x4 - core index']
  #allocation1 [shape = 'u32[144,128]{1,0:T(1,128)}', space=vmem, size = 0x12000, scoped, tag = 'internal scratch']
  %s0 = inlined_call_operand.vmem [shape: bf16[400,32], index: 0, kind: input, shape index: {}]
  %s1 = inlined_call_operand.vmem [shape: bf16[32,8], index: 1, kind: input, shape index: {}]
  %s2 = inlined_call_operand.vmem [shape: f32[1,8], index: 2, kind: input, shape index: {}]
  %s3 = inlined_call_operand.vmem [shape: f32[1,8], index: 3, kind: input, shape index: {}]
  %s4 = inlined_call_operand.vmem [shape: bf16[400,8], index: 4, kind: output, shape index: {}]
  %s5 = sld [smem:[#allocation0]]
  $region49: #{mobilenet_forward.4} parent=0
    _
  %s7 = ssub.s32 1, %s5
  %s8 = scalar_select 0, %s7, %s5
  loop: start=0, step=1, limit=4
  $region2: #{mobilenet_forward.4} parent=0 // loop_pre_header
    _
  $region3: #{mobilenet_forward.4} parent=0 // loop_header
    %s10 = sphi 0, %s14
    %p11 = scmp.ge.s32.totalorder %s10, 4
    %s17 = sphi 0, %s29
    %s18 = sphi 0, %s25
    %s19 = sphi 0, %s17
    %s20 = sphi 0, %s18
    %s21 = sphi 0, %s19
    %s22 = sphi 0, %s20
    %s32 = sphi 0, %s34
    %s35 = sphi 0, %s32
    %s36 = sphi 0, %s35
    %s52 = sphi 0, %s36
    %s58 = sphi 0, %s60
    %s61 = sphi 0, %s58
    %s62 = sphi 0, %s61
    %s78 = sphi 0, %s62
    %s84 = sphi 0, %s86
    %s87 = sphi 0, %s84
    %s88 = sphi 0, %s87
    %s104 = sphi 0, %s88
    %s110 = sphi 0, %s112
    %s113 = sphi 0, %s110
    %s114 = sphi 0, %s113
    %s130 = sphi 0, %s114
    %s138 = sphi 0, %s140
    %s141 = sphi 0, %s138
    %s142 = sphi 0, %s141
    %s158 = sphi 0, %s142
  $region4: #{mobilenet_forward.4} parent=0 // loop_header_branch
    %13 = sbr.rel (%p11) target = $region8
  $region5: #{mobilenet_forward.4} parent=0 // loop_body
    %s15 = ssub.s32 %s10, 1
    %s16 = ssub.s32 %s10, 2
    %s23 = sadd.s32 1, %s18
    %p24 = scmp.ge.s32.totalorder %s23, 1
    %s25 = scalar_select %p24, 0, %s23
    %s26 = sadd.s32 1, %s17
    %s27 = scalar_select %p24, %s26, %s17
    %p28 = scmp.ge.s32.totalorder %s27, 2
    %s29 = scalar_select %p28, 0, %s27
    %s30 = ssub.s32 %s17, %s29
    %p31 = scmp.eq.s32.totalorder %s30, 0
    %s33 = sadd.s32 %s32, 1
    %s34 = scalar_select %p31, %s32, %s33
    %p37 = pneg %p31
    %p38 = scmp.eq.s32.totalorder %s10, 1
    %p39 = por %p37, %p38
    %p40 = scmp.ne.s32.totalorder %s32, %s35
    %p41 = scmp.eq.s32.totalorder %s10, 0
    %p42 = por %p40, %p41
    %p43 = scmp.ne.s32.totalorder %s32, %s35
    %p44 = scmp.eq.s32.totalorder %s15, 1
    %p45 = por %p43, %p44
    %p46 = scmp.ne.s32.totalorder %s35, %s36
    %p47 = scmp.eq.s32.totalorder %s15, 0
    %p48 = por %p46, %p47
    %p49 = scmp.ne.s32.totalorder %s35, %s36
    %p50 = scmp.eq.s32.totalorder %s16, 1
    %p51 = por %p49, %p50
    %p53 = scmp.ne.s32.totalorder %s36, %s52
    %p54 = scmp.eq.s32.totalorder %s16, 0
    %p55 = por %p53, %p54
    %s56 = ssub.s32 %s18, %s25
    %p57 = scmp.eq.s32.totalorder %s56, 0
    %s59 = sadd.s32 %s58, 1
    %s60 = scalar_select %p57, %s58, %s59
    %p63 = pneg %p57
    %p64 = scmp.eq.s32.totalorder %s10, 1
    %p65 = por %p63, %p64
    %p66 = scmp.ne.s32.totalorder %s58, %s61
    %p67 = scmp.eq.s32.totalorder %s10, 0
    %p68 = por %p66, %p67
    %p69 = scmp.ne.s32.totalorder %s58, %s61
    %p70 = scmp.eq.s32.totalorder %s15, 1
    %p71 = por %p69, %p70
    %p72 = scmp.ne.s32.totalorder %s61, %s62
    %p73 = scmp.eq.s32.totalorder %s15, 0
    %p74 = por %p72, %p73
    %p75 = scmp.ne.s32.totalorder %s61, %s62
    %p76 = scmp.eq.s32.totalorder %s16, 1
    %p77 = por %p75, %p76
    %p79 = scmp.ne.s32.totalorder %s62, %s78
    %p80 = scmp.eq.s32.totalorder %s16, 0
    %p81 = por %p79, %p80
    %s82 = ssub.s32 %s18, %s25
    %p83 = scmp.eq.s32.totalorder %s82, 0
    %s85 = sadd.s32 %s84, 1
    %s86 = scalar_select %p83, %s84, %s85
    %p89 = pneg %p83
    %p90 = scmp.eq.s32.totalorder %s10, 1
    %p91 = por %p89, %p90
    %p92 = scmp.ne.s32.totalorder %s84, %s87
    %p93 = scmp.eq.s32.totalorder %s10, 0
    %p94 = por %p92, %p93
    %p95 = scmp.ne.s32.totalorder %s84, %s87
    %p96 = scmp.eq.s32.totalorder %s15, 1
    %p97 = por %p95, %p96
    %p98 = scmp.ne.s32.totalorder %s87, %s88
    %p99 = scmp.eq.s32.totalorder %s15, 0
    %p100 = por %p98, %p99
    %p101 = scmp.ne.s32.totalorder %s87, %s88
    %p102 = scmp.eq.s32.totalorder %s16, 1
    %p103 = por %p101, %p102
    %p105 = scmp.ne.s32.totalorder %s88, %s104
    %p106 = scmp.eq.s32.totalorder %s16, 0
    %p107 = por %p105, %p106
    %s108 = ssub.s32 %s18, %s25
    %p109 = scmp.eq.s32.totalorder %s108, 0
    %s111 = sadd.s32 %s110, 1
    %s112 = scalar_select %p109, %s110, %s111
    %p115 = pneg %p109
    %p116 = scmp.eq.s32.totalorder %s10, 1
    %p117 = por %p115, %p116
    %p118 = scmp.ne.s32.totalorder %s110, %s113
    %p119 = scmp.eq.s32.totalorder %s10, 0
    %p120 = por %p118, %p119
    %p121 = scmp.ne.s32.totalorder %s110, %s113
    %p122 = scmp.eq.s32.totalorder %s15, 1
    %p123 = por %p121, %p122
    %p124 = scmp.ne.s32.totalorder %s113, %s114
    %p125 = scmp.eq.s32.totalorder %s15, 0
    %p126 = por %p124, %p125
    %p127 = scmp.ne.s32.totalorder %s113, %s114
    %p128 = scmp.eq.s32.totalorder %s16, 1
    %p129 = por %p127, %p128
    %p131 = scmp.ne.s32.totalorder %s114, %s130
    %p132 = scmp.eq.s32.totalorder %s16, 0
    %p133 = por %p131, %p132
    %s134 = ssub.s32 %s17, %s29
    %s135 = ssub.s32 %s18, %s25
    %s136 = sor.u32 %s134, %s135
    %p137 = scmp.eq.s32.totalorder %s136, 0
    %s139 = sadd.s32 %s138, 1
    %s140 = scalar_select %p137, %s138, %s139
    %p143 = pneg %p137
    %p144 = scmp.eq.s32.totalorder %s10, 1
    %p145 = por %p143, %p144
    %p146 = scmp.ne.s32.totalorder %s138, %s141
    %p147 = scmp.eq.s32.totalorder %s10, 0
    %p148 = por %p146, %p147
    %p149 = scmp.ne.s32.totalorder %s138, %s141
    %p150 = scmp.eq.s32.totalorder %s15, 1
    %p151 = por %p149, %p150
    %p152 = scmp.ne.s32.totalorder %s141, %s142
    %p153 = scmp.eq.s32.totalorder %s15, 0
    %p154 = por %p152, %p153
    %p155 = scmp.ne.s32.totalorder %s141, %s142
    %p156 = scmp.eq.s32.totalorder %s16, 1
    %p157 = por %p155, %p156
    %p159 = scmp.ne.s32.totalorder %s142, %s158
    %p160 = scmp.eq.s32.totalorder %s16, 0
    %p161 = por %p159, %p160
    %p162 = scmp.le.s32.totalorder 1, %s10
    %p163 = scmp.lt.s32.totalorder %s10, 3
    %p164 = pnand %p162, %p163
    %p165 = pneg %p164
    // Predicated region
    $region9: #{mobilenet_forward.4} parent=5 // pred_check
      _
    $region10: #{mobilenet_forward.4} parent=5 // pred_check_branch
      %167 = sbr.rel (%p164) target = $region12
    $region11: #{mobilenet_forward.4} parent=5 // pred_region
      %s168 = ssub.s32 %s10, 1
      // Predicated region
      $region13: #{mobilenet_forward.4} parent=11 // pred_check
        %p169 = pneg %p74
      $region14: #{mobilenet_forward.4} parent=11 // pred_check_branch
        %171 = sbr.rel (%p169) target = $region16
      $region15: #{mobilenet_forward.4} parent=11 // pred_region
        %p172 = scmp.lt.s32.totalorder %s20, 0
        %s173 = scalar_select %p172, %s20, 0
        %s174 = smul.addr %s173, 4
        %s175 = scalar_lea.vmem %s1, %s174
      $region16: #{mobilenet_forward.4} parent=11 // pred_fallthru
        _
      // Predicated region
      $region17: #{mobilenet_forward.4} parent=11 // pred_check
        %p176 = pneg %p100
      $region18: #{mobilenet_forward.4} parent=11 // pred_check_branch
        %178 = sbr.rel (%p176) target = $region20
      $region19: #{mobilenet_forward.4} parent=11 // pred_region
        %p179 = scmp.lt.s32.totalorder %s20, 0
        %s180 = scalar_select %p179, %s20, 0
        %s181 = scalar_lea.vmem %s2, %s180
      $region20: #{mobilenet_forward.4} parent=11 // pred_fallthru
        _
      // Predicated region
      $region21: #{mobilenet_forward.4} parent=11 // pred_check
        %p182 = pneg %p126
      $region22: #{mobilenet_forward.4} parent=11 // pred_check_branch
        %184 = sbr.rel (%p182) target = $region24
      $region23: #{mobilenet_forward.4} parent=11 // pred_region
        %p185 = scmp.lt.s32.totalorder %s20, 0
        %s186 = scalar_select %p185, %s20, 0
        %s187 = scalar_lea.vmem %s3, %s186
      $region24: #{mobilenet_forward.4} parent=11 // pred_fallthru
        _
    $region12: #{mobilenet_forward.4} parent=5 // pred_fallthru
      _
    %p188 = scmp.lt.s32.totalorder %s10, 2
    // Predicated region
    $region25: #{mobilenet_forward.4} parent=5 // pred_check
      %p189 = pneg %p188
    $region26: #{mobilenet_forward.4} parent=5 // pred_check_branch
      %191 = sbr.rel (%p189) target = $region28
    $region27: #{mobilenet_forward.4} parent=5 // pred_region
      // Predicated region
      $region29: #{mobilenet_forward.4} parent=27 // pred_check
        %p192 = pneg %p42
      $region30: #{mobilenet_forward.4} parent=27 // pred_check_branch
        %194 = sbr.rel (%p192) target = $region32
      $region31: #{mobilenet_forward.4} parent=27 // pred_region
        %s195 = smul.u32 25, %s17
        %p196 = scmp.lt.s32.totalorder %s195, 49
        %s197 = scalar_select %p196, %s195, 49
        %s198 = smul.addr %s197, 4
        %s199 = scalar_lea.vmem %s0, %s198
        %s200 = smul.u32 25, %s17
      $region32: #{mobilenet_forward.4} parent=27 // pred_fallthru
        _
    $region28: #{mobilenet_forward.4} parent=5 // pred_fallthru
      _
    %p201 = scmp.le.s32.totalorder 1, %s10
    %p202 = scmp.lt.s32.totalorder %s10, 3
    %p203 = pnand %p201, %p202
    %p204 = pneg %p203
    // Predicated region
    $region33: #{mobilenet_forward.4} parent=5 // pred_check
      _
    $region34: #{mobilenet_forward.4} parent=5 // pred_check_branch
      %206 = sbr.rel (%p203) target = $region36
    $region35: #{mobilenet_forward.4} parent=5 // pred_region
      %s207 = ssub.s32 %s10, 1
      %s208 = smul.u32 25, %s19
      %p209 = scmp.lt.s32.totalorder %s208, 49
      %s210 = scalar_select %p209, %s208, 49
      %s211 = smul.addr %s210, 4
      %s212 = scalar_lea.vmem %s0, %s211
      %p213 = pneg %p48
      %p214 = pneg %p45
      %p215 = scmp.lt.s32.totalorder %s20, 0
      %s216 = scalar_select %p215, %s20, 0
      %s217 = smul.addr %s216, 4
      %s218 = scalar_lea.vmem %s1, %s217
      %p219 = pneg %p74
      %p220 = pneg %p71
      %p221 = scmp.lt.s32.totalorder %s20, 0
      %s222 = scalar_select %p221, %s20, 0
      %s223 = scalar_lea.vmem %s2, %s222
      %p224 = pneg %p100
      %p225 = pneg %p97
      %p226 = scmp.lt.s32.totalorder %s20, 0
      %s227 = scalar_select %p226, %s20, 0
      %s228 = scalar_lea.vmem %s3, %s227
      %p229 = pneg %p126
      %p230 = pneg %p123
      %p231 = pneg %p154
      %p232 = pneg %p151
      %s233 = smul.u32 25, %s19
      %p234 = scmp.lt.s32.totalorder %s233, 49
      %s235 = scalar_select %p234, %s233, 49
      %p236 = scmp.lt.s32.totalorder %s20, 0
      %s237 = scalar_select %p236, %s20, 0
      %s238 = sadd.s32 %s237, %s235
      %s239 = smul.addr %s238, 4
      %s240 = scalar_lea.vmem %s4, %s239
      %s241 = smul.u32 25, %s19
      %p242 = scmp.lt.s32.totalorder %s241, 49
      %s243 = scalar_select %p242, %s241, 49
      %s244 = smul.addr %s243, 4
      %s245 = scalar_lea.vmem %s0, %s244
      %s246 = smul.u32 25, %s19
      %p247 = scmp.lt.s32.totalorder %s20, 0
      %s248 = scalar_select %p247, %s20, 0
      %s249 = smul.addr %s248, 4
      %s250 = scalar_lea.vmem %s1, %s249
      %p251 = scmp.lt.s32.totalorder %s20, 0
      %s252 = scalar_select %p251, %s20, 0
      %s253 = scalar_lea.vmem %s2, %s252
      %p254 = scmp.lt.s32.totalorder %s20, 0
      %s255 = scalar_select %p254, %s20, 0
      %s256 = scalar_lea.vmem %s3, %s255
      %s257 = smul.u32 25, %s19
      %p258 = scmp.lt.s32.totalorder %s257, 49
      %s259 = scalar_select %p258, %s257, 49
      %p260 = scmp.lt.s32.totalorder %s20, 0
      %s261 = scalar_select %p260, %s20, 0
      %s262 = sadd.s32 %s261, %s259
      %s263 = smul.addr %s262, 4
      %s264 = scalar_lea.vmem %s4, %s263
      %s265 = smul.u32 25, %s19
      %v267 = vld [vmem:[%s245] sm:$0xf]
      %v268 = vld [vmem:[%s245 + $0x4] sm:$0xf]
      %v269 = vld [vmem:[%s245 + $0x8] sm:$0xf]
      %v270 = vld [vmem:[%s245 + $0xc] sm:$0xf]
      %v271 = vld [vmem:[%s245 + $0x10] sm:$0xf]
      %v272 = vld [vmem:[%s245 + $0x14] sm:$0xf]
      %v273 = vld [vmem:[%s245 + $0x18] sm:$0xf]
      %v274 = vld [vmem:[%s245 + $0x1c] sm:$0xf]
      %v275 = vld [vmem:[%s245 + $0x20] sm:$0xf]
      %v276 = vld [vmem:[%s245 + $0x24] sm:$0xf]
      %v277 = vld [vmem:[%s245 + $0x28] sm:$0xf]
      %v278 = vld [vmem:[%s245 + $0x2c] sm:$0xf]
      %v279 = vld [vmem:[%s245 + $0x30] sm:$0xf]
      %v280 = vld [vmem:[%s245 + $0x34] sm:$0xf]
      %v281 = vld [vmem:[%s245 + $0x38] sm:$0xf]
      %v282 = vld [vmem:[%s245 + $0x3c] sm:$0xf]
      %v283 = vld [vmem:[%s245 + $0x40] sm:$0xf]
      %v284 = vld [vmem:[%s245 + $0x44] sm:$0xf]
      %v285 = vld [vmem:[%s245 + $0x48] sm:$0xf]
      %v286 = vld [vmem:[%s245 + $0x4c] sm:$0xf]
      %v287 = vld [vmem:[%s245 + $0x50] sm:$0xf]
      %v288 = vld [vmem:[%s245 + $0x54] sm:$0xf]
      %v289 = vld [vmem:[%s245 + $0x58] sm:$0xf]
      %v290 = vld [vmem:[%s245 + $0x5c] sm:$0xf]
      %v291 = vld [vmem:[%s245 + $0x60] sm:$0xf]
      %v292 = vld [vmem:[%s250] sm:$0xf]
      %v293 = vld [vmem:[%s250 + $0x4] sm:$0xf]
      %v294 = vld [vmem:[%s250 + $0x8] sm:$0xf]
      %v295 = vld [vmem:[%s250 + $0xc] sm:$0xf]
      %v321 = vunpack.c.l.b16 %v267
      %v322 = vunpack.c.l.b16 %v268
      %v323 = vunpack.c.l.b16 %v269
      %v324 = vunpack.c.l.b16 %v270
      %v325 = vunpack.c.l.b16 %v271
      %v326 = vunpack.c.l.b16 %v272
      %v327 = vunpack.c.l.b16 %v273
      %v328 = vunpack.c.l.b16 %v274
      %v329 = vunpack.c.l.b16 %v275
      %v330 = vunpack.c.l.b16 %v276
      %v331 = vunpack.c.l.b16 %v277
      %v332 = vunpack.c.l.b16 %v278
      %v333 = vunpack.c.l.b16 %v279
      %v334 = vunpack.c.l.b16 %v280
      %v335 = vunpack.c.l.b16 %v281
      %v336 = vunpack.c.l.b16 %v282
      %v337 = vunpack.c.l.b16 %v283
      %v338 = vunpack.c.l.b16 %v284
      %v339 = vunpack.c.l.b16 %v285
      %v340 = vunpack.c.l.b16 %v286
      %v341 = vunpack.c.l.b16 %v287
      %v342 = vunpack.c.l.b16 %v288
      %v343 = vunpack.c.l.b16 %v289
      %v344 = vunpack.c.l.b16 %v290
      %v345 = vunpack.c.l.b16 %v291
      %v346 = vpack.c.b16 %v322, %v321
      %v347 = vpack.c.b16 %v324, %v323
      %v348 = vpack.c.b16 %v326, %v325
      %v349 = vpack.c.b16 %v328, %v327
      %v350 = vpack.c.b16 %v330, %v329
      %v351 = vpack.c.b16 %v332, %v331
      %v352 = vpack.c.b16 %v334, %v333
      %v353 = vpack.c.b16 %v336, %v335
      %v354 = vpack.c.b16 %v338, %v337
      %v355 = vpack.c.b16 %v340, %v339
      %v356 = vpack.c.b16 %v342, %v341
      %v357 = vpack.c.b16 %v344, %v343
      %v358 = vpack.c.b16 %v345, %v345
      %v363 = vunpack.c.l.b16 %v292
      %v364 = vunpack.c.l.b16 %v293
      %v365 = vunpack.c.l.b16 %v294
      %v366 = vunpack.c.l.b16 %v295
      %v367 = vpack.c.b16 %v364, %v363
      %v368 = vpack.c.b16 %v366, %v365
      %vm371 = vcmask 261120
      %v373 = vsel %vm371, %v346, 0
      %v376 = vsel %vm371, %v347, 0
      %v379 = vsel %vm371, %v348, 0
      %v382 = vsel %vm371, %v349, 0
      %v385 = vsel %vm371, %v350, 0
      %v388 = vsel %vm371, %v351, 0
      %v391 = vsel %vm371, %v352, 0
      %v394 = vsel %vm371, %v353, 0
      %v397 = vsel %vm371, %v354, 0
      %v400 = vsel %vm371, %v355, 0
      %v403 = vsel %vm371, %v356, 0
      %v406 = vsel %vm371, %v357, 0
      %v409 = vsel %vm371, %v358, 0
      %411 = vmatprep.subr.bf16.mxu0 0
      %412 = vmatpush1.bf16.msra.mxu0 0
      %413 = vmatprep.subr.bf16.mxu0 0
      %414 = vmatpush1.bf16.msra.mxu0 0
      %415 = vmatprep.subr.bf16.mxu0 0
      %416 = vmatpush1.bf16.msra.mxu0 0
      %417 = vmatprep.subr.bf16.mxu0 0
      %418 = vmatpush1.bf16.msra.mxu0 0
      %419 = vmatprep.subr.bf16.mxu0 0
      %420 = vmatpush1.bf16.msra.mxu0 0
      %421 = vmatprep.subr.bf16.mxu0 0
      %422 = vmatpush1.bf16.msra.mxu0 0
      %423 = vmatprep.subr.bf16.mxu0 0
      %424 = vmatpush1.bf16.msra.mxu0 %v368
      %425 = vmatprep.subr.bf16.mxu0 0
      %426 = vmatpush1.bf16.msra.mxu0 %v367
      %427 = vmatprep.subr.bf16.mxu0 0
      %428 = vmatpush2.bf16.msra.mxu0 0
      %429 = vmatprep.subr.bf16.mxu0 0
      %430 = vmatpush2.bf16.msra.mxu0 0
      %431 = vmatprep.subr.bf16.mxu0 0
      %432 = vmatpush2.bf16.msra.mxu0 0
      %433 = vmatprep.subr.bf16.mxu0 0
      %434 = vmatpush2.bf16.msra.mxu0 0
      %435 = vmatprep.subr.bf16.mxu0 0
      %436 = vmatpush2.bf16.msra.mxu0 0
      %437 = vmatprep.subr.bf16.mxu0 0
      %438 = vmatpush2.bf16.msra.mxu0 0
      %439 = vmatprep.subr.bf16.mxu0 0
      %440 = vmatpush2.bf16.msra.mxu0 0
      %441 = vmatprep.subr.bf16.mxu0 0
      %442 = vmatpush2.bf16.msra.mxu0 0
      %443 = vmatprep.mubr.bf16.mxu0 0
      %444 = vmatmul.mubr.bf16.gmra.mxu0 %v373
      %v445 = vpop.f32.mrf.mxu0
      %v446 = vadd.f32 0.0, %v445
      %v447 = vpop.f32.mrf.mxu0
      %v448 = vpop.f32.mrf.mxu0
      %v449 = vadd.f32 0.0, %v448
      %v450 = vpop.f32.mrf.mxu0
      %451 = vmatprep.mubr.bf16.mxu0 0
      %452 = vmatmul.mubr.bf16.gmra.mxu0 %v376
      %v453 = vpop.f32.mrf.mxu0
      %v454 = vadd.f32 0.0, %v453
      %v455 = vpop.f32.mrf.mxu0
      %v456 = vpop.f32.mrf.mxu0
      %v457 = vadd.f32 0.0, %v456
      %v458 = vpop.f32.mrf.mxu0
      %459 = vmatprep.mubr.bf16.mxu0 0
      %460 = vmatmul.mubr.bf16.gmra.mxu0 %v379
      %v461 = vpop.f32.mrf.mxu0
      %v462 = vadd.f32 0.0, %v461
      %v463 = vpop.f32.mrf.mxu0
      %v464 = vpop.f32.mrf.mxu0
      %v465 = vadd.f32 0.0, %v464
      %v466 = vpop.f32.mrf.mxu0
      %467 = vmatprep.mubr.bf16.mxu0 0
      %468 = vmatmul.mubr.bf16.gmra.mxu0 %v382
      %v469 = vpop.f32.mrf.mxu0
      %v470 = vadd.f32 0.0, %v469
      %v471 = vpop.f32.mrf.mxu0
      %v472 = vpop.f32.mrf.mxu0
      %v473 = vadd.f32 0.0, %v472
      %v474 = vpop.f32.mrf.mxu0
      %475 = vmatprep.mubr.bf16.mxu0 0
      %476 = vmatmul.mubr.bf16.gmra.mxu0 %v385
      %v477 = vpop.f32.mrf.mxu0
      %v478 = vadd.f32 0.0, %v477
      %v479 = vpop.f32.mrf.mxu0
      %v480 = vpop.f32.mrf.mxu0
      %v481 = vadd.f32 0.0, %v480
      %v482 = vpop.f32.mrf.mxu0
      %483 = vmatprep.mubr.bf16.mxu0 0
      %484 = vmatmul.mubr.bf16.gmra.mxu0 %v388
      %v485 = vpop.f32.mrf.mxu0
      %v486 = vadd.f32 0.0, %v485
      %v487 = vpop.f32.mrf.mxu0
      %v488 = vpop.f32.mrf.mxu0
      %v489 = vadd.f32 0.0, %v488
      %v490 = vpop.f32.mrf.mxu0
      %491 = vmatprep.mubr.bf16.mxu0 0
      %492 = vmatmul.mubr.bf16.gmra.mxu0 %v391
      %v493 = vpop.f32.mrf.mxu0
      %v494 = vadd.f32 0.0, %v493
      %v495 = vpop.f32.mrf.mxu0
      %v496 = vpop.f32.mrf.mxu0
      %v497 = vadd.f32 0.0, %v496
      %v498 = vpop.f32.mrf.mxu0
      %499 = vmatprep.mubr.bf16.mxu0 0
      %500 = vmatmul.mubr.bf16.gmra.mxu0 %v394
      %v501 = vpop.f32.mrf.mxu0
      %v502 = vadd.f32 0.0, %v501
      %v503 = vpop.f32.mrf.mxu0
      %v504 = vpop.f32.mrf.mxu0
      %v505 = vadd.f32 0.0, %v504
      %v506 = vpop.f32.mrf.mxu0
      %507 = vmatprep.mubr.bf16.mxu0 0
      %508 = vmatmul.mubr.bf16.gmra.mxu0 %v397
      %v509 = vpop.f32.mrf.mxu0
      %v510 = vadd.f32 0.0, %v509
      %v511 = vpop.f32.mrf.mxu0
      %v512 = vpop.f32.mrf.mxu0
      %v513 = vadd.f32 0.0, %v512
      %v514 = vpop.f32.mrf.mxu0
      %515 = vmatprep.mubr.bf16.mxu0 0
      %516 = vmatmul.mubr.bf16.gmra.mxu0 %v400
      %v517 = vpop.f32.mrf.mxu0
      %v518 = vadd.f32 0.0, %v517
      %v519 = vpop.f32.mrf.mxu0
      %v520 = vpop.f32.mrf.mxu0
      %v521 = vadd.f32 0.0, %v520
      %v522 = vpop.f32.mrf.mxu0
      %523 = vmatprep.mubr.bf16.mxu0 0
      %524 = vmatmul.mubr.bf16.gmra.mxu0 %v403
      %v525 = vpop.f32.mrf.mxu0
      %v526 = vadd.f32 0.0, %v525
      %v527 = vpop.f32.mrf.mxu0
      %v528 = vpop.f32.mrf.mxu0
      %v529 = vadd.f32 0.0, %v528
      %v530 = vpop.f32.mrf.mxu0
      %531 = vmatprep.mubr.bf16.mxu0 0
      %532 = vmatmul.mubr.bf16.gmra.mxu0 %v406
      %v533 = vpop.f32.mrf.mxu0
      %v534 = vadd.f32 0.0, %v533
      %v535 = vpop.f32.mrf.mxu0
      %v536 = vpop.f32.mrf.mxu0
      %v537 = vadd.f32 0.0, %v536
      %v538 = vpop.f32.mrf.mxu0
      %539 = vmatprep.mubr.bf16.mxu0 0
      %540 = vmatmul.mubr.bf16.gmra.mxu0 %v409
      %v541 = vpop.f32.mrf.mxu0
      %v542 = vadd.f32 0.0, %v541
      %v543 = vpop.f32.mrf.mxu0
      %v544 = vpop.f32.mrf.mxu0
      %v545 = vpop.f32.mrf.mxu0
      %546 = vdwg.mxu0
      %v547 = vld [vmem:[%s253] sm:$0x1]
      %v549 = vlaneseq
      %v550 = vshrl.u32 %v549, 7
      %v551 = vsub.s32 0, %v550
      %v552 = vrot.slane %v547, %v551
      %v554 = vmul.f32 %v446, %v552
      %v555 = vmul.f32 %v449, %v552
      %v556 = vmul.f32 %v454, %v552
      %v557 = vmul.f32 %v457, %v552
      %v558 = vmul.f32 %v462, %v552
      %v559 = vmul.f32 %v465, %v552
      %v560 = vmul.f32 %v470, %v552
      %v561 = vmul.f32 %v473, %v552
      %v562 = vmul.f32 %v478, %v552
      %v563 = vmul.f32 %v481, %v552
      %v564 = vmul.f32 %v486, %v552
      %v565 = vmul.f32 %v489, %v552
      %v566 = vmul.f32 %v494, %v552
      %v567 = vmul.f32 %v497, %v552
      %v568 = vmul.f32 %v502, %v552
      %v569 = vmul.f32 %v505, %v552
      %v570 = vmul.f32 %v510, %v552
      %v571 = vmul.f32 %v513, %v552
      %v572 = vmul.f32 %v518, %v552
      %v573 = vmul.f32 %v521, %v552
      %v574 = vmul.f32 %v526, %v552
      %v575 = vmul.f32 %v529, %v552
      %v576 = vmul.f32 %v534, %v552
      %v577 = vmul.f32 %v537, %v552
      %v578 = vmul.f32 %v542, %v552
      %v579 = vld [vmem:[%s256] sm:$0x1]
      %v581 = vlaneseq
      %v582 = vshrl.u32 %v581, 7
      %v583 = vsub.s32 0, %v582
      %v584 = vrot.slane %v579, %v583
      %v586 = vadd.f32 %v554, %v584
      %v587 = vadd.f32 %v555, %v584
      %v588 = vadd.f32 %v556, %v584
      %v589 = vadd.f32 %v557, %v584
      %v590 = vadd.f32 %v558, %v584
      %v591 = vadd.f32 %v559, %v584
      %v592 = vadd.f32 %v560, %v584
      %v593 = vadd.f32 %v561, %v584
      %v594 = vadd.f32 %v562, %v584
      %v595 = vadd.f32 %v563, %v584
      %v596 = vadd.f32 %v564, %v584
      %v597 = vadd.f32 %v565, %v584
      %v598 = vadd.f32 %v566, %v584
      %v599 = vadd.f32 %v567, %v584
      %v600 = vadd.f32 %v568, %v584
      %v601 = vadd.f32 %v569, %v584
      %v602 = vadd.f32 %v570, %v584
      %v603 = vadd.f32 %v571, %v584
      %v604 = vadd.f32 %v572, %v584
      %v605 = vadd.f32 %v573, %v584
      %v606 = vadd.f32 %v574, %v584
      %v607 = vadd.f32 %v575, %v584
      %v608 = vadd.f32 %v576, %v584
      %v609 = vadd.f32 %v577, %v584
      %v610 = vadd.f32 %v578, %v584
      %v611 = vmax.f32 %v586, 0.0
      %v612 = vmax.f32 %v587, 0.0
      %v613 = vmax.f32 %v588, 0.0
      %v614 = vmax.f32 %v589, 0.0
      %v615 = vmax.f32 %v590, 0.0
      %v616 = vmax.f32 %v591, 0.0
      %v617 = vmax.f32 %v592, 0.0
      %v618 = vmax.f32 %v593, 0.0
      %v619 = vmax.f32 %v594, 0.0
      %v620 = vmax.f32 %v595, 0.0
      %v621 = vmax.f32 %v596, 0.0
      %v622 = vmax.f32 %v597, 0.0
      %v623 = vmax.f32 %v598, 0.0
      %v624 = vmax.f32 %v599, 0.0
      %v625 = vmax.f32 %v600, 0.0
      %v626 = vmax.f32 %v601, 0.0
      %v627 = vmax.f32 %v602, 0.0
      %v628 = vmax.f32 %v603, 0.0
      %v629 = vmax.f32 %v604, 0.0
      %v630 = vmax.f32 %v605, 0.0
      %v631 = vmax.f32 %v606, 0.0
      %v632 = vmax.f32 %v607, 0.0
      %v633 = vmax.f32 %v608, 0.0
      %v634 = vmax.f32 %v609, 0.0
      %v635 = vmax.f32 %v610, 0.0
      %v636 = vpack.c.bf16 %v612, %v611
      %v637 = vpack.c.bf16 %v614, %v613
      %v638 = vpack.c.bf16 %v616, %v615
      %v639 = vpack.c.bf16 %v618, %v617
      %v640 = vpack.c.bf16 %v620, %v619
      %v641 = vpack.c.bf16 %v622, %v621
      %v642 = vpack.c.bf16 %v624, %v623
      %v643 = vpack.c.bf16 %v626, %v625
      %v644 = vpack.c.bf16 %v628, %v627
      %v645 = vpack.c.bf16 %v630, %v629
      %v646 = vpack.c.bf16 %v632, %v631
      %v647 = vpack.c.bf16 %v634, %v633
      %v648 = vpack.c.bf16 %v635, %v635
      %v662 = vunpack.c.l.b16 %v636
      %v663 = vunpack.c.h.b16 %v636
      %v664 = vunpack.c.l.b16 %v637
      %v665 = vunpack.c.h.b16 %v637
      %v666 = vunpack.c.l.b16 %v638
      %v667 = vunpack.c.h.b16 %v638
      %v668 = vunpack.c.l.b16 %v639
      %v669 = vunpack.c.h.b16 %v639
      %v670 = vunpack.c.l.b16 %v640
      %v671 = vunpack.c.h.b16 %v640
      %v672 = vunpack.c.l.b16 %v641
      %v673 = vunpack.c.h.b16 %v641
      %v674 = vunpack.c.l.b16 %v642
      %v675 = vunpack.c.h.b16 %v642
      %v676 = vunpack.c.l.b16 %v643
      %v677 = vunpack.c.h.b16 %v643
      %v678 = vunpack.c.l.b16 %v644
      %v679 = vunpack.c.h.b16 %v644
      %v680 = vunpack.c.l.b16 %v645
      %v681 = vunpack.c.h.b16 %v645
      %v682 = vunpack.c.l.b16 %v646
      %v683 = vunpack.c.h.b16 %v646
      %v684 = vunpack.c.l.b16 %v647
      %v685 = vunpack.c.h.b16 %v647
      %v686 = vunpack.c.l.b16 %v648
      %v687 = vpack.c.b16 %v662, %v662
      %v688 = vpack.c.b16 %v663, %v663
      %v689 = vpack.c.b16 %v664, %v664
      %v690 = vpack.c.b16 %v665, %v665
      %v691 = vpack.c.b16 %v666, %v666
      %v692 = vpack.c.b16 %v667, %v667
      %v693 = vpack.c.b16 %v668, %v668
      %v694 = vpack.c.b16 %v669, %v669
      %v695 = vpack.c.b16 %v670, %v670
      %v696 = vpack.c.b16 %v671, %v671
      %v697 = vpack.c.b16 %v672, %v672
      %v698 = vpack.c.b16 %v673, %v673
      %v699 = vpack.c.b16 %v674, %v674
      %v700 = vpack.c.b16 %v675, %v675
      %v701 = vpack.c.b16 %v676, %v676
      %v702 = vpack.c.b16 %v677, %v677
      %v703 = vpack.c.b16 %v678, %v678
      %v704 = vpack.c.b16 %v679, %v679
      %v705 = vpack.c.b16 %v680, %v680
      %v706 = vpack.c.b16 %v681, %v681
      %v707 = vpack.c.b16 %v682, %v682
      %v708 = vpack.c.b16 %v683, %v683
      %v709 = vpack.c.b16 %v684, %v684
      %v710 = vpack.c.b16 %v685, %v685
      %v711 = vpack.c.b16 %v686, %v686
      %vm737 = vcmask 60416
      %738 = vst.msk [vmem:[%s264] sm:$0xf] %vm737, %v687
      %739 = vst.msk [vmem:[%s264 + $0x4] sm:$0xf] %vm737, %v688
      %740 = vst.msk [vmem:[%s264 + $0x8] sm:$0xf] %vm737, %v689
      %741 = vst.msk [vmem:[%s264 + $0xc] sm:$0xf] %vm737, %v690
      %742 = vst.msk [vmem:[%s264 + $0x10] sm:$0xf] %vm737, %v691
      %743 = vst.msk [vmem:[%s264 + $0x14] sm:$0xf] %vm737, %v692
      %744 = vst.msk [vmem:[%s264 + $0x18] sm:$0xf] %vm737, %v693
      %745 = vst.msk [vmem:[%s264 + $0x1c] sm:$0xf] %vm737, %v694
      %746 = vst.msk [vmem:[%s264 + $0x20] sm:$0xf] %vm737, %v695
      %747 = vst.msk [vmem:[%s264 + $0x24] sm:$0xf] %vm737, %v696
      %748 = vst.msk [vmem:[%s264 + $0x28] sm:$0xf] %vm737, %v697
      %749 = vst.msk [vmem:[%s264 + $0x2c] sm:$0xf] %vm737, %v698
      %750 = vst.msk [vmem:[%s264 + $0x30] sm:$0xf] %vm737, %v699
      %751 = vst.msk [vmem:[%s264 + $0x34] sm:$0xf] %vm737, %v700
      %752 = vst.msk [vmem:[%s264 + $0x38] sm:$0xf] %vm737, %v701
      %753 = vst.msk [vmem:[%s264 + $0x3c] sm:$0xf] %vm737, %v702
      %754 = vst.msk [vmem:[%s264 + $0x40] sm:$0xf] %vm737, %v703
      %755 = vst.msk [vmem:[%s264 + $0x44] sm:$0xf] %vm737, %v704
      %756 = vst.msk [vmem:[%s264 + $0x48] sm:$0xf] %vm737, %v705
      %757 = vst.msk [vmem:[%s264 + $0x4c] sm:$0xf] %vm737, %v706
      %758 = vst.msk [vmem:[%s264 + $0x50] sm:$0xf] %vm737, %v707
      %759 = vst.msk [vmem:[%s264 + $0x54] sm:$0xf] %vm737, %v708
      %760 = vst.msk [vmem:[%s264 + $0x58] sm:$0xf] %vm737, %v709
      %761 = vst.msk [vmem:[%s264 + $0x5c] sm:$0xf] %vm737, %v710
      %762 = vst.msk [vmem:[%s264 + $0x60] sm:$0xf] %vm737, %v711
      %s763 = smul.u32 25, %s19
      %p764 = scmp.lt.s32.totalorder %s763, 49
      %s765 = scalar_select %p764, %s763, 49
      %p766 = scmp.lt.s32.totalorder %s20, 0
      %s767 = scalar_select %p766, %s20, 0
      %s768 = sadd.s32 %s767, %s765
      %s769 = smul.addr %s768, 4
      %s770 = scalar_lea.vmem %s4, %s769
      // Predicated region
      $region37: #{mobilenet_forward.4} parent=35 // pred_check
        %p771 = pneg %p151
      $region38: #{mobilenet_forward.4} parent=35 // pred_check_branch
        %773 = sbr.rel (%p771) target = $region40
      $region39: #{mobilenet_forward.4} parent=35 // pred_region
        %s774 = smul.u32 25, %s19
      $region40: #{mobilenet_forward.4} parent=35 // pred_fallthru
        _
    $region36: #{mobilenet_forward.4} parent=5 // pred_fallthru
      _
    %p775 = scmp.le.s32.totalorder 2, %s10
    // Predicated region
    $region41: #{mobilenet_forward.4} parent=5 // pred_check
      %p776 = pneg %p775
    $region42: #{mobilenet_forward.4} parent=5 // pred_check_branch
      %778 = sbr.rel (%p776) target = $region44
    $region43: #{mobilenet_forward.4} parent=5 // pred_region
      %s779 = ssub.s32 %s10, 2
      // Predicated region
      $region45: #{mobilenet_forward.4} parent=43 // pred_check
        %p780 = pneg %p157
      $region46: #{mobilenet_forward.4} parent=43 // pred_check_branch
        %782 = sbr.rel (%p780) target = $region48
      $region47: #{mobilenet_forward.4} parent=43 // pred_region
        %s783 = smul.u32 25, %s21
        %p784 = scmp.lt.s32.totalorder %s783, 49
        %s785 = scalar_select %p784, %s783, 49
        %p786 = scmp.lt.s32.totalorder %s22, 0
        %s787 = scalar_select %p786, %s22, 0
        %s788 = sadd.s32 %s787, %s785
        %s789 = smul.addr %s788, 4
        %s790 = scalar_lea.vmem %s4, %s789
      $region48: #{mobilenet_forward.4} parent=43 // pred_fallthru
        _
    $region44: #{mobilenet_forward.4} parent=5 // pred_fallthru
      _
  $region6: #{mobilenet_forward.4} parent=0 // loop_footer
    %s14 = sadd.s32 1, %s10
  $region7: #{mobilenet_forward.4} parent=0 // loop_footer_branch
    %9 = sbr.rel target = $region3
  $region8: #{mobilenet_forward.4} parent=0 // loop_exit
    _

// kernel: mobilenet_forward.6
$region0: #{mobilenet_forward.6}
  #allocation0 [shape = 'u32[]', space=smem, size = 0x4, offset = 0x4, fixed_abs, tag = 'smem constant byte address 0x4 - core index']
  #allocation1 [shape = 'u32[144,128]{1,0:T(1,128)}', space=vmem, size = 0x12000, scoped, tag = 'internal scratch']
  %s0 = inlined_call_operand.vmem [shape: bf16[2,4,72,16], index: 0, kind: input, shape index: {}]
  %s1 = inlined_call_operand.vmem [shape: f32[16,16], index: 1, kind: input, shape index: {}]
  %s2 = inlined_call_operand.vmem [shape: f32[1,16], index: 2, kind: input, shape index: {}]
  %s3 = inlined_call_operand.vmem [shape: f32[1,16], index: 3, kind: input, shape index: {}]
  %s4 = inlined_call_operand.vmem [shape: bf16[16,32], index: 4, kind: input, shape index: {}]
  %s5 = inlined_call_operand.vmem [shape: f32[1,32], index: 5, kind: input, shape index: {}]
  %s6 = inlined_call_operand.vmem [shape: f32[1,32], index: 6, kind: input, shape index: {}]
  %s7 = inlined_call_operand.vmem [shape: bf16[2,10,9,32], index: 7, kind: output, shape index: {}]
  %s8 = sld [smem:[#allocation0]]
  $region61: #{mobilenet_forward.6} parent=0
    _
  %s10 = ssub.s32 1, %s8
  %s11 = scalar_select 0, %s10, %s8
  loop: start=0, step=1, limit=4
  $region2: #{mobilenet_forward.6} parent=0 // loop_pre_header
    _
  $region3: #{mobilenet_forward.6} parent=0 // loop_header
    %s13 = sphi 0, %s17
    %p14 = scmp.ge.s32.totalorder %s13, 4
    %s23 = sphi 0, %s25
    %s26 = sphi 0, %s23
    %s27 = sphi 0, %s26
    %s43 = sphi 0, %s27
    %s47 = sphi 0, %s47
    %s49 = sphi 0, %s47
    %s50 = sphi 0, %s49
    %s64 = sphi 0, %s50
    %s68 = sphi 0, %s68
    %s70 = sphi 0, %s68
    %s71 = sphi 0, %s70
    %s85 = sphi 0, %s71
    %s89 = sphi 0, %s89
    %s91 = sphi 0, %s89
    %s92 = sphi 0, %s91
    %s106 = sphi 0, %s92
    %s110 = sphi 0, %s110
    %s112 = sphi 0, %s110
    %s113 = sphi 0, %s112
    %s127 = sphi 0, %s113
    %s131 = sphi 0, %s131
    %s133 = sphi 0, %s131
    %s134 = sphi 0, %s133
    %s148 = sphi 0, %s134
    %s152 = sphi 0, %s152
    %s154 = sphi 0, %s152
    %s155 = sphi 0, %s154
    %s169 = sphi 0, %s155
    %s175 = sphi 0, %s177
    %s178 = sphi 0, %s175
    %s179 = sphi 0, %s178
    %s195 = sphi 0, %s179
  $region4: #{mobilenet_forward.6} parent=0 // loop_header_branch
    %16 = sbr.rel (%p14) target = $region8
  $region5: #{mobilenet_forward.6} parent=0 // loop_body
    %s18 = ssub.s32 %s13, 1
    %s19 = ssub.s32 %s13, 2
    %s20 = sadd.s32 %s13, 1
    %s21 = ssub.s32 %s13, %s20
    %p22 = scmp.eq.s32.totalorder %s21, 0
    %s24 = sadd.s32 %s23, 1
    %s25 = scalar_select %p22, %s23, %s24
    %p28 = pneg %p22
    %p29 = scmp.eq.s32.totalorder %s13, 1
    %p30 = por %p28, %p29
    %p31 = scmp.ne.s32.totalorder %s23, %s26
    %p32 = scmp.eq.s32.totalorder %s13, 0
    %p33 = por %p31, %p32
    %p34 = scmp.ne.s32.totalorder %s23, %s26
    %p35 = scmp.eq.s32.totalorder %s18, 1
    %p36 = por %p34, %p35
    %p37 = scmp.ne.s32.totalorder %s26, %s27
    %p38 = scmp.eq.s32.totalorder %s18, 0
    %p39 = por %p37, %p38
    %p40 = scmp.ne.s32.totalorder %s26, %s27
    %p41 = scmp.eq.s32.totalorder %s19, 1
    %p42 = por %p40, %p41
    %p44 = scmp.ne.s32.totalorder %s27, %s43
    %p45 = scmp.eq.s32.totalorder %s19, 0
    %p46 = por %p44, %p45
    %s48 = sadd.s32 %s47, 1
    %p51 = scmp.eq.s32.totalorder %s13, 1
    %p52 = scmp.ne.s32.totalorder %s47, %s49
    %p53 = scmp.eq.s32.totalorder %s13, 0
    %p54 = por %p52, %p53
    %p55 = scmp.ne.s32.totalorder %s47, %s49
    %p56 = scmp.eq.s32.totalorder %s18, 1
    %p57 = por %p55, %p56
    %p58 = scmp.ne.s32.totalorder %s49, %s50
    %p59 = scmp.eq.s32.totalorder %s18, 0
    %p60 = por %p58, %p59
    %p61 = scmp.ne.s32.totalorder %s49, %s50
    %p62 = scmp.eq.s32.totalorder %s19, 1
    %p63 = por %p61, %p62
    %p65 = scmp.ne.s32.totalorder %s50, %s64
    %p66 = scmp.eq.s32.totalorder %s19, 0
    %p67 = por %p65, %p66
    %s69 = sadd.s32 %s68, 1
    %p72 = scmp.eq.s32.totalorder %s13, 1
    %p73 = scmp.ne.s32.totalorder %s68, %s70
    %p74 = scmp.eq.s32.totalorder %s13, 0
    %p75 = por %p73, %p74
    %p76 = scmp.ne.s32.totalorder %s68, %s70
    %p77 = scmp.eq.s32.totalorder %s18, 1
    %p78 = por %p76, %p77
    %p79 = scmp.ne.s32.totalorder %s70, %s71
    %p80 = scmp.eq.s32.totalorder %s18, 0
    %p81 = por %p79, %p80
    %p82 = scmp.ne.s32.totalorder %s70, %s71
    %p83 = scmp.eq.s32.totalorder %s19, 1
    %p84 = por %p82, %p83
    %p86 = scmp.ne.s32.totalorder %s71, %s85
    %p87 = scmp.eq.s32.totalorder %s19, 0
    %p88 = por %p86, %p87
    %s90 = sadd.s32 %s89, 1
    %p93 = scmp.eq.s32.totalorder %s13, 1
    %p94 = scmp.ne.s32.totalorder %s89, %s91
    %p95 = scmp.eq.s32.totalorder %s13, 0
    %p96 = por %p94, %p95
    %p97 = scmp.ne.s32.totalorder %s89, %s91
    %p98 = scmp.eq.s32.totalorder %s18, 1
    %p99 = por %p97, %p98
    %p100 = scmp.ne.s32.totalorder %s91, %s92
    %p101 = scmp.eq.s32.totalorder %s18, 0
    %p102 = por %p100, %p101
    %p103 = scmp.ne.s32.totalorder %s91, %s92
    %p104 = scmp.eq.s32.totalorder %s19, 1
    %p105 = por %p103, %p104
    %p107 = scmp.ne.s32.totalorder %s92, %s106
    %p108 = scmp.eq.s32.totalorder %s19, 0
    %p109 = por %p107, %p108
    %s111 = sadd.s32 %s110, 1
    %p114 = scmp.eq.s32.totalorder %s13, 1
    %p115 = scmp.ne.s32.totalorder %s110, %s112
    %p116 = scmp.eq.s32.totalorder %s13, 0
    %p117 = por %p115, %p116
    %p118 = scmp.ne.s32.totalorder %s110, %s112
    %p119 = scmp.eq.s32.totalorder %s18, 1
    %p120 = por %p118, %p119
    %p121 = scmp.ne.s32.totalorder %s112, %s113
    %p122 = scmp.eq.s32.totalorder %s18, 0
    %p123 = por %p121, %p122
    %p124 = scmp.ne.s32.totalorder %s112, %s113
    %p125 = scmp.eq.s32.totalorder %s19, 1
    %p126 = por %p124, %p125
    %p128 = scmp.ne.s32.totalorder %s113, %s127
    %p129 = scmp.eq.s32.totalorder %s19, 0
    %p130 = por %p128, %p129
    %s132 = sadd.s32 %s131, 1
    %p135 = scmp.eq.s32.totalorder %s13, 1
    %p136 = scmp.ne.s32.totalorder %s131, %s133
    %p137 = scmp.eq.s32.totalorder %s13, 0
    %p138 = por %p136, %p137
    %p139 = scmp.ne.s32.totalorder %s131, %s133
    %p140 = scmp.eq.s32.totalorder %s18, 1
    %p141 = por %p139, %p140
    %p142 = scmp.ne.s32.totalorder %s133, %s134
    %p143 = scmp.eq.s32.totalorder %s18, 0
    %p144 = por %p142, %p143
    %p145 = scmp.ne.s32.totalorder %s133, %s134
    %p146 = scmp.eq.s32.totalorder %s19, 1
    %p147 = por %p145, %p146
    %p149 = scmp.ne.s32.totalorder %s134, %s148
    %p150 = scmp.eq.s32.totalorder %s19, 0
    %p151 = por %p149, %p150
    %s153 = sadd.s32 %s152, 1
    %p156 = scmp.eq.s32.totalorder %s13, 1
    %p157 = scmp.ne.s32.totalorder %s152, %s154
    %p158 = scmp.eq.s32.totalorder %s13, 0
    %p159 = por %p157, %p158
    %p160 = scmp.ne.s32.totalorder %s152, %s154
    %p161 = scmp.eq.s32.totalorder %s18, 1
    %p162 = por %p160, %p161
    %p163 = scmp.ne.s32.totalorder %s154, %s155
    %p164 = scmp.eq.s32.totalorder %s18, 0
    %p165 = por %p163, %p164
    %p166 = scmp.ne.s32.totalorder %s154, %s155
    %p167 = scmp.eq.s32.totalorder %s19, 1
    %p168 = por %p166, %p167
    %p170 = scmp.ne.s32.totalorder %s155, %s169
    %p171 = scmp.eq.s32.totalorder %s19, 0
    %p172 = por %p170, %p171
    %s173 = ssub.s32 %s13, %s20
    %p174 = scmp.eq.s32.totalorder %s173, 0
    %s176 = sadd.s32 %s175, 1
    %s177 = scalar_select %p174, %s175, %s176
    %p180 = pneg %p174
    %p181 = scmp.eq.s32.totalorder %s13, 1
    %p182 = por %p180, %p181
    %p183 = scmp.ne.s32.totalorder %s175, %s178
    %p184 = scmp.eq.s32.totalorder %s13, 0
    %p185 = por %p183, %p184
    %p186 = scmp.ne.s32.totalorder %s175, %s178
    %p187 = scmp.eq.s32.totalorder %s18, 1
    %p188 = por %p186, %p187
    %p189 = scmp.ne.s32.totalorder %s178, %s179
    %p190 = scmp.eq.s32.totalorder %s18, 0
    %p191 = por %p189, %p190
    %p192 = scmp.ne.s32.totalorder %s178, %s179
    %p193 = scmp.eq.s32.totalorder %s19, 1
    %p194 = por %p192, %p193
    %p196 = scmp.ne.s32.totalorder %s179, %s195
    %p197 = scmp.eq.s32.totalorder %s19, 0
    %p198 = por %p196, %p197
    %p199 = scmp.le.s32.totalorder 1, %s13
    %p200 = scmp.lt.s32.totalorder %s13, 3
    %p201 = pnand %p199, %p200
    %p202 = pneg %p201
    // Predicated region
    $region9: #{mobilenet_forward.6} parent=5 // pred_check
      _
    $region10: #{mobilenet_forward.6} parent=5 // pred_check_branch
      %204 = sbr.rel (%p201) target = $region12
    $region11: #{mobilenet_forward.6} parent=5 // pred_region
      %s205 = ssub.s32 %s13, 1
      // Predicated region
      $region13: #{mobilenet_forward.6} parent=11 // pred_check
        %p206 = pneg %p60
      $region14: #{mobilenet_forward.6} parent=11 // pred_check_branch
        %208 = sbr.rel (%p206) target = $region16
      $region15: #{mobilenet_forward.6} parent=11 // pred_region
        _
      $region16: #{mobilenet_forward.6} parent=11 // pred_fallthru
        _
      // Predicated region
      $region17: #{mobilenet_forward.6} parent=11 // pred_check
        %p209 = pneg %p81
      $region18: #{mobilenet_forward.6} parent=11 // pred_check_branch
        %211 = sbr.rel (%p209) target = $region20
      $region19: #{mobilenet_forward.6} parent=11 // pred_region
        _
      $region20: #{mobilenet_forward.6} parent=11 // pred_fallthru
        _
      // Predicated region
      $region21: #{mobilenet_forward.6} parent=11 // pred_check
        %p212 = pneg %p102
      $region22: #{mobilenet_forward.6} parent=11 // pred_check_branch
        %214 = sbr.rel (%p212) target = $region24
      $region23: #{mobilenet_forward.6} parent=11 // pred_region
        _
      $region24: #{mobilenet_forward.6} parent=11 // pred_fallthru
        _
      // Predicated region
      $region25: #{mobilenet_forward.6} parent=11 // pred_check
        %p215 = pneg %p123
      $region26: #{mobilenet_forward.6} parent=11 // pred_check_branch
        %217 = sbr.rel (%p215) target = $region28
      $region27: #{mobilenet_forward.6} parent=11 // pred_region
        _
      $region28: #{mobilenet_forward.6} parent=11 // pred_fallthru
        _
      // Predicated region
      $region29: #{mobilenet_forward.6} parent=11 // pred_check
        %p218 = pneg %p144
      $region30: #{mobilenet_forward.6} parent=11 // pred_check_branch
        %220 = sbr.rel (%p218) target = $region32
      $region31: #{mobilenet_forward.6} parent=11 // pred_region
        _
      $region32: #{mobilenet_forward.6} parent=11 // pred_fallthru
        _
      // Predicated region
      $region33: #{mobilenet_forward.6} parent=11 // pred_check
        %p221 = pneg %p165
      $region34: #{mobilenet_forward.6} parent=11 // pred_check_branch
        %223 = sbr.rel (%p221) target = $region36
      $region35: #{mobilenet_forward.6} parent=11 // pred_region
        _
      $region36: #{mobilenet_forward.6} parent=11 // pred_fallthru
        _
    $region12: #{mobilenet_forward.6} parent=5 // pred_fallthru
      _
    %p224 = scmp.lt.s32.totalorder %s13, 2
    // Predicated region
    $region37: #{mobilenet_forward.6} parent=5 // pred_check
      %p225 = pneg %p224
    $region38: #{mobilenet_forward.6} parent=5 // pred_check_branch
      %227 = sbr.rel (%p225) target = $region40
    $region39: #{mobilenet_forward.6} parent=5 // pred_region
      // Predicated region
      $region41: #{mobilenet_forward.6} parent=39 // pred_check
        %p228 = pneg %p33
      $region42: #{mobilenet_forward.6} parent=39 // pred_check_branch
        %230 = sbr.rel (%p228) target = $region44
      $region43: #{mobilenet_forward.6} parent=39 // pred_region
        %p231 = scmp.lt.s32.totalorder %s13, 1
        %s232 = scalar_select %p231, %s13, 1
        %s233 = smul.addr %s232, 36
        %s234 = smul.addr %s233, 4
        %s235 = scalar_lea.vmem %s0, %s234
      $region44: #{mobilenet_forward.6} parent=39 // pred_fallthru
        _
    $region40: #{mobilenet_forward.6} parent=5 // pred_fallthru
      _
    %p236 = scmp.le.s32.totalorder 1, %s13
    %p237 = scmp.lt.s32.totalorder %s13, 3
    %p238 = pnand %p236, %p237
    %p239 = pneg %p238
    // Predicated region
    $region45: #{mobilenet_forward.6} parent=5 // pred_check
      _
    $region46: #{mobilenet_forward.6} parent=5 // pred_check_branch
      %241 = sbr.rel (%p238) target = $region48
    $region47: #{mobilenet_forward.6} parent=5 // pred_region
      %s242 = ssub.s32 %s13, 1
      %p243 = scmp.lt.s32.totalorder %s18, 1
      %s244 = scalar_select %p243, %s18, 1
      %s245 = smul.addr %s244, 36
      %s246 = smul.addr %s245, 4
      %s247 = scalar_lea.vmem %s0, %s246
      %p248 = pneg %p39
      %p249 = pneg %p36
      %p250 = pneg %p60
      %p251 = pneg %p57
      %p252 = pneg %p81
      %p253 = pneg %p78
      %p254 = pneg %p102
      %p255 = pneg %p99
      %p256 = pneg %p123
      %p257 = pneg %p120
      %p258 = pneg %p144
      %p259 = pneg %p141
      %p260 = pneg %p165
      %p261 = pneg %p162
      %p262 = pneg %p191
      %p263 = pneg %p188
      %p264 = scmp.lt.s32.totalorder %s18, 1
      %s265 = scalar_select %p264, %s18, 1
      %s266 = smul.addr %s265, 20
      %s267 = smul.addr %s266, 4
      %s268 = scalar_lea.vmem %s7, %s267
      %p269 = scmp.lt.s32.totalorder %s18, 1
      %s270 = scalar_select %p269, %s18, 1
      %s271 = smul.addr %s270, 36
      %s272 = smul.addr %s271, 4
      %s273 = scalar_lea.vmem %s0, %s272
      %p274 = scmp.lt.s32.totalorder %s18, 1
      %s275 = scalar_select %p274, %s18, 1
      %s276 = smul.addr %s275, 20
      %s277 = smul.addr %s276, 4
      %s278 = scalar_lea.vmem %s7, %s277
      %v280 = vld [vmem:[%s1] sm:$0xff]
      %v281 = vld [vmem:[%s1 + $0x8] sm:$0xff]
      %v282 = vld [vmem:[%s2] sm:$0x1]
      %v283 = vld [vmem:[%s3] sm:$0x1]
      %v284 = vld [vmem:[%s4] sm:$0xf]
      %v285 = vld [vmem:[%s4 + $0x4] sm:$0xf]
      %v286 = vld [vmem:[%s5] sm:$0x1]
      %v287 = vld [vmem:[%s6] sm:$0x1]
      %vm288 = vcmask 257024
      %289 = vst.msk [vmem:[%s278] sm:$0xf] %vm288, 0
      %vm290 = vcmask 253952
      %vm291 = vsmask.f32 256
      %vm292 = vmand %vm290, %vm291
      %v293 = vld [vmem:[%s278 + $0x4] sm:$0x1]
      %v294 = vsel %vm292, 0, %v293
      %295 = vst [vmem:[%s278 + $0x4] sm:$0x1] %v294
      %296 = vst.msk [vmem:[%s278 + $0x8] sm:$0xf] %vm288, 0
      %v297 = vld [vmem:[%s278 + $0xc] sm:$0x1]
      %v298 = vsel %vm292, 0, %v297
      %299 = vst [vmem:[%s278 + $0xc] sm:$0x1] %v298
      %300 = vst.msk [vmem:[%s278 + $0x10] sm:$0xf] %vm288, 0
      %v301 = vld [vmem:[%s278 + $0x14] sm:$0x1]
      %v302 = vsel %vm292, 0, %v301
      %303 = vst [vmem:[%s278 + $0x14] sm:$0x1] %v302
      %304 = vst.msk [vmem:[%s278 + $0x18] sm:$0xf] %vm288, 0
      %v305 = vld [vmem:[%s278 + $0x1c] sm:$0x1]
      %v306 = vsel %vm292, 0, %v305
      %307 = vst [vmem:[%s278 + $0x1c] sm:$0x1] %v306
      %308 = vst.msk [vmem:[%s278 + $0x20] sm:$0xf] %vm288, 0
      %v309 = vld [vmem:[%s278 + $0x24] sm:$0x1]
      %v310 = vsel %vm292, 0, %v309
      %311 = vst [vmem:[%s278 + $0x24] sm:$0x1] %v310
      %312 = vst.msk [vmem:[%s278 + $0x28] sm:$0xf] %vm288, 0
      %v313 = vld [vmem:[%s278 + $0x2c] sm:$0x1]
      %v314 = vsel %vm292, 0, %v313
      %315 = vst [vmem:[%s278 + $0x2c] sm:$0x1] %v314
      %316 = vst.msk [vmem:[%s278 + $0x30] sm:$0xf] %vm288, 0
      %v317 = vld [vmem:[%s278 + $0x34] sm:$0x1]
      %v318 = vsel %vm292, 0, %v317
      %319 = vst [vmem:[%s278 + $0x34] sm:$0x1] %v318
      %320 = vst.msk [vmem:[%s278 + $0x38] sm:$0xf] %vm288, 0
      %v321 = vld [vmem:[%s278 + $0x3c] sm:$0x1]
      %v322 = vsel %vm292, 0, %v321
      %323 = vst [vmem:[%s278 + $0x3c] sm:$0x1] %v322
      %324 = vst.msk [vmem:[%s278 + $0x40] sm:$0xf] %vm288, 0
      %v325 = vld [vmem:[%s278 + $0x44] sm:$0x1]
      %v326 = vsel %vm292, 0, %v325
      %327 = vst [vmem:[%s278 + $0x44] sm:$0x1] %v326
      %328 = vst.msk [vmem:[%s278 + $0x48] sm:$0xf] %vm288, 0
      %v329 = vld [vmem:[%s278 + $0x4c] sm:$0x1]
      %v330 = vsel %vm292, 0, %v329
      %331 = vst [vmem:[%s278 + $0x4c] sm:$0x1] %v330
      %v332 = vld [vmem:[%s273] sm:$0xf]
      %v333 = vld [vmem:[%s273 + $0x4] sm:$0xf]
      %v334 = vld [vmem:[%s273 + $0x8] sm:$0xf]
      %v335 = vld [vmem:[%s273 + $0xc] sm:$0xf]
      %v336 = vld [vmem:[%s273 + $0x10] sm:$0xf]
      %v337 = vld [vmem:[%s273 + $0x14] sm:$0xf]
      %v338 = vld [vmem:[%s273 + $0x18] sm:$0xf]
      %v339 = vld [vmem:[%s273 + $0x1c] sm:$0xf]
      %v340 = vld [vmem:[%s273 + $0x20] sm:$0x1]
      %v341 = vunpack.c.l.bf16 %v332
      %v342 = vunpack.c.l.bf16 %v333
      %v343 = vunpack.c.l.bf16 %v334
      %v344 = vunpack.c.l.bf16 %v335
      %v345 = vunpack.c.l.bf16 %v336
      %v346 = vunpack.c.l.bf16 %v337
      %v347 = vunpack.c.l.bf16 %v338
      %v348 = vunpack.c.l.bf16 %v339
      %v349 = vunpack.c.l.bf16 %v340
      %s350 = scalar_lea.vmem %s273, 36
      %v351 = vld [vmem:[%s350] sm:$0xf]
      %v352 = vld [vmem:[%s350 + $0x4] sm:$0xf]
      %v353 = vld [vmem:[%s350 + $0x8] sm:$0xf]
      %v354 = vld [vmem:[%s350 + $0xc] sm:$0xf]
      %v355 = vld [vmem:[%s350 + $0x10] sm:$0xf]
      %v356 = vld [vmem:[%s350 + $0x14] sm:$0xf]
      %v357 = vld [vmem:[%s350 + $0x18] sm:$0xf]
      %v358 = vld [vmem:[%s350 + $0x1c] sm:$0xf]
      %v359 = vunpack.c.l.bf16 %v351
      %v360 = vunpack.c.l.bf16 %v352
      %v361 = vunpack.c.l.bf16 %v353
      %v362 = vunpack.c.l.bf16 %v354
      %v363 = vunpack.c.l.bf16 %v355
      %v364 = vunpack.c.l.bf16 %v356
      %v365 = vunpack.c.l.bf16 %v357
      %v366 = vunpack.c.l.bf16 %v358
      %s367 = scalar_lea.vmem %s273, 72
      %v368 = vld [vmem:[%s367] sm:$0xf]
      %v369 = vld [vmem:[%s367 + $0x4] sm:$0xf]
      %v370 = vld [vmem:[%s367 + $0x8] sm:$0xf]
      %v371 = vld [vmem:[%s367 + $0xc] sm:$0xf]
      %v372 = vld [vmem:[%s367 + $0x10] sm:$0xf]
      %v373 = vld [vmem:[%s367 + $0x14] sm:$0xf]
      %v374 = vld [vmem:[%s367 + $0x18] sm:$0xf]
      %v375 = vld [vmem:[%s367 + $0x1c] sm:$0xf]
      %v376 = vunpack.c.l.bf16 %v368
      %v377 = vunpack.c.l.bf16 %v369
      %v378 = vunpack.c.l.bf16 %v370
      %v379 = vunpack.c.l.bf16 %v371
      %v380 = vunpack.c.l.bf16 %v372
      %v381 = vunpack.c.l.bf16 %v373
      %v382 = vunpack.c.l.bf16 %v374
      %v383 = vunpack.c.l.bf16 %v375
      %s384 = scalar_lea.vmem %s273, 108
      %v385 = vld [vmem:[%s384] sm:$0xf]
      %v386 = vld [vmem:[%s384 + $0x4] sm:$0xf]
      %v387 = vld [vmem:[%s384 + $0x8] sm:$0xf]
      %v388 = vld [vmem:[%s384 + $0xc] sm:$0xf]
      %v389 = vld [vmem:[%s384 + $0x10] sm:$0xf]
      %v390 = vld [vmem:[%s384 + $0x14] sm:$0xf]
      %v391 = vld [vmem:[%s384 + $0x18] sm:$0xf]
      %v392 = vunpack.c.l.bf16 %v385
      %v393 = vunpack.c.l.bf16 %v386
      %v394 = vunpack.c.l.bf16 %v387
      %v395 = vunpack.c.l.bf16 %v388
      %v396 = vunpack.c.l.bf16 %v389
      %v397 = vunpack.c.l.bf16 %v390
      %v398 = vunpack.c.l.bf16 %v391
      %v399 = vlaneseq
      %v400 = vshrl.u32 %v399, 7
      %v401 = vsub.s32 0, %v400
      %v402 = vrot.slane %v280, %v401
      %v403 = vmul.f32 %v341, %v402
      %v404 = vmul.f32 %v342, %v402
      %v405 = vmul.f32 %v343, %v402
      %v406 = vmul.f32 %v344, %v402
      %v407 = vmul.f32 %v345, %v402
      %v408 = vmul.f32 %v346, %v402
      %v409 = vmul.f32 %v347, %v402
      %v410 = vlaneseq
      %v411 = vshrl.u32 %v410, 7
      %v412 = vsub.s32 1, %v411
      %v413 = vrot.slane %v280, %v412
      %v414 = vmul.f32 %v359, %v413
      %v415 = vmul.f32 %v360, %v413
      %v416 = vmul.f32 %v361, %v413
      %v417 = vmul.f32 %v362, %v413
      %v418 = vmul.f32 %v363, %v413
      %v419 = vmul.f32 %v364, %v413
      %v420 = vmul.f32 %v365, %v413
      %v421 = vadd.f32 %v403, %v414
      %v422 = vadd.f32 %v404, %v415
      %v423 = vadd.f32 %v405, %v416
      %v424 = vadd.f32 %v406, %v417
      %v425 = vadd.f32 %v407, %v418
      %v426 = vadd.f32 %v408, %v419
      %v427 = vadd.f32 %v409, %v420
      %v428 = vlaneseq
      %v429 = vshrl.u32 %v428, 7
      %v430 = vsub.s32 2, %v429
      %v431 = vrot.slane %v280, %v430
      %v432 = vmul.f32 %v341, %v431
      %v433 = vmul.f32 %v342, %v431
      %v434 = vmul.f32 %v343, %v431
      %v435 = vmul.f32 %v344, %v431
      %v436 = vmul.f32 %v345, %v431
      %v437 = vmul.f32 %v346, %v431
      %v438 = vmul.f32 %v347, %v431
      %v439 = vmul.f32 %v348, %v431
      %vm448 = vcmask 1046528
      %v449 = vrot.slane %v432, 1
      %v450 = vrot.slane %v433, 1
      %v451 = vsel %vm448, %v449, %v450
      %v452 = vrot.slane %v434, 1
      %v453 = vsel %vm448, %v450, %v452
      %v454 = vrot.slane %v435, 1
      %v455 = vsel %vm448, %v452, %v454
      %v456 = vrot.slane %v436, 1
      %v457 = vsel %vm448, %v454, %v456
      %v458 = vrot.slane %v437, 1
      %v459 = vsel %vm448, %v456, %v458
      %v460 = vrot.slane %v438, 1
      %v461 = vsel %vm448, %v458, %v460
      %v462 = vrot.slane %v439, 1
      %v463 = vsel %vm448, %v460, %v462
      %v471 = vadd.f32 %v421, %v451
      %v472 = vadd.f32 %v422, %v453
      %v473 = vadd.f32 %v423, %v455
      %v474 = vadd.f32 %v424, %v457
      %v475 = vadd.f32 %v425, %v459
      %v476 = vadd.f32 %v426, %v461
      %v477 = vadd.f32 %v427, %v463
      %v478 = vlaneseq
      %v479 = vshrl.u32 %v478, 7
      %v480 = vsub.s32 3, %v479
      %v481 = vrot.slane %v280, %v480
      %v482 = vmul.f32 %v376, %v481
      %v483 = vmul.f32 %v377, %v481
      %v484 = vmul.f32 %v378, %v481
      %v485 = vmul.f32 %v379, %v481
      %v486 = vmul.f32 %v380, %v481
      %v487 = vmul.f32 %v381, %v481
      %v488 = vmul.f32 %v382, %v481
      %v489 = vadd.f32 %v471, %v482
      %v490 = vadd.f32 %v472, %v483
      %v491 = vadd.f32 %v473, %v484
      %v492 = vadd.f32 %v474, %v485
      %v493 = vadd.f32 %v475, %v486
      %v494 = vadd.f32 %v476, %v487
      %v495 = vadd.f32 %v477, %v488
      %v496 = vlaneseq
      %v497 = vshrl.u32 %v496, 7
      %v498 = vsub.s32 4, %v497
      %v499 = vrot.slane %v280, %v498
      %v500 = vmul.f32 %v392, %v499
      %v501 = vmul.f32 %v393, %v499
      %v502 = vmul.f32 %v394, %v499
      %v503 = vmul.f32 %v395, %v499
      %v504 = vmul.f32 %v396, %v499
      %v505 = vmul.f32 %v397, %v499
      %v506 = vmul.f32 %v398, %v499
      %v507 = vadd.f32 %v489, %v500
      %v508 = vadd.f32 %v490, %v501
      %v509 = vadd.f32 %v491, %v502
      %v510 = vadd.f32 %v492, %v503
      %v511 = vadd.f32 %v493, %v504
      %v512 = vadd.f32 %v494, %v505
      %v513 = vadd.f32 %v495, %v506
      %v514 = vlaneseq
      %v515 = vshrl.u32 %v514, 7
      %v516 = vsub.s32 5, %v515
      %v517 = vrot.slane %v280, %v516
      %v518 = vmul.f32 %v376, %v517
      %v519 = vmul.f32 %v377, %v517
      %v520 = vmul.f32 %v378, %v517
      %v521 = vmul.f32 %v379, %v517
      %v522 = vmul.f32 %v380, %v517
      %v523 = vmul.f32 %v381, %v517
      %v524 = vmul.f32 %v382, %v517
      %v525 = vmul.f32 %v383, %v517
      %v534 = vrot.slane %v518, 1
      %v535 = vrot.slane %v519, 1
      %v536 = vsel %vm448, %v534, %v535
      %v537 = vrot.slane %v520, 1
      %v538 = vsel %vm448, %v535, %v537
      %v539 = vrot.slane %v521, 1
      %v540 = vsel %vm448, %v537, %v539
      %v541 = vrot.slane %v522, 1
      %v542 = vsel %vm448, %v539, %v541
      %v543 = vrot.slane %v523, 1
      %v544 = vsel %vm448, %v541, %v543
      %v545 = vrot.slane %v524, 1
      %v546 = vsel %vm448, %v543, %v545
      %v547 = vrot.slane %v525, 1
      %v548 = vsel %vm448, %v545, %v547
      %v556 = vadd.f32 %v507, %v536
      %v557 = vadd.f32 %v508, %v538
      %v558 = vadd.f32 %v509, %v540
      %v559 = vadd.f32 %v510, %v542
      %v560 = vadd.f32 %v511, %v544
      %v561 = vadd.f32 %v512, %v546
      %v562 = vadd.f32 %v513, %v548
      %v563 = vlaneseq
      %v564 = vshrl.u32 %v563, 7
      %v565 = vsub.s32 6, %v564
      %v566 = vrot.slane %v280, %v565
      %v567 = vmul.f32 %v342, %v566
      %v568 = vmul.f32 %v343, %v566
      %v569 = vmul.f32 %v344, %v566
      %v570 = vmul.f32 %v345, %v566
      %v571 = vmul.f32 %v346, %v566
      %v572 = vmul.f32 %v347, %v566
      %v573 = vmul.f32 %v348, %v566
      %v574 = vadd.f32 %v556, %v567
      %v575 = vadd.f32 %v557, %v568
      %v576 = vadd.f32 %v558, %v569
      %v577 = vadd.f32 %v559, %v570
      %v578 = vadd.f32 %v560, %v571
      %v579 = vadd.f32 %v561, %v572
      %v580 = vadd.f32 %v562, %v573
      %v581 = vlaneseq
      %v582 = vshrl.u32 %v581, 7
      %v583 = vsub.s32 7, %v582
      %v584 = vrot.slane %v280, %v583
      %v585 = vmul.f32 %v360, %v584
      %v586 = vmul.f32 %v361, %v584
      %v587 = vmul.f32 %v362, %v584
      %v588 = vmul.f32 %v363, %v584
      %v589 = vmul.f32 %v364, %v584
      %v590 = vmul.f32 %v365, %v584
      %v591 = vmul.f32 %v366, %v584
      %v592 = vadd.f32 %v574, %v585
      %v593 = vadd.f32 %v575, %v586
      %v594 = vadd.f32 %v576, %v587
      %v595 = vadd.f32 %v577, %v588
      %v596 = vadd.f32 %v578, %v589
      %v597 = vadd.f32 %v579, %v590
      %v598 = vadd.f32 %v580, %v591
      %v599 = vlaneseq
      %v600 = vshrl.u32 %v599, 7
      %v601 = vsub.s32 0, %v600
      %v602 = vrot.slane %v281, %v601
      %v603 = vmul.f32 %v342, %v602
      %v604 = vmul.f32 %v343, %v602
      %v605 = vmul.f32 %v344, %v602
      %v606 = vmul.f32 %v345, %v602
      %v607 = vmul.f32 %v346, %v602
      %v608 = vmul.f32 %v347, %v602
      %v609 = vmul.f32 %v348, %v602
      %v610 = vmul.f32 %v349, %v602
      %v619 = vrot.slane %v603, 1
      %v620 = vrot.slane %v604, 1
      %v621 = vsel %vm448, %v619, %v620
      %v622 = vrot.slane %v605, 1
      %v623 = vsel %vm448, %v620, %v622
      %v624 = vrot.slane %v606, 1
      %v625 = vsel %vm448, %v622, %v624
      %v626 = vrot.slane %v607, 1
      %v627 = vsel %vm448, %v624, %v626
      %v628 = vrot.slane %v608, 1
      %v629 = vsel %vm448, %v626, %v628
      %v630 = vrot.slane %v609, 1
      %v631 = vsel %vm448, %v628, %v630
      %v632 = vrot.slane %v610, 1
      %v633 = vsel %vm448, %v630, %v632
      %v641 = vadd.f32 %v592, %v621
      %v642 = vadd.f32 %v593, %v623
      %v643 = vadd.f32 %v594, %v625
      %v644 = vadd.f32 %v595, %v627
      %v645 = vadd.f32 %v596, %v629
      %v646 = vadd.f32 %v597, %v631
      %v647 = vadd.f32 %v598, %v633
      %v649 = vlaneseq
      %v650 = vshrl.u32 %v649, 7
      %v651 = vsub.s32 0, %v650
      %v652 = vrot.slane %v282, %v651
      %v654 = vmul.f32 %v641, %v652
      %v655 = vmul.f32 %v642, %v652
      %v656 = vmul.f32 %v643, %v652
      %v657 = vmul.f32 %v644, %v652
      %v658 = vmul.f32 %v645, %v652
      %v659 = vmul.f32 %v646, %v652
      %v660 = vmul.f32 %v647, %v652
      %v662 = vlaneseq
      %v663 = vshrl.u32 %v662, 7
      %v664 = vsub.s32 0, %v663
      %v665 = vrot.slane %v283, %v664
      %v667 = vadd.f32 %v654, %v665
      %v668 = vadd.f32 %v655, %v665
      %v669 = vadd.f32 %v656, %v665
      %v670 = vadd.f32 %v657, %v665
      %v671 = vadd.f32 %v658, %v665
      %v672 = vadd.f32 %v659, %v665
      %v673 = vadd.f32 %v660, %v665
      %v674 = vmax.f32 %v667, 0.0
      %v675 = vmax.f32 %v668, 0.0
      %v676 = vmax.f32 %v669, 0.0
      %v677 = vmax.f32 %v670, 0.0
      %v678 = vmax.f32 %v671, 0.0
      %v679 = vmax.f32 %v672, 0.0
      %v680 = vmax.f32 %v673, 0.0
      %v681 = vpack.c.bf16 %v675, %v674
      %v682 = vpack.c.bf16 %v677, %v676
      %v683 = vpack.c.bf16 %v679, %v678
      %v684 = vpack.c.bf16 %v680, %v680
      %v687 = vunpack.c.l.b16 %v284
      %v688 = vunpack.c.l.b16 %v285
      %v689 = vpack.c.b16 %v688, %v687
      %vm691 = vcmask 130048
      %v693 = vsel %vm691, %v681, 0
      %v696 = vsel %vm691, %v682, 0
      %v699 = vsel %vm691, %v683, 0
      %v702 = vsel %vm691, %v684, 0
      %704 = vmatprep.subr.bf16.mxu0 0
      %705 = vmatpush1.bf16.msra.mxu0 0
      %706 = vmatprep.subr.bf16.mxu0 0
      %707 = vmatpush1.bf16.msra.mxu0 0
      %708 = vmatprep.subr.bf16.mxu0 0
      %709 = vmatpush1.bf16.msra.mxu0 0
      %710 = vmatprep.subr.bf16.mxu0 0
      %711 = vmatpush1.bf16.msra.mxu0 0
      %712 = vmatprep.subr.bf16.mxu0 0
      %713 = vmatpush1.bf16.msra.mxu0 0
      %714 = vmatprep.subr.bf16.mxu0 0
      %715 = vmatpush1.bf16.msra.mxu0 0
      %716 = vmatprep.subr.bf16.mxu0 0
      %717 = vmatpush1.bf16.msra.mxu0 0
      %718 = vmatprep.subr.bf16.mxu0 0
      %719 = vmatpush1.bf16.msra.mxu0 %v689
      %720 = vmatprep.subr.bf16.mxu0 0
      %721 = vmatpush2.bf16.msra.mxu0 0
      %722 = vmatprep.subr.bf16.mxu0 0
      %723 = vmatpush2.bf16.msra.mxu0 0
      %724 = vmatprep.subr.bf16.mxu0 0
      %725 = vmatpush2.bf16.msra.mxu0 0
      %726 = vmatprep.subr.bf16.mxu0 0
      %727 = vmatpush2.bf16.msra.mxu0 0
      %728 = vmatprep.subr.bf16.mxu0 0
      %729 = vmatpush2.bf16.msra.mxu0 0
      %730 = vmatprep.subr.bf16.mxu0 0
      %731 = vmatpush2.bf16.msra.mxu0 0
      %732 = vmatprep.subr.bf16.mxu0 0
      %733 = vmatpush2.bf16.msra.mxu0 0
      %734 = vmatprep.subr.bf16.mxu0 0
      %735 = vmatpush2.bf16.msra.mxu0 0
      %736 = vmatprep.mubr.bf16.mxu0 0
      %737 = vmatmul.mubr.bf16.gmra.mxu0 %v693
      %v738 = vpop.f32.mrf.mxu0
      %v739 = vadd.f32 0.0, %v738
      %v740 = vpop.f32.mrf.mxu0
      %v741 = vpop.f32.mrf.mxu0
      %v742 = vadd.f32 0.0, %v741
      %v743 = vpop.f32.mrf.mxu0
      %744 = vmatprep.mubr.bf16.mxu0 0
      %745 = vmatmul.mubr.bf16.gmra.mxu0 %v696
      %v746 = vpop.f32.mrf.mxu0
      %v747 = vadd.f32 0.0, %v746
      %v748 = vpop.f32.mrf.mxu0
      %v749 = vpop.f32.mrf.mxu0
      %v750 = vadd.f32 0.0, %v749
      %v751 = vpop.f32.mrf.mxu0
      %752 = vmatprep.mubr.bf16.mxu0 0
      %753 = vmatmul.mubr.bf16.gmra.mxu0 %v699
      %v754 = vpop.f32.mrf.mxu0
      %v755 = vadd.f32 0.0, %v754
      %v756 = vpop.f32.mrf.mxu0
      %v757 = vpop.f32.mrf.mxu0
      %v758 = vadd.f32 0.0, %v757
      %v759 = vpop.f32.mrf.mxu0
      %760 = vmatprep.mubr.bf16.mxu0 0
      %761 = vmatmul.mubr.bf16.gmra.mxu0 %v702
      %v762 = vpop.f32.mrf.mxu0
      %v763 = vadd.f32 0.0, %v762
      %v764 = vpop.f32.mrf.mxu0
      %v765 = vpop.f32.mrf.mxu0
      %v766 = vpop.f32.mrf.mxu0
      %767 = vdwg.mxu0
      %v769 = vlaneseq
      %v770 = vshrl.u32 %v769, 7
      %v771 = vsub.s32 0, %v770
      %v772 = vrot.slane %v286, %v771
      %v774 = vmul.f32 %v739, %v772
      %v775 = vmul.f32 %v742, %v772
      %v776 = vmul.f32 %v747, %v772
      %v777 = vmul.f32 %v750, %v772
      %v778 = vmul.f32 %v755, %v772
      %v779 = vmul.f32 %v758, %v772
      %v780 = vmul.f32 %v763, %v772
      %v782 = vlaneseq
      %v783 = vshrl.u32 %v782, 7
      %v784 = vsub.s32 0, %v783
      %v785 = vrot.slane %v287, %v784
      %v787 = vadd.f32 %v774, %v785
      %v788 = vadd.f32 %v775, %v785
      %v789 = vadd.f32 %v776, %v785
      %v790 = vadd.f32 %v777, %v785
      %v791 = vadd.f32 %v778, %v785
      %v792 = vadd.f32 %v779, %v785
      %v793 = vadd.f32 %v780, %v785
      %v794 = vmax.f32 %v787, 0.0
      %v795 = vmax.f32 %v788, 0.0
      %v796 = vmax.f32 %v789, 0.0
      %v797 = vmax.f32 %v790, 0.0
      %v798 = vmax.f32 %v791, 0.0
      %v799 = vmax.f32 %v792, 0.0
      %v800 = vmax.f32 %v793, 0.0
      %v801 = vpack.c.bf16 %v794, %v794
      %v802 = vpack.c.bf16 %v795, %v795
      %v803 = vpack.c.bf16 %v796, %v796
      %v804 = vpack.c.bf16 %v797, %v797
      %v805 = vpack.c.bf16 %v798, %v798
      %v806 = vpack.c.bf16 %v799, %v799
      %v807 = vpack.c.bf16 %v800, %v800
      %v815 = vunpack.c.l.b16 %v801
      %v816 = vunpack.c.l.b16 %v802
      %v817 = vunpack.c.l.b16 %v803
      %v818 = vunpack.c.l.b16 %v804
      %v819 = vunpack.c.l.b16 %v805
      %v820 = vunpack.c.l.b16 %v806
      %v821 = vunpack.c.l.b16 %v807
      %v822 = vpack.c.b16 %v815, %v815
      %v823 = vpack.c.b16 %v816, %v816
      %v824 = vpack.c.b16 %v817, %v817
      %v825 = vpack.c.b16 %v818, %v818
      %v826 = vpack.c.b16 %v819, %v819
      %v827 = vpack.c.b16 %v820, %v820
      %v828 = vpack.c.b16 %v821, %v821
      %v830 = vshrl.u32 %v822, 16
      %v832 = vrot.slane %v830, 7
      %v833 = vshll.u32 %v822, 16
      %v835 = vor.u32 %v832, %v833
      %v837 = vshrl.u32 %v823, 16
      %v839 = vrot.slane %v837, 7
      %v840 = vshll.u32 %v823, 16
      %v842 = vor.u32 %v839, %v840
      %v844 = vshrl.u32 %v824, 16
      %v846 = vrot.slane %v844, 7
      %v847 = vshll.u32 %v824, 16
      %v849 = vor.u32 %v846, %v847
      %v851 = vshrl.u32 %v825, 16
      %v853 = vrot.slane %v851, 7
      %v854 = vshll.u32 %v825, 16
      %v856 = vor.u32 %v853, %v854
      %v858 = vshrl.u32 %v826, 16
      %v860 = vrot.slane %v858, 7
      %v861 = vshll.u32 %v826, 16
      %v863 = vor.u32 %v860, %v861
      %v865 = vshrl.u32 %v827, 16
      %v867 = vrot.slane %v865, 7
      %v868 = vshll.u32 %v827, 16
      %v870 = vor.u32 %v867, %v868
      %v872 = vshrl.u32 %v828, 16
      %v874 = vrot.slane %v872, 7
      %v875 = vshll.u32 %v828, 16
      %v877 = vor.u32 %v874, %v875
      %s885 = scalar_lea.vmem %s278, 8
      %vm886 = vcmask 257024
      %vm887 = vsmask.f32 7938
      %vm888 = vmand %vm886, %vm887
      %v889 = vld [vmem:[%s885] sm:$0xf]
      %v890 = vsel %vm888, %v835, %v889
      %891 = vst [vmem:[%s885] sm:$0xf] %v890
      %v892 = vld [vmem:[%s885 + $0x8] sm:$0xf]
      %v893 = vsel %vm888, %v842, %v892
      %894 = vst [vmem:[%s885 + $0x8] sm:$0xf] %v893
      %v895 = vld [vmem:[%s885 + $0x10] sm:$0xf]
      %v896 = vsel %vm888, %v849, %v895
      %897 = vst [vmem:[%s885 + $0x10] sm:$0xf] %v896
      %v898 = vld [vmem:[%s885 + $0x18] sm:$0xf]
      %v899 = vsel %vm888, %v856, %v898
      %900 = vst [vmem:[%s885 + $0x18] sm:$0xf] %v899
      %v901 = vld [vmem:[%s885 + $0x20] sm:$0xf]
      %v902 = vsel %vm888, %v863, %v901
      %903 = vst [vmem:[%s885 + $0x20] sm:$0xf] %v902
      %v904 = vld [vmem:[%s885 + $0x28] sm:$0xf]
      %v905 = vsel %vm888, %v870, %v904
      %906 = vst [vmem:[%s885 + $0x28] sm:$0xf] %v905
      %v907 = vld [vmem:[%s885 + $0x30] sm:$0xf]
      %v908 = vsel %vm888, %v877, %v907
      %909 = vst [vmem:[%s885 + $0x30] sm:$0xf] %v908
      %p910 = scmp.lt.s32.totalorder %s18, 1
      %s911 = scalar_select %p910, %s18, 1
      %s912 = smul.addr %s911, 20
      %s913 = smul.addr %s912, 4
      %s914 = scalar_lea.vmem %s7, %s913
      // Predicated region
      $region49: #{mobilenet_forward.6} parent=47 // pred_check
        %p915 = pneg %p188
      $region50: #{mobilenet_forward.6} parent=47 // pred_check_branch
        %917 = sbr.rel (%p915) target = $region52
      $region51: #{mobilenet_forward.6} parent=47 // pred_region
        _
      $region52: #{mobilenet_forward.6} parent=47 // pred_fallthru
        _
    $region48: #{mobilenet_forward.6} parent=5 // pred_fallthru
      _
    %p918 = scmp.le.s32.totalorder 2, %s13
    // Predicated region
    $region53: #{mobilenet_forward.6} parent=5 // pred_check
      %p919 = pneg %p918
    $region54: #{mobilenet_forward.6} parent=5 // pred_check_branch
      %921 = sbr.rel (%p919) target = $region56
    $region55: #{mobilenet_forward.6} parent=5 // pred_region
      %s922 = ssub.s32 %s13, 2
      // Predicated region
      $region57: #{mobilenet_forward.6} parent=55 // pred_check
        %p923 = pneg %p194
      $region58: #{mobilenet_forward.6} parent=55 // pred_check_branch
        %925 = sbr.rel (%p923) target = $region60
      $region59: #{mobilenet_forward.6} parent=55 // pred_region
        %p926 = scmp.lt.s32.totalorder %s19, 1
        %s927 = scalar_select %p926, %s19, 1
        %s928 = smul.addr %s927, 20
        %s929 = smul.addr %s928, 4
        %s930 = scalar_lea.vmem %s7, %s929
      $region60: #{mobilenet_forward.6} parent=55 // pred_fallthru
        _
    $region56: #{mobilenet_forward.6} parent=5 // pred_fallthru
      _
  $region6: #{mobilenet_forward.6} parent=0 // loop_footer
    %s17 = sadd.s32 1, %s13
  $region7: #{mobilenet_forward.6} parent=0 // loop_footer_branch
    %12 = sbr.rel target = $region3
  $region8: #{mobilenet_forward.6} parent=0 // loop_exit
    _

// kernel: mobilenet_forward.5
$region0: #{mobilenet_forward.5}
  #allocation0 [shape = 'u32[]', space=smem, size = 0x4, offset = 0x4, fixed_abs, tag = 'smem constant byte address 0x4 - core index']
  #allocation1 [shape = 'u32[144,128]{1,0:T(1,128)}', space=vmem, size = 0x12000, scoped, tag = 'internal scratch']
  %s0 = inlined_call_operand.vmem [shape: bf16[2,1,272,8], index: 0, kind: input, shape index: {}]
  %s1 = inlined_call_operand.vmem [shape: f32[16,8], index: 1, kind: input, shape index: {}]
  %s2 = inlined_call_operand.vmem [shape: f32[1,8], index: 2, kind: input, shape index: {}]
  %s3 = inlined_call_operand.vmem [shape: f32[1,8], index: 3, kind: input, shape index: {}]
  %s4 = inlined_call_operand.vmem [shape: bf16[8,16], index: 4, kind: input, shape index: {}]
  %s5 = inlined_call_operand.vmem [shape: f32[1,16], index: 5, kind: input, shape index: {}]
  %s6 = inlined_call_operand.vmem [shape: f32[1,16], index: 6, kind: input, shape index: {}]
  %s7 = inlined_call_operand.vmem [shape: bf16[2,17,16,16], index: 7, kind: output, shape index: {}]
  %s8 = sld [smem:[#allocation0]]
  $region61: #{mobilenet_forward.5} parent=0
    _
  %s10 = ssub.s32 1, %s8
  %s11 = scalar_select 0, %s10, %s8
  loop: start=0, step=1, limit=4
  $region2: #{mobilenet_forward.5} parent=0 // loop_pre_header
    _
  $region3: #{mobilenet_forward.5} parent=0 // loop_header
    %s13 = sphi 0, %s17
    %p14 = scmp.ge.s32.totalorder %s13, 4
    %s23 = sphi 0, %s25
    %s26 = sphi 0, %s23
    %s27 = sphi 0, %s26
    %s43 = sphi 0, %s27
    %s47 = sphi 0, %s47
    %s49 = sphi 0, %s47
    %s50 = sphi 0, %s49
    %s64 = sphi 0, %s50
    %s68 = sphi 0, %s68
    %s70 = sphi 0, %s68
    %s71 = sphi 0, %s70
    %s85 = sphi 0, %s71
    %s89 = sphi 0, %s89
    %s91 = sphi 0, %s89
    %s92 = sphi 0, %s91
    %s106 = sphi 0, %s92
    %s110 = sphi 0, %s110
    %s112 = sphi 0, %s110
    %s113 = sphi 0, %s112
    %s127 = sphi 0, %s113
    %s131 = sphi 0, %s131
    %s133 = sphi 0, %s131
    %s134 = sphi 0, %s133
    %s148 = sphi 0, %s134
    %s152 = sphi 0, %s152
    %s154 = sphi 0, %s152
    %s155 = sphi 0, %s154
    %s169 = sphi 0, %s155
    %s175 = sphi 0, %s177
    %s178 = sphi 0, %s175
    %s179 = sphi 0, %s178
    %s195 = sphi 0, %s179
  $region4: #{mobilenet_forward.5} parent=0 // loop_header_branch
    %16 = sbr.rel (%p14) target = $region8
  $region5: #{mobilenet_forward.5} parent=0 // loop_body
    %s18 = ssub.s32 %s13, 1
    %s19 = ssub.s32 %s13, 2
    %s20 = sadd.s32 %s13, 1
    %s21 = ssub.s32 %s13, %s20
    %p22 = scmp.eq.s32.totalorder %s21, 0
    %s24 = sadd.s32 %s23, 1
    %s25 = scalar_select %p22, %s23, %s24
    %p28 = pneg %p22
    %p29 = scmp.eq.s32.totalorder %s13, 1
    %p30 = por %p28, %p29
    %p31 = scmp.ne.s32.totalorder %s23, %s26
    %p32 = scmp.eq.s32.totalorder %s13, 0
    %p33 = por %p31, %p32
    %p34 = scmp.ne.s32.totalorder %s23, %s26
    %p35 = scmp.eq.s32.totalorder %s18, 1
    %p36 = por %p34, %p35
    %p37 = scmp.ne.s32.totalorder %s26, %s27
    %p38 = scmp.eq.s32.totalorder %s18, 0
    %p39 = por %p37, %p38
    %p40 = scmp.ne.s32.totalorder %s26, %s27
    %p41 = scmp.eq.s32.totalorder %s19, 1
    %p42 = por %p40, %p41
    %p44 = scmp.ne.s32.totalorder %s27, %s43
    %p45 = scmp.eq.s32.totalorder %s19, 0
    %p46 = por %p44, %p45
    %s48 = sadd.s32 %s47, 1
    %p51 = scmp.eq.s32.totalorder %s13, 1
    %p52 = scmp.ne.s32.totalorder %s47, %s49
    %p53 = scmp.eq.s32.totalorder %s13, 0
    %p54 = por %p52, %p53
    %p55 = scmp.ne.s32.totalorder %s47, %s49
    %p56 = scmp.eq.s32.totalorder %s18, 1
    %p57 = por %p55, %p56
    %p58 = scmp.ne.s32.totalorder %s49, %s50
    %p59 = scmp.eq.s32.totalorder %s18, 0
    %p60 = por %p58, %p59
    %p61 = scmp.ne.s32.totalorder %s49, %s50
    %p62 = scmp.eq.s32.totalorder %s19, 1
    %p63 = por %p61, %p62
    %p65 = scmp.ne.s32.totalorder %s50, %s64
    %p66 = scmp.eq.s32.totalorder %s19, 0
    %p67 = por %p65, %p66
    %s69 = sadd.s32 %s68, 1
    %p72 = scmp.eq.s32.totalorder %s13, 1
    %p73 = scmp.ne.s32.totalorder %s68, %s70
    %p74 = scmp.eq.s32.totalorder %s13, 0
    %p75 = por %p73, %p74
    %p76 = scmp.ne.s32.totalorder %s68, %s70
    %p77 = scmp.eq.s32.totalorder %s18, 1
    %p78 = por %p76, %p77
    %p79 = scmp.ne.s32.totalorder %s70, %s71
    %p80 = scmp.eq.s32.totalorder %s18, 0
    %p81 = por %p79, %p80
    %p82 = scmp.ne.s32.totalorder %s70, %s71
    %p83 = scmp.eq.s32.totalorder %s19, 1
    %p84 = por %p82, %p83
    %p86 = scmp.ne.s32.totalorder %s71, %s85
    %p87 = scmp.eq.s32.totalorder %s19, 0
    %p88 = por %p86, %p87
    %s90 = sadd.s32 %s89, 1
    %p93 = scmp.eq.s32.totalorder %s13, 1
    %p94 = scmp.ne.s32.totalorder %s89, %s91
    %p95 = scmp.eq.s32.totalorder %s13, 0
    %p96 = por %p94, %p95
    %p97 = scmp.ne.s32.totalorder %s89, %s91
    %p98 = scmp.eq.s32.totalorder %s18, 1
    %p99 = por %p97, %p98
    %p100 = scmp.ne.s32.totalorder %s91, %s92
    %p101 = scmp.eq.s32.totalorder %s18, 0
    %p102 = por %p100, %p101
    %p103 = scmp.ne.s32.totalorder %s91, %s92
    %p104 = scmp.eq.s32.totalorder %s19, 1
    %p105 = por %p103, %p104
    %p107 = scmp.ne.s32.totalorder %s92, %s106
    %p108 = scmp.eq.s32.totalorder %s19, 0
    %p109 = por %p107, %p108
    %s111 = sadd.s32 %s110, 1
    %p114 = scmp.eq.s32.totalorder %s13, 1
    %p115 = scmp.ne.s32.totalorder %s110, %s112
    %p116 = scmp.eq.s32.totalorder %s13, 0
    %p117 = por %p115, %p116
    %p118 = scmp.ne.s32.totalorder %s110, %s112
    %p119 = scmp.eq.s32.totalorder %s18, 1
    %p120 = por %p118, %p119
    %p121 = scmp.ne.s32.totalorder %s112, %s113
    %p122 = scmp.eq.s32.totalorder %s18, 0
    %p123 = por %p121, %p122
    %p124 = scmp.ne.s32.totalorder %s112, %s113
    %p125 = scmp.eq.s32.totalorder %s19, 1
    %p126 = por %p124, %p125
    %p128 = scmp.ne.s32.totalorder %s113, %s127
    %p129 = scmp.eq.s32.totalorder %s19, 0
    %p130 = por %p128, %p129
    %s132 = sadd.s32 %s131, 1
    %p135 = scmp.eq.s32.totalorder %s13, 1
    %p136 = scmp.ne.s32.totalorder %s131, %s133
    %p137 = scmp.eq.s32.totalorder %s13, 0
    %p138 = por %p136, %p137
    %p139 = scmp.ne.s32.totalorder %s131, %s133
    %p140 = scmp.eq.s32.totalorder %s18, 1
    %p141 = por %p139, %p140
    %p142 = scmp.ne.s32.totalorder %s133, %s134
    %p143 = scmp.eq.s32.totalorder %s18, 0
    %p144 = por %p142, %p143
    %p145 = scmp.ne.s32.totalorder %s133, %s134
    %p146 = scmp.eq.s32.totalorder %s19, 1
    %p147 = por %p145, %p146
    %p149 = scmp.ne.s32.totalorder %s134, %s148
    %p150 = scmp.eq.s32.totalorder %s19, 0
    %p151 = por %p149, %p150
    %s153 = sadd.s32 %s152, 1
    %p156 = scmp.eq.s32.totalorder %s13, 1
    %p157 = scmp.ne.s32.totalorder %s152, %s154
    %p158 = scmp.eq.s32.totalorder %s13, 0
    %p159 = por %p157, %p158
    %p160 = scmp.ne.s32.totalorder %s152, %s154
    %p161 = scmp.eq.s32.totalorder %s18, 1
    %p162 = por %p160, %p161
    %p163 = scmp.ne.s32.totalorder %s154, %s155
    %p164 = scmp.eq.s32.totalorder %s18, 0
    %p165 = por %p163, %p164
    %p166 = scmp.ne.s32.totalorder %s154, %s155
    %p167 = scmp.eq.s32.totalorder %s19, 1
    %p168 = por %p166, %p167
    %p170 = scmp.ne.s32.totalorder %s155, %s169
    %p171 = scmp.eq.s32.totalorder %s19, 0
    %p172 = por %p170, %p171
    %s173 = ssub.s32 %s13, %s20
    %p174 = scmp.eq.s32.totalorder %s173, 0
    %s176 = sadd.s32 %s175, 1
    %s177 = scalar_select %p174, %s175, %s176
    %p180 = pneg %p174
    %p181 = scmp.eq.s32.totalorder %s13, 1
    %p182 = por %p180, %p181
    %p183 = scmp.ne.s32.totalorder %s175, %s178
    %p184 = scmp.eq.s32.totalorder %s13, 0
    %p185 = por %p183, %p184
    %p186 = scmp.ne.s32.totalorder %s175, %s178
    %p187 = scmp.eq.s32.totalorder %s18, 1
    %p188 = por %p186, %p187
    %p189 = scmp.ne.s32.totalorder %s178, %s179
    %p190 = scmp.eq.s32.totalorder %s18, 0
    %p191 = por %p189, %p190
    %p192 = scmp.ne.s32.totalorder %s178, %s179
    %p193 = scmp.eq.s32.totalorder %s19, 1
    %p194 = por %p192, %p193
    %p196 = scmp.ne.s32.totalorder %s179, %s195
    %p197 = scmp.eq.s32.totalorder %s19, 0
    %p198 = por %p196, %p197
    %p199 = scmp.le.s32.totalorder 1, %s13
    %p200 = scmp.lt.s32.totalorder %s13, 3
    %p201 = pnand %p199, %p200
    %p202 = pneg %p201
    // Predicated region
    $region9: #{mobilenet_forward.5} parent=5 // pred_check
      _
    $region10: #{mobilenet_forward.5} parent=5 // pred_check_branch
      %204 = sbr.rel (%p201) target = $region12
    $region11: #{mobilenet_forward.5} parent=5 // pred_region
      %s205 = ssub.s32 %s13, 1
      // Predicated region
      $region13: #{mobilenet_forward.5} parent=11 // pred_check
        %p206 = pneg %p60
      $region14: #{mobilenet_forward.5} parent=11 // pred_check_branch
        %208 = sbr.rel (%p206) target = $region16
      $region15: #{mobilenet_forward.5} parent=11 // pred_region
        _
      $region16: #{mobilenet_forward.5} parent=11 // pred_fallthru
        _
      // Predicated region
      $region17: #{mobilenet_forward.5} parent=11 // pred_check
        %p209 = pneg %p81
      $region18: #{mobilenet_forward.5} parent=11 // pred_check_branch
        %211 = sbr.rel (%p209) target = $region20
      $region19: #{mobilenet_forward.5} parent=11 // pred_region
        _
      $region20: #{mobilenet_forward.5} parent=11 // pred_fallthru
        _
      // Predicated region
      $region21: #{mobilenet_forward.5} parent=11 // pred_check
        %p212 = pneg %p102
      $region22: #{mobilenet_forward.5} parent=11 // pred_check_branch
        %214 = sbr.rel (%p212) target = $region24
      $region23: #{mobilenet_forward.5} parent=11 // pred_region
        _
      $region24: #{mobilenet_forward.5} parent=11 // pred_fallthru
        _
      // Predicated region
      $region25: #{mobilenet_forward.5} parent=11 // pred_check
        %p215 = pneg %p123
      $region26: #{mobilenet_forward.5} parent=11 // pred_check_branch
        %217 = sbr.rel (%p215) target = $region28
      $region27: #{mobilenet_forward.5} parent=11 // pred_region
        _
      $region28: #{mobilenet_forward.5} parent=11 // pred_fallthru
        _
      // Predicated region
      $region29: #{mobilenet_forward.5} parent=11 // pred_check
        %p218 = pneg %p144
      $region30: #{mobilenet_forward.5} parent=11 // pred_check_branch
        %220 = sbr.rel (%p218) target = $region32
      $region31: #{mobilenet_forward.5} parent=11 // pred_region
        _
      $region32: #{mobilenet_forward.5} parent=11 // pred_fallthru
        _
      // Predicated region
      $region33: #{mobilenet_forward.5} parent=11 // pred_check
        %p221 = pneg %p165
      $region34: #{mobilenet_forward.5} parent=11 // pred_check_branch
        %223 = sbr.rel (%p221) target = $region36
      $region35: #{mobilenet_forward.5} parent=11 // pred_region
        _
      $region36: #{mobilenet_forward.5} parent=11 // pred_fallthru
        _
    $region12: #{mobilenet_forward.5} parent=5 // pred_fallthru
      _
    %p224 = scmp.lt.s32.totalorder %s13, 2
    // Predicated region
    $region37: #{mobilenet_forward.5} parent=5 // pred_check
      %p225 = pneg %p224
    $region38: #{mobilenet_forward.5} parent=5 // pred_check_branch
      %227 = sbr.rel (%p225) target = $region40
    $region39: #{mobilenet_forward.5} parent=5 // pred_region
      // Predicated region
      $region41: #{mobilenet_forward.5} parent=39 // pred_check
        %p228 = pneg %p33
      $region42: #{mobilenet_forward.5} parent=39 // pred_check_branch
        %230 = sbr.rel (%p228) target = $region44
      $region43: #{mobilenet_forward.5} parent=39 // pred_region
        %p231 = scmp.lt.s32.totalorder %s13, 1
        %s232 = scalar_select %p231, %s13, 1
        %s233 = smul.addr %s232, 34
        %s234 = smul.addr %s233, 4
        %s235 = scalar_lea.vmem %s0, %s234
      $region44: #{mobilenet_forward.5} parent=39 // pred_fallthru
        _
    $region40: #{mobilenet_forward.5} parent=5 // pred_fallthru
      _
    %p236 = scmp.le.s32.totalorder 1, %s13
    %p237 = scmp.lt.s32.totalorder %s13, 3
    %p238 = pnand %p236, %p237
    %p239 = pneg %p238
    // Predicated region
    $region45: #{mobilenet_forward.5} parent=5 // pred_check
      _
    $region46: #{mobilenet_forward.5} parent=5 // pred_check_branch
      %241 = sbr.rel (%p238) target = $region48
    $region47: #{mobilenet_forward.5} parent=5 // pred_region
      %s242 = ssub.s32 %s13, 1
      %p243 = scmp.lt.s32.totalorder %s18, 1
      %s244 = scalar_select %p243, %s18, 1
      %s245 = smul.addr %s244, 34
      %s246 = smul.addr %s245, 4
      %s247 = scalar_lea.vmem %s0, %s246
      %p248 = pneg %p39
      %p249 = pneg %p36
      %p250 = pneg %p60
      %p251 = pneg %p57
      %p252 = pneg %p81
      %p253 = pneg %p78
      %p254 = pneg %p102
      %p255 = pneg %p99
      %p256 = pneg %p123
      %p257 = pneg %p120
      %p258 = pneg %p144
      %p259 = pneg %p141
      %p260 = pneg %p165
      %p261 = pneg %p162
      %p262 = pneg %p191
      %p263 = pneg %p188
      %p264 = scmp.lt.s32.totalorder %s18, 1
      %s265 = scalar_select %p264, %s18, 1
      %s266 = smul.addr %s265, 34
      %s267 = smul.addr %s266, 4
      %s268 = scalar_lea.vmem %s7, %s267
      %p269 = scmp.lt.s32.totalorder %s18, 1
      %s270 = scalar_select %p269, %s18, 1
      %s271 = smul.addr %s270, 34
      %s272 = smul.addr %s271, 4
      %s273 = scalar_lea.vmem %s0, %s272
      %p274 = scmp.lt.s32.totalorder %s18, 1
      %s275 = scalar_select %p274, %s18, 1
      %s276 = smul.addr %s275, 34
      %s277 = smul.addr %s276, 4
      %s278 = scalar_lea.vmem %s7, %s277
      %v280 = vld [vmem:[%s1] sm:$0xff]
      %v281 = vld [vmem:[%s1 + $0x8] sm:$0xff]
      %v282 = vld [vmem:[%s2] sm:$0x1]
      %v283 = vld [vmem:[%s3] sm:$0x1]
      %v284 = vld [vmem:[%s4] sm:$0xf]
      %v285 = vld [vmem:[%s5] sm:$0x1]
      %v286 = vld [vmem:[%s6] sm:$0x1]
      %vm287 = vcmask 125952
      %288 = vst.msk [vmem:[%s278] sm:$0xf] %vm287, 0
      %289 = vst.msk [vmem:[%s278 + $0x4] sm:$0xf] %vm287, 0
      %290 = vst.msk [vmem:[%s278 + $0x8] sm:$0xf] %vm287, 0
      %291 = vst.msk [vmem:[%s278 + $0xc] sm:$0xf] %vm287, 0
      %292 = vst.msk [vmem:[%s278 + $0x10] sm:$0xf] %vm287, 0
      %293 = vst.msk [vmem:[%s278 + $0x14] sm:$0xf] %vm287, 0
      %294 = vst.msk [vmem:[%s278 + $0x18] sm:$0xf] %vm287, 0
      %295 = vst.msk [vmem:[%s278 + $0x1c] sm:$0xf] %vm287, 0
      %296 = vst.msk [vmem:[%s278 + $0x20] sm:$0xf] %vm287, 0
      %297 = vst.msk [vmem:[%s278 + $0x24] sm:$0xf] %vm287, 0
      %298 = vst.msk [vmem:[%s278 + $0x28] sm:$0xf] %vm287, 0
      %299 = vst.msk [vmem:[%s278 + $0x2c] sm:$0xf] %vm287, 0
      %300 = vst.msk [vmem:[%s278 + $0x30] sm:$0xf] %vm287, 0
      %301 = vst.msk [vmem:[%s278 + $0x34] sm:$0xf] %vm287, 0
      %302 = vst.msk [vmem:[%s278 + $0x38] sm:$0xf] %vm287, 0
      %303 = vst.msk [vmem:[%s278 + $0x3c] sm:$0xf] %vm287, 0
      %304 = vst.msk [vmem:[%s278 + $0x40] sm:$0xf] %vm287, 0
      %305 = vst.msk [vmem:[%s278 + $0x44] sm:$0xf] %vm287, 0
      %306 = vst.msk [vmem:[%s278 + $0x48] sm:$0xf] %vm287, 0
      %307 = vst.msk [vmem:[%s278 + $0x4c] sm:$0xf] %vm287, 0
      %308 = vst.msk [vmem:[%s278 + $0x50] sm:$0xf] %vm287, 0
      %309 = vst.msk [vmem:[%s278 + $0x54] sm:$0xf] %vm287, 0
      %310 = vst.msk [vmem:[%s278 + $0x58] sm:$0xf] %vm287, 0
      %311 = vst.msk [vmem:[%s278 + $0x5c] sm:$0xf] %vm287, 0
      %312 = vst.msk [vmem:[%s278 + $0x60] sm:$0xf] %vm287, 0
      %313 = vst.msk [vmem:[%s278 + $0x64] sm:$0xf] %vm287, 0
      %314 = vst.msk [vmem:[%s278 + $0x68] sm:$0xf] %vm287, 0
      %315 = vst.msk [vmem:[%s278 + $0x6c] sm:$0xf] %vm287, 0
      %316 = vst.msk [vmem:[%s278 + $0x70] sm:$0xf] %vm287, 0
      %317 = vst.msk [vmem:[%s278 + $0x74] sm:$0xf] %vm287, 0
      %318 = vst.msk [vmem:[%s278 + $0x78] sm:$0xf] %vm287, 0
      %319 = vst.msk [vmem:[%s278 + $0x7c] sm:$0xf] %vm287, 0
      %320 = vst.msk [vmem:[%s278 + $0x80] sm:$0xf] %vm287, 0
      %321 = vst.msk [vmem:[%s278 + $0x84] sm:$0xf] %vm287, 0
      %v322 = vld [vmem:[%s273] sm:$0xf]
      %v323 = vld [vmem:[%s273 + $0x4] sm:$0xf]
      %v324 = vld [vmem:[%s273 + $0x8] sm:$0xf]
      %v325 = vld [vmem:[%s273 + $0xc] sm:$0xf]
      %v326 = vld [vmem:[%s273 + $0x10] sm:$0xf]
      %v327 = vld [vmem:[%s273 + $0x14] sm:$0xf]
      %v328 = vld [vmem:[%s273 + $0x18] sm:$0xf]
      %v329 = vld [vmem:[%s273 + $0x1c] sm:$0xf]
      %v330 = vld [vmem:[%s273 + $0x20] sm:$0xf]
      %v331 = vld [vmem:[%s273 + $0x24] sm:$0xf]
      %v332 = vld [vmem:[%s273 + $0x28] sm:$0xf]
      %v333 = vld [vmem:[%s273 + $0x2c] sm:$0xf]
      %v334 = vld [vmem:[%s273 + $0x30] sm:$0xf]
      %v335 = vld [vmem:[%s273 + $0x34] sm:$0xf]
      %v336 = vld [vmem:[%s273 + $0x38] sm:$0xf]
      %v337 = vld [vmem:[%s273 + $0x3c] sm:$0xf]
      %v338 = vld [vmem:[%s273 + $0x40] sm:$0xf]
      %v339 = vld [vmem:[%s273 + $0x44] sm:$0xf]
      %v340 = vld [vmem:[%s273 + $0x48] sm:$0xf]
      %v341 = vld [vmem:[%s273 + $0x4c] sm:$0xf]
      %v342 = vld [vmem:[%s273 + $0x50] sm:$0xf]
      %v343 = vld [vmem:[%s273 + $0x54] sm:$0xf]
      %v344 = vld [vmem:[%s273 + $0x58] sm:$0xf]
      %v345 = vld [vmem:[%s273 + $0x5c] sm:$0xf]
      %v346 = vld [vmem:[%s273 + $0x60] sm:$0xf]
      %v347 = vld [vmem:[%s273 + $0x64] sm:$0xf]
      %v348 = vld [vmem:[%s273 + $0x68] sm:$0xf]
      %v349 = vld [vmem:[%s273 + $0x6c] sm:$0xf]
      %v350 = vld [vmem:[%s273 + $0x70] sm:$0xf]
      %v351 = vld [vmem:[%s273 + $0x74] sm:$0xf]
      %v352 = vld [vmem:[%s273 + $0x78] sm:$0xf]
      %v353 = vld [vmem:[%s273 + $0x7c] sm:$0xf]
      %v354 = vld [vmem:[%s273 + $0x80] sm:$0x1]
      %v355 = vunpack.c.l.bf16 %v322
      %v356 = vunpack.c.l.bf16 %v323
      %v357 = vunpack.c.l.bf16 %v324
      %v358 = vunpack.c.l.bf16 %v325
      %v359 = vunpack.c.l.bf16 %v326
      %v360 = vunpack.c.l.bf16 %v327
      %v361 = vunpack.c.l.bf16 %v328
      %v362 = vunpack.c.l.bf16 %v329
      %v363 = vunpack.c.l.bf16 %v330
      %v364 = vunpack.c.l.bf16 %v331
      %v365 = vunpack.c.l.bf16 %v332
      %v366 = vunpack.c.l.bf16 %v333
      %v367 = vunpack.c.l.bf16 %v334
      %v368 = vunpack.c.l.bf16 %v335
      %v369 = vunpack.c.l.bf16 %v336
      %v370 = vunpack.c.l.bf16 %v337
      %v371 = vunpack.c.l.bf16 %v338
      %v372 = vunpack.c.l.bf16 %v339
      %v373 = vunpack.c.l.bf16 %v340
      %v374 = vunpack.c.l.bf16 %v341
      %v375 = vunpack.c.l.bf16 %v342
      %v376 = vunpack.c.l.bf16 %v343
      %v377 = vunpack.c.l.bf16 %v344
      %v378 = vunpack.c.l.bf16 %v345
      %v379 = vunpack.c.l.bf16 %v346
      %v380 = vunpack.c.l.bf16 %v347
      %v381 = vunpack.c.l.bf16 %v348
      %v382 = vunpack.c.l.bf16 %v349
      %v383 = vunpack.c.l.bf16 %v350
      %v384 = vunpack.c.l.bf16 %v351
      %v385 = vunpack.c.l.bf16 %v352
      %v386 = vunpack.c.l.bf16 %v353
      %v387 = vunpack.c.l.bf16 %v354
      %v388 = vlaneseq
      %v389 = vshrl.u32 %v388, 7
      %v390 = vsub.s32 0, %v389
      %v391 = vrot.slane %v280, %v390
      %v392 = vmul.f32 %v355, %v391
      %v393 = vmul.f32 %v356, %v391
      %v394 = vmul.f32 %v357, %v391
      %v395 = vmul.f32 %v358, %v391
      %v396 = vmul.f32 %v359, %v391
      %v397 = vmul.f32 %v360, %v391
      %v398 = vmul.f32 %v361, %v391
      %v399 = vmul.f32 %v362, %v391
      %v400 = vmul.f32 %v363, %v391
      %v401 = vmul.f32 %v364, %v391
      %v402 = vmul.f32 %v365, %v391
      %v403 = vmul.f32 %v366, %v391
      %v404 = vmul.f32 %v367, %v391
      %v405 = vmul.f32 %v368, %v391
      %v406 = vmul.f32 %v369, %v391
      %v407 = vmul.f32 %v370, %v391
      %v408 = vmul.f32 %v371, %v391
      %v409 = vmul.f32 %v372, %v391
      %v410 = vmul.f32 %v373, %v391
      %v411 = vmul.f32 %v374, %v391
      %v412 = vmul.f32 %v375, %v391
      %v413 = vmul.f32 %v376, %v391
      %v414 = vmul.f32 %v377, %v391
      %v415 = vmul.f32 %v378, %v391
      %v416 = vmul.f32 %v379, %v391
      %v417 = vmul.f32 %v380, %v391
      %v418 = vmul.f32 %v381, %v391
      %v419 = vmul.f32 %v382, %v391
      %v420 = vlaneseq
      %v421 = vshrl.u32 %v420, 7
      %v422 = vsub.s32 1, %v421
      %v423 = vrot.slane %v280, %v422
      %v424 = vmul.f32 %v355, %v423
      %v425 = vmul.f32 %v356, %v423
      %v426 = vmul.f32 %v357, %v423
      %v427 = vmul.f32 %v358, %v423
      %v428 = vmul.f32 %v359, %v423
      %v429 = vmul.f32 %v360, %v423
      %v430 = vmul.f32 %v361, %v423
      %v431 = vmul.f32 %v362, %v423
      %v432 = vmul.f32 %v363, %v423
      %v433 = vmul.f32 %v364, %v423
      %v434 = vmul.f32 %v365, %v423
      %v435 = vmul.f32 %v366, %v423
      %v436 = vmul.f32 %v367, %v423
      %v437 = vmul.f32 %v368, %v423
      %v438 = vmul.f32 %v369, %v423
      %v439 = vmul.f32 %v370, %v423
      %v440 = vmul.f32 %v371, %v423
      %v441 = vmul.f32 %v372, %v423
      %v442 = vmul.f32 %v373, %v423
      %v443 = vmul.f32 %v374, %v423
      %v444 = vmul.f32 %v375, %v423
      %v445 = vmul.f32 %v376, %v423
      %v446 = vmul.f32 %v377, %v423
      %v447 = vmul.f32 %v378, %v423
      %v448 = vmul.f32 %v379, %v423
      %v449 = vmul.f32 %v380, %v423
      %v450 = vmul.f32 %v381, %v423
      %v451 = vmul.f32 %v382, %v423
      %v452 = vmul.f32 %v383, %v423
      %vm482 = vcmask 1046528
      %v483 = vrot.slane %v424, 1
      %v484 = vrot.slane %v425, 1
      %v485 = vsel %vm482, %v483, %v484
      %v486 = vrot.slane %v426, 1
      %v487 = vsel %vm482, %v484, %v486
      %v488 = vrot.slane %v427, 1
      %v489 = vsel %vm482, %v486, %v488
      %v490 = vrot.slane %v428, 1
      %v491 = vsel %vm482, %v488, %v490
      %v492 = vrot.slane %v429, 1
      %v493 = vsel %vm482, %v490, %v492
      %v494 = vrot.slane %v430, 1
      %v495 = vsel %vm482, %v492, %v494
      %v496 = vrot.slane %v431, 1
      %v497 = vsel %vm482, %v494, %v496
      %v498 = vrot.slane %v432, 1
      %v499 = vsel %vm482, %v496, %v498
      %v500 = vrot.slane %v433, 1
      %v501 = vsel %vm482, %v498, %v500
      %v502 = vrot.slane %v434, 1
      %v503 = vsel %vm482, %v500, %v502
      %v504 = vrot.slane %v435, 1
      %v505 = vsel %vm482, %v502, %v504
      %v506 = vrot.slane %v436, 1
      %v507 = vsel %vm482, %v504, %v506
      %v508 = vrot.slane %v437, 1
      %v509 = vsel %vm482, %v506, %v508
      %v510 = vrot.slane %v438, 1
      %v511 = vsel %vm482, %v508, %v510
      %v512 = vrot.slane %v439, 1
      %v513 = vsel %vm482, %v510, %v512
      %v514 = vrot.slane %v440, 1
      %v515 = vsel %vm482, %v512, %v514
      %v516 = vrot.slane %v441, 1
      %v517 = vsel %vm482, %v514, %v516
      %v518 = vrot.slane %v442, 1
      %v519 = vsel %vm482, %v516, %v518
      %v520 = vrot.slane %v443, 1
      %v521 = vsel %vm482, %v518, %v520
      %v522 = vrot.slane %v444, 1
      %v523 = vsel %vm482, %v520, %v522
      %v524 = vrot.slane %v445, 1
      %v525 = vsel %vm482, %v522, %v524
      %v526 = vrot.slane %v446, 1
      %v527 = vsel %vm482, %v524, %v526
      %v528 = vrot.slane %v447, 1
      %v529 = vsel %vm482, %v526, %v528
      %v530 = vrot.slane %v448, 1
      %v531 = vsel %vm482, %v528, %v530
      %v532 = vrot.slane %v449, 1
      %v533 = vsel %vm482, %v530, %v532
      %v534 = vrot.slane %v450, 1
      %v535 = vsel %vm482, %v532, %v534
      %v536 = vrot.slane %v451, 1
      %v537 = vsel %vm482, %v534, %v536
      %v538 = vrot.slane %v452, 1
      %v539 = vsel %vm482, %v536, %v538
      %v568 = vadd.f32 %v392, %v485
      %v569 = vadd.f32 %v393, %v487
      %v570 = vadd.f32 %v394, %v489
      %v571 = vadd.f32 %v395, %v491
      %v572 = vadd.f32 %v396, %v493
      %v573 = vadd.f32 %v397, %v495
      %v574 = vadd.f32 %v398, %v497
      %v575 = vadd.f32 %v399, %v499
      %v576 = vadd.f32 %v400, %v501
      %v577 = vadd.f32 %v401, %v503
      %v578 = vadd.f32 %v402, %v505
      %v579 = vadd.f32 %v403, %v507
      %v580 = vadd.f32 %v404, %v509
      %v581 = vadd.f32 %v405, %v511
      %v582 = vadd.f32 %v406, %v513
      %v583 = vadd.f32 %v407, %v515
      %v584 = vadd.f32 %v408, %v517
      %v585 = vadd.f32 %v409, %v519
      %v586 = vadd.f32 %v410, %v521
      %v587 = vadd.f32 %v411, %v523
      %v588 = vadd.f32 %v412, %v525
      %v589 = vadd.f32 %v413, %v527
      %v590 = vadd.f32 %v414, %v529
      %v591 = vadd.f32 %v415, %v531
      %v592 = vadd.f32 %v416, %v533
      %v593 = vadd.f32 %v417, %v535
      %v594 = vadd.f32 %v418, %v537
      %v595 = vadd.f32 %v419, %v539
      %v596 = vlaneseq
      %v597 = vshrl.u32 %v596, 7
      %v598 = vsub.s32 2, %v597
      %v599 = vrot.slane %v280, %v598
      %v600 = vmul.f32 %v355, %v599
      %v601 = vmul.f32 %v356, %v599
      %v602 = vmul.f32 %v357, %v599
      %v603 = vmul.f32 %v358, %v599
      %v604 = vmul.f32 %v359, %v599
      %v605 = vmul.f32 %v360, %v599
      %v606 = vmul.f32 %v361, %v599
      %v607 = vmul.f32 %v362, %v599
      %v608 = vmul.f32 %v363, %v599
      %v609 = vmul.f32 %v364, %v599
      %v610 = vmul.f32 %v365, %v599
      %v611 = vmul.f32 %v366, %v599
      %v612 = vmul.f32 %v367, %v599
      %v613 = vmul.f32 %v368, %v599
      %v614 = vmul.f32 %v369, %v599
      %v615 = vmul.f32 %v370, %v599
      %v616 = vmul.f32 %v371, %v599
      %v617 = vmul.f32 %v372, %v599
      %v618 = vmul.f32 %v373, %v599
      %v619 = vmul.f32 %v374, %v599
      %v620 = vmul.f32 %v375, %v599
      %v621 = vmul.f32 %v376, %v599
      %v622 = vmul.f32 %v377, %v599
      %v623 = vmul.f32 %v378, %v599
      %v624 = vmul.f32 %v379, %v599
      %v625 = vmul.f32 %v380, %v599
      %v626 = vmul.f32 %v381, %v599
      %v627 = vmul.f32 %v382, %v599
      %v628 = vmul.f32 %v383, %v599
      %vm658 = vcmask 1045504
      %v659 = vrot.slane %v600, 2
      %v660 = vrot.slane %v601, 2
      %v661 = vsel %vm658, %v659, %v660
      %v662 = vrot.slane %v602, 2
      %v663 = vsel %vm658, %v660, %v662
      %v664 = vrot.slane %v603, 2
      %v665 = vsel %vm658, %v662, %v664
      %v666 = vrot.slane %v604, 2
      %v667 = vsel %vm658, %v664, %v666
      %v668 = vrot.slane %v605, 2
      %v669 = vsel %vm658, %v666, %v668
      %v670 = vrot.slane %v606, 2
      %v671 = vsel %vm658, %v668, %v670
      %v672 = vrot.slane %v607, 2
      %v673 = vsel %vm658, %v670, %v672
      %v674 = vrot.slane %v608, 2
      %v675 = vsel %vm658, %v672, %v674
      %v676 = vrot.slane %v609, 2
      %v677 = vsel %vm658, %v674, %v676
      %v678 = vrot.slane %v610, 2
      %v679 = vsel %vm658, %v676, %v678
      %v680 = vrot.slane %v611, 2
      %v681 = vsel %vm658, %v678, %v680
      %v682 = vrot.slane %v612, 2
      %v683 = vsel %vm658, %v680, %v682
      %v684 = vrot.slane %v613, 2
      %v685 = vsel %vm658, %v682, %v684
      %v686 = vrot.slane %v614, 2
      %v687 = vsel %vm658, %v684, %v686
      %v688 = vrot.slane %v615, 2
      %v689 = vsel %vm658, %v686, %v688
      %v690 = vrot.slane %v616, 2
      %v691 = vsel %vm658, %v688, %v690
      %v692 = vrot.slane %v617, 2
      %v693 = vsel %vm658, %v690, %v692
      %v694 = vrot.slane %v618, 2
      %v695 = vsel %vm658, %v692, %v694
      %v696 = vrot.slane %v619, 2
      %v697 = vsel %vm658, %v694, %v696
      %v698 = vrot.slane %v620, 2
      %v699 = vsel %vm658, %v696, %v698
      %v700 = vrot.slane %v621, 2
      %v701 = vsel %vm658, %v698, %v700
      %v702 = vrot.slane %v622, 2
      %v703 = vsel %vm658, %v700, %v702
      %v704 = vrot.slane %v623, 2
      %v705 = vsel %vm658, %v702, %v704
      %v706 = vrot.slane %v624, 2
      %v707 = vsel %vm658, %v704, %v706
      %v708 = vrot.slane %v625, 2
      %v709 = vsel %vm658, %v706, %v708
      %v710 = vrot.slane %v626, 2
      %v711 = vsel %vm658, %v708, %v710
      %v712 = vrot.slane %v627, 2
      %v713 = vsel %vm658, %v710, %v712
      %v714 = vrot.slane %v628, 2
      %v715 = vsel %vm658, %v712, %v714
      %v744 = vadd.f32 %v568, %v661
      %v745 = vadd.f32 %v569, %v663
      %v746 = vadd.f32 %v570, %v665
      %v747 = vadd.f32 %v571, %v667
      %v748 = vadd.f32 %v572, %v669
      %v749 = vadd.f32 %v573, %v671
      %v750 = vadd.f32 %v574, %v673
      %v751 = vadd.f32 %v575, %v675
      %v752 = vadd.f32 %v576, %v677
      %v753 = vadd.f32 %v577, %v679
      %v754 = vadd.f32 %v578, %v681
      %v755 = vadd.f32 %v579, %v683
      %v756 = vadd.f32 %v580, %v685
      %v757 = vadd.f32 %v581, %v687
      %v758 = vadd.f32 %v582, %v689
      %v759 = vadd.f32 %v583, %v691
      %v760 = vadd.f32 %v584, %v693
      %v761 = vadd.f32 %v585, %v695
      %v762 = vadd.f32 %v586, %v697
      %v763 = vadd.f32 %v587, %v699
      %v764 = vadd.f32 %v588, %v701
      %v765 = vadd.f32 %v589, %v703
      %v766 = vadd.f32 %v590, %v705
      %v767 = vadd.f32 %v591, %v707
      %v768 = vadd.f32 %v592, %v709
      %v769 = vadd.f32 %v593, %v711
      %v770 = vadd.f32 %v594, %v713
      %v771 = vadd.f32 %v595, %v715
      %v772 = vlaneseq
      %v773 = vshrl.u32 %v772, 7
      %v774 = vsub.s32 3, %v773
      %v775 = vrot.slane %v280, %v774
      %v776 = vmul.f32 %v357, %v775
      %v777 = vmul.f32 %v358, %v775
      %v778 = vmul.f32 %v359, %v775
      %v779 = vmul.f32 %v360, %v775
      %v780 = vmul.f32 %v361, %v775
      %v781 = vmul.f32 %v362, %v775
      %v782 = vmul.f32 %v363, %v775
      %v783 = vmul.f32 %v364, %v775
      %v784 = vmul.f32 %v365, %v775
      %v785 = vmul.f32 %v366, %v775
      %v786 = vmul.f32 %v367, %v775
      %v787 = vmul.f32 %v368, %v775
      %v788 = vmul.f32 %v369, %v775
      %v789 = vmul.f32 %v370, %v775
      %v790 = vmul.f32 %v371, %v775
      %v791 = vmul.f32 %v372, %v775
      %v792 = vmul.f32 %v373, %v775
      %v793 = vmul.f32 %v374, %v775
      %v794 = vmul.f32 %v375, %v775
      %v795 = vmul.f32 %v376, %v775
      %v796 = vmul.f32 %v377, %v775
      %v797 = vmul.f32 %v378, %v775
      %v798 = vmul.f32 %v379, %v775
      %v799 = vmul.f32 %v380, %v775
      %v800 = vmul.f32 %v381, %v775
      %v801 = vmul.f32 %v382, %v775
      %v802 = vmul.f32 %v383, %v775
      %v803 = vmul.f32 %v384, %v775
      %v804 = vadd.f32 %v744, %v776
      %v805 = vadd.f32 %v745, %v777
      %v806 = vadd.f32 %v746, %v778
      %v807 = vadd.f32 %v747, %v779
      %v808 = vadd.f32 %v748, %v780
      %v809 = vadd.f32 %v749, %v781
      %v810 = vadd.f32 %v750, %v782
      %v811 = vadd.f32 %v751, %v783
      %v812 = vadd.f32 %v752, %v784
      %v813 = vadd.f32 %v753, %v785
      %v814 = vadd.f32 %v754, %v786
      %v815 = vadd.f32 %v755, %v787
      %v816 = vadd.f32 %v756, %v788
      %v817 = vadd.f32 %v757, %v789
      %v818 = vadd.f32 %v758, %v790
      %v819 = vadd.f32 %v759, %v791
      %v820 = vadd.f32 %v760, %v792
      %v821 = vadd.f32 %v761, %v793
      %v822 = vadd.f32 %v762, %v794
      %v823 = vadd.f32 %v763, %v795
      %v824 = vadd.f32 %v764, %v796
      %v825 = vadd.f32 %v765, %v797
      %v826 = vadd.f32 %v766, %v798
      %v827 = vadd.f32 %v767, %v799
      %v828 = vadd.f32 %v768, %v800
      %v829 = vadd.f32 %v769, %v801
      %v830 = vadd.f32 %v770, %v802
      %v831 = vadd.f32 %v771, %v803
      %v832 = vlaneseq
      %v833 = vshrl.u32 %v832, 7
      %v834 = vsub.s32 4, %v833
      %v835 = vrot.slane %v280, %v834
      %v836 = vmul.f32 %v357, %v835
      %v837 = vmul.f32 %v358, %v835
      %v838 = vmul.f32 %v359, %v835
      %v839 = vmul.f32 %v360, %v835
      %v840 = vmul.f32 %v361, %v835
      %v841 = vmul.f32 %v362, %v835
      %v842 = vmul.f32 %v363, %v835
      %v843 = vmul.f32 %v364, %v835
      %v844 = vmul.f32 %v365, %v835
      %v845 = vmul.f32 %v366, %v835
      %v846 = vmul.f32 %v367, %v835
      %v847 = vmul.f32 %v368, %v835
      %v848 = vmul.f32 %v369, %v835
      %v849 = vmul.f32 %v370, %v835
      %v850 = vmul.f32 %v371, %v835
      %v851 = vmul.f32 %v372, %v835
      %v852 = vmul.f32 %v373, %v835
      %v853 = vmul.f32 %v374, %v835
      %v854 = vmul.f32 %v375, %v835
      %v855 = vmul.f32 %v376, %v835
      %v856 = vmul.f32 %v377, %v835
      %v857 = vmul.f32 %v378, %v835
      %v858 = vmul.f32 %v379, %v835
      %v859 = vmul.f32 %v380, %v835
      %v860 = vmul.f32 %v381, %v835
      %v861 = vmul.f32 %v382, %v835
      %v862 = vmul.f32 %v383, %v835
      %v863 = vmul.f32 %v384, %v835
      %v864 = vmul.f32 %v385, %v835
      %v894 = vrot.slane %v836, 1
      %v895 = vrot.slane %v837, 1
      %v896 = vsel %vm482, %v894, %v895
      %v897 = vrot.slane %v838, 1
      %v898 = vsel %vm482, %v895, %v897
      %v899 = vrot.slane %v839, 1
      %v900 = vsel %vm482, %v897, %v899
      %v901 = vrot.slane %v840, 1
      %v902 = vsel %vm482, %v899, %v901
      %v903 = vrot.slane %v841, 1
      %v904 = vsel %vm482, %v901, %v903
      %v905 = vrot.slane %v842, 1
      %v906 = vsel %vm482, %v903, %v905
      %v907 = vrot.slane %v843, 1
      %v908 = vsel %vm482, %v905, %v907
      %v909 = vrot.slane %v844, 1
      %v910 = vsel %vm482, %v907, %v909
      %v911 = vrot.slane %v845, 1
      %v912 = vsel %vm482, %v909, %v911
      %v913 = vrot.slane %v846, 1
      %v914 = vsel %vm482, %v911, %v913
      %v915 = vrot.slane %v847, 1
      %v916 = vsel %vm482, %v913, %v915
      %v917 = vrot.slane %v848, 1
      %v918 = vsel %vm482, %v915, %v917
      %v919 = vrot.slane %v849, 1
      %v920 = vsel %vm482, %v917, %v919
      %v921 = vrot.slane %v850, 1
      %v922 = vsel %vm482, %v919, %v921
      %v923 = vrot.slane %v851, 1
      %v924 = vsel %vm482, %v921, %v923
      %v925 = vrot.slane %v852, 1
      %v926 = vsel %vm482, %v923, %v925
      %v927 = vrot.slane %v853, 1
      %v928 = vsel %vm482, %v925, %v927
      %v929 = vrot.slane %v854, 1
      %v930 = vsel %vm482, %v927, %v929
      %v931 = vrot.slane %v855, 1
      %v932 = vsel %vm482, %v929, %v931
      %v933 = vrot.slane %v856, 1
      %v934 = vsel %vm482, %v931, %v933
      %v935 = vrot.slane %v857, 1
      %v936 = vsel %vm482, %v933, %v935
      %v937 = vrot.slane %v858, 1
      %v938 = vsel %vm482, %v935, %v937
      %v939 = vrot.slane %v859, 1
      %v940 = vsel %vm482, %v937, %v939
      %v941 = vrot.slane %v860, 1
      %v942 = vsel %vm482, %v939, %v941
      %v943 = vrot.slane %v861, 1
      %v944 = vsel %vm482, %v941, %v943
      %v945 = vrot.slane %v862, 1
      %v946 = vsel %vm482, %v943, %v945
      %v947 = vrot.slane %v863, 1
      %v948 = vsel %vm482, %v945, %v947
      %v949 = vrot.slane %v864, 1
      %v950 = vsel %vm482, %v947, %v949
      %v979 = vadd.f32 %v804, %v896
      %v980 = vadd.f32 %v805, %v898
      %v981 = vadd.f32 %v806, %v900
      %v982 = vadd.f32 %v807, %v902
      %v983 = vadd.f32 %v808, %v904
      %v984 = vadd.f32 %v809, %v906
      %v985 = vadd.f32 %v810, %v908
      %v986 = vadd.f32 %v811, %v910
      %v987 = vadd.f32 %v812, %v912
      %v988 = vadd.f32 %v813, %v914
      %v989 = vadd.f32 %v814, %v916
      %v990 = vadd.f32 %v815, %v918
      %v991 = vadd.f32 %v816, %v920
      %v992 = vadd.f32 %v817, %v922
      %v993 = vadd.f32 %v818, %v924
      %v994 = vadd.f32 %v819, %v926
      %v995 = vadd.f32 %v820, %v928
      %v996 = vadd.f32 %v821, %v930
      %v997 = vadd.f32 %v822, %v932
      %v998 = vadd.f32 %v823, %v934
      %v999 = vadd.f32 %v824, %v936
      %v1000 = vadd.f32 %v825, %v938
      %v1001 = vadd.f32 %v826, %v940
      %v1002 = vadd.f32 %v827, %v942
      %v1003 = vadd.f32 %v828, %v944
      %v1004 = vadd.f32 %v829, %v946
      %v1005 = vadd.f32 %v830, %v948
      %v1006 = vadd.f32 %v831, %v950
      %v1007 = vlaneseq
      %v1008 = vshrl.u32 %v1007, 7
      %v1009 = vsub.s32 5, %v1008
      %v1010 = vrot.slane %v280, %v1009
      %v1011 = vmul.f32 %v357, %v1010
      %v1012 = vmul.f32 %v358, %v1010
      %v1013 = vmul.f32 %v359, %v1010
      %v1014 = vmul.f32 %v360, %v1010
      %v1015 = vmul.f32 %v361, %v1010
      %v1016 = vmul.f32 %v362, %v1010
      %v1017 = vmul.f32 %v363, %v1010
      %v1018 = vmul.f32 %v364, %v1010
      %v1019 = vmul.f32 %v365, %v1010
      %v1020 = vmul.f32 %v366, %v1010
      %v1021 = vmul.f32 %v367, %v1010
      %v1022 = vmul.f32 %v368, %v1010
      %v1023 = vmul.f32 %v369, %v1010
      %v1024 = vmul.f32 %v370, %v1010
      %v1025 = vmul.f32 %v371, %v1010
      %v1026 = vmul.f32 %v372, %v1010
      %v1027 = vmul.f32 %v373, %v1010
      %v1028 = vmul.f32 %v374, %v1010
      %v1029 = vmul.f32 %v375, %v1010
      %v1030 = vmul.f32 %v376, %v1010
      %v1031 = vmul.f32 %v377, %v1010
      %v1032 = vmul.f32 %v378, %v1010
      %v1033 = vmul.f32 %v379, %v1010
      %v1034 = vmul.f32 %v380, %v1010
      %v1035 = vmul.f32 %v381, %v1010
      %v1036 = vmul.f32 %v382, %v1010
      %v1037 = vmul.f32 %v383, %v1010
      %v1038 = vmul.f32 %v384, %v1010
      %v1039 = vmul.f32 %v385, %v1010
      %v1069 = vrot.slane %v1011, 2
      %v1070 = vrot.slane %v1012, 2
      %v1071 = vsel %vm658, %v1069, %v1070
      %v1072 = vrot.slane %v1013, 2
      %v1073 = vsel %vm658, %v1070, %v1072
      %v1074 = vrot.slane %v1014, 2
      %v1075 = vsel %vm658, %v1072, %v1074
      %v1076 = vrot.slane %v1015, 2
      %v1077 = vsel %vm658, %v1074, %v1076
      %v1078 = vrot.slane %v1016, 2
      %v1079 = vsel %vm658, %v1076, %v1078
      %v1080 = vrot.slane %v1017, 2
      %v1081 = vsel %vm658, %v1078, %v1080
      %v1082 = vrot.slane %v1018, 2
      %v1083 = vsel %vm658, %v1080, %v1082
      %v1084 = vrot.slane %v1019, 2
      %v1085 = vsel %vm658, %v1082, %v1084
      %v1086 = vrot.slane %v1020, 2
      %v1087 = vsel %vm658, %v1084, %v1086
      %v1088 = vrot.slane %v1021, 2
      %v1089 = vsel %vm658, %v1086, %v1088
      %v1090 = vrot.slane %v1022, 2
      %v1091 = vsel %vm658, %v1088, %v1090
      %v1092 = vrot.slane %v1023, 2
      %v1093 = vsel %vm658, %v1090, %v1092
      %v1094 = vrot.slane %v1024, 2
      %v1095 = vsel %vm658, %v1092, %v1094
      %v1096 = vrot.slane %v1025, 2
      %v1097 = vsel %vm658, %v1094, %v1096
      %v1098 = vrot.slane %v1026, 2
      %v1099 = vsel %vm658, %v1096, %v1098
      %v1100 = vrot.slane %v1027, 2
      %v1101 = vsel %vm658, %v1098, %v1100
      %v1102 = vrot.slane %v1028, 2
      %v1103 = vsel %vm658, %v1100, %v1102
      %v1104 = vrot.slane %v1029, 2
      %v1105 = vsel %vm658, %v1102, %v1104
      %v1106 = vrot.slane %v1030, 2
      %v1107 = vsel %vm658, %v1104, %v1106
      %v1108 = vrot.slane %v1031, 2
      %v1109 = vsel %vm658, %v1106, %v1108
      %v1110 = vrot.slane %v1032, 2
      %v1111 = vsel %vm658, %v1108, %v1110
      %v1112 = vrot.slane %v1033, 2
      %v1113 = vsel %vm658, %v1110, %v1112
      %v1114 = vrot.slane %v1034, 2
      %v1115 = vsel %vm658, %v1112, %v1114
      %v1116 = vrot.slane %v1035, 2
      %v1117 = vsel %vm658, %v1114, %v1116
      %v1118 = vrot.slane %v1036, 2
      %v1119 = vsel %vm658, %v1116, %v1118
      %v1120 = vrot.slane %v1037, 2
      %v1121 = vsel %vm658, %v1118, %v1120
      %v1122 = vrot.slane %v1038, 2
      %v1123 = vsel %vm658, %v1120, %v1122
      %v1124 = vrot.slane %v1039, 2
      %v1125 = vsel %vm658, %v1122, %v1124
      %v1154 = vadd.f32 %v979, %v1071
      %v1155 = vadd.f32 %v980, %v1073
      %v1156 = vadd.f32 %v981, %v1075
      %v1157 = vadd.f32 %v982, %v1077
      %v1158 = vadd.f32 %v983, %v1079
      %v1159 = vadd.f32 %v984, %v1081
      %v1160 = vadd.f32 %v985, %v1083
      %v1161 = vadd.f32 %v986, %v1085
      %v1162 = vadd.f32 %v987, %v1087
      %v1163 = vadd.f32 %v988, %v1089
      %v1164 = vadd.f32 %v989, %v1091
      %v1165 = vadd.f32 %v990, %v1093
      %v1166 = vadd.f32 %v991, %v1095
      %v1167 = vadd.f32 %v992, %v1097
      %v1168 = vadd.f32 %v993, %v1099
      %v1169 = vadd.f32 %v994, %v1101
      %v1170 = vadd.f32 %v995, %v1103
      %v1171 = vadd.f32 %v996, %v1105
      %v1172 = vadd.f32 %v997, %v1107
      %v1173 = vadd.f32 %v998, %v1109
      %v1174 = vadd.f32 %v999, %v1111
      %v1175 = vadd.f32 %v1000, %v1113
      %v1176 = vadd.f32 %v1001, %v1115
      %v1177 = vadd.f32 %v1002, %v1117
      %v1178 = vadd.f32 %v1003, %v1119
      %v1179 = vadd.f32 %v1004, %v1121
      %v1180 = vadd.f32 %v1005, %v1123
      %v1181 = vadd.f32 %v1006, %v1125
      %v1182 = vlaneseq
      %v1183 = vshrl.u32 %v1182, 7
      %v1184 = vsub.s32 6, %v1183
      %v1185 = vrot.slane %v280, %v1184
      %v1186 = vmul.f32 %v359, %v1185
      %v1187 = vmul.f32 %v360, %v1185
      %v1188 = vmul.f32 %v361, %v1185
      %v1189 = vmul.f32 %v362, %v1185
      %v1190 = vmul.f32 %v363, %v1185
      %v1191 = vmul.f32 %v364, %v1185
      %v1192 = vmul.f32 %v365, %v1185
      %v1193 = vmul.f32 %v366, %v1185
      %v1194 = vmul.f32 %v367, %v1185
      %v1195 = vmul.f32 %v368, %v1185
      %v1196 = vmul.f32 %v369, %v1185
      %v1197 = vmul.f32 %v370, %v1185
      %v1198 = vmul.f32 %v371, %v1185
      %v1199 = vmul.f32 %v372, %v1185
      %v1200 = vmul.f32 %v373, %v1185
      %v1201 = vmul.f32 %v374, %v1185
      %v1202 = vmul.f32 %v375, %v1185
      %v1203 = vmul.f32 %v376, %v1185
      %v1204 = vmul.f32 %v377, %v1185
      %v1205 = vmul.f32 %v378, %v1185
      %v1206 = vmul.f32 %v379, %v1185
      %v1207 = vmul.f32 %v380, %v1185
      %v1208 = vmul.f32 %v381, %v1185
      %v1209 = vmul.f32 %v382, %v1185
      %v1210 = vmul.f32 %v383, %v1185
      %v1211 = vmul.f32 %v384, %v1185
      %v1212 = vmul.f32 %v385, %v1185
      %v1213 = vmul.f32 %v386, %v1185
      %v1214 = vadd.f32 %v1154, %v1186
      %v1215 = vadd.f32 %v1155, %v1187
      %v1216 = vadd.f32 %v1156, %v1188
      %v1217 = vadd.f32 %v1157, %v1189
      %v1218 = vadd.f32 %v1158, %v1190
      %v1219 = vadd.f32 %v1159, %v1191
      %v1220 = vadd.f32 %v1160, %v1192
      %v1221 = vadd.f32 %v1161, %v1193
      %v1222 = vadd.f32 %v1162, %v1194
      %v1223 = vadd.f32 %v1163, %v1195
      %v1224 = vadd.f32 %v1164, %v1196
      %v1225 = vadd.f32 %v1165, %v1197
      %v1226 = vadd.f32 %v1166, %v1198
      %v1227 = vadd.f32 %v1167, %v1199
      %v1228 = vadd.f32 %v1168, %v1200
      %v1229 = vadd.f32 %v1169, %v1201
      %v1230 = vadd.f32 %v1170, %v1202
      %v1231 = vadd.f32 %v1171, %v1203
      %v1232 = vadd.f32 %v1172, %v1204
      %v1233 = vadd.f32 %v1173, %v1205
      %v1234 = vadd.f32 %v1174, %v1206
      %v1235 = vadd.f32 %v1175, %v1207
      %v1236 = vadd.f32 %v1176, %v1208
      %v1237 = vadd.f32 %v1177, %v1209
      %v1238 = vadd.f32 %v1178, %v1210
      %v1239 = vadd.f32 %v1179, %v1211
      %v1240 = vadd.f32 %v1180, %v1212
      %v1241 = vadd.f32 %v1181, %v1213
      %v1242 = vlaneseq
      %v1243 = vshrl.u32 %v1242, 7
      %v1244 = vsub.s32 7, %v1243
      %v1245 = vrot.slane %v280, %v1244
      %v1246 = vmul.f32 %v359, %v1245
      %v1247 = vmul.f32 %v360, %v1245
      %v1248 = vmul.f32 %v361, %v1245
      %v1249 = vmul.f32 %v362, %v1245
      %v1250 = vmul.f32 %v363, %v1245
      %v1251 = vmul.f32 %v364, %v1245
      %v1252 = vmul.f32 %v365, %v1245
      %v1253 = vmul.f32 %v366, %v1245
      %v1254 = vmul.f32 %v367, %v1245
      %v1255 = vmul.f32 %v368, %v1245
      %v1256 = vmul.f32 %v369, %v1245
      %v1257 = vmul.f32 %v370, %v1245
      %v1258 = vmul.f32 %v371, %v1245
      %v1259 = vmul.f32 %v372, %v1245
      %v1260 = vmul.f32 %v373, %v1245
      %v1261 = vmul.f32 %v374, %v1245
      %v1262 = vmul.f32 %v375, %v1245
      %v1263 = vmul.f32 %v376, %v1245
      %v1264 = vmul.f32 %v377, %v1245
      %v1265 = vmul.f32 %v378, %v1245
      %v1266 = vmul.f32 %v379, %v1245
      %v1267 = vmul.f32 %v380, %v1245
      %v1268 = vmul.f32 %v381, %v1245
      %v1269 = vmul.f32 %v382, %v1245
      %v1270 = vmul.f32 %v383, %v1245
      %v1271 = vmul.f32 %v384, %v1245
      %v1272 = vmul.f32 %v385, %v1245
      %v1273 = vmul.f32 %v386, %v1245
      %v1274 = vmul.f32 %v387, %v1245
      %v1304 = vrot.slane %v1246, 1
      %v1305 = vrot.slane %v1247, 1
      %v1306 = vsel %vm482, %v1304, %v1305
      %v1307 = vrot.slane %v1248, 1
      %v1308 = vsel %vm482, %v1305, %v1307
      %v1309 = vrot.slane %v1249, 1
      %v1310 = vsel %vm482, %v1307, %v1309
      %v1311 = vrot.slane %v1250, 1
      %v1312 = vsel %vm482, %v1309, %v1311
      %v1313 = vrot.slane %v1251, 1
      %v1314 = vsel %vm482, %v1311, %v1313
      %v1315 = vrot.slane %v1252, 1
      %v1316 = vsel %vm482, %v1313, %v1315
      %v1317 = vrot.slane %v1253, 1
      %v1318 = vsel %vm482, %v1315, %v1317
      %v1319 = vrot.slane %v1254, 1
      %v1320 = vsel %vm482, %v1317, %v1319
      %v1321 = vrot.slane %v1255, 1
      %v1322 = vsel %vm482, %v1319, %v1321
      %v1323 = vrot.slane %v1256, 1
      %v1324 = vsel %vm482, %v1321, %v1323
      %v1325 = vrot.slane %v1257, 1
      %v1326 = vsel %vm482, %v1323, %v1325
      %v1327 = vrot.slane %v1258, 1
      %v1328 = vsel %vm482, %v1325, %v1327
      %v1329 = vrot.slane %v1259, 1
      %v1330 = vsel %vm482, %v1327, %v1329
      %v1331 = vrot.slane %v1260, 1
      %v1332 = vsel %vm482, %v1329, %v1331
      %v1333 = vrot.slane %v1261, 1
      %v1334 = vsel %vm482, %v1331, %v1333
      %v1335 = vrot.slane %v1262, 1
      %v1336 = vsel %vm482, %v1333, %v1335
      %v1337 = vrot.slane %v1263, 1
      %v1338 = vsel %vm482, %v1335, %v1337
      %v1339 = vrot.slane %v1264, 1
      %v1340 = vsel %vm482, %v1337, %v1339
      %v1341 = vrot.slane %v1265, 1
      %v1342 = vsel %vm482, %v1339, %v1341
      %v1343 = vrot.slane %v1266, 1
      %v1344 = vsel %vm482, %v1341, %v1343
      %v1345 = vrot.slane %v1267, 1
      %v1346 = vsel %vm482, %v1343, %v1345
      %v1347 = vrot.slane %v1268, 1
      %v1348 = vsel %vm482, %v1345, %v1347
      %v1349 = vrot.slane %v1269, 1
      %v1350 = vsel %vm482, %v1347, %v1349
      %v1351 = vrot.slane %v1270, 1
      %v1352 = vsel %vm482, %v1349, %v1351
      %v1353 = vrot.slane %v1271, 1
      %v1354 = vsel %vm482, %v1351, %v1353
      %v1355 = vrot.slane %v1272, 1
      %v1356 = vsel %vm482, %v1353, %v1355
      %v1357 = vrot.slane %v1273, 1
      %v1358 = vsel %vm482, %v1355, %v1357
      %v1359 = vrot.slane %v1274, 1
      %v1360 = vsel %vm482, %v1357, %v1359
      %v1389 = vadd.f32 %v1214, %v1306
      %v1390 = vadd.f32 %v1215, %v1308
      %v1391 = vadd.f32 %v1216, %v1310
      %v1392 = vadd.f32 %v1217, %v1312
      %v1393 = vadd.f32 %v1218, %v1314
      %v1394 = vadd.f32 %v1219, %v1316
      %v1395 = vadd.f32 %v1220, %v1318
      %v1396 = vadd.f32 %v1221, %v1320
      %v1397 = vadd.f32 %v1222, %v1322
      %v1398 = vadd.f32 %v1223, %v1324
      %v1399 = vadd.f32 %v1224, %v1326
      %v1400 = vadd.f32 %v1225, %v1328
      %v1401 = vadd.f32 %v1226, %v1330
      %v1402 = vadd.f32 %v1227, %v1332
      %v1403 = vadd.f32 %v1228, %v1334
      %v1404 = vadd.f32 %v1229, %v1336
      %v1405 = vadd.f32 %v1230, %v1338
      %v1406 = vadd.f32 %v1231, %v1340
      %v1407 = vadd.f32 %v1232, %v1342
      %v1408 = vadd.f32 %v1233, %v1344
      %v1409 = vadd.f32 %v1234, %v1346
      %v1410 = vadd.f32 %v1235, %v1348
      %v1411 = vadd.f32 %v1236, %v1350
      %v1412 = vadd.f32 %v1237, %v1352
      %v1413 = vadd.f32 %v1238, %v1354
      %v1414 = vadd.f32 %v1239, %v1356
      %v1415 = vadd.f32 %v1240, %v1358
      %v1416 = vadd.f32 %v1241, %v1360
      %v1417 = vlaneseq
      %v1418 = vshrl.u32 %v1417, 7
      %v1419 = vsub.s32 0, %v1418
      %v1420 = vrot.slane %v281, %v1419
      %v1421 = vmul.f32 %v359, %v1420
      %v1422 = vmul.f32 %v360, %v1420
      %v1423 = vmul.f32 %v361, %v1420
      %v1424 = vmul.f32 %v362, %v1420
      %v1425 = vmul.f32 %v363, %v1420
      %v1426 = vmul.f32 %v364, %v1420
      %v1427 = vmul.f32 %v365, %v1420
      %v1428 = vmul.f32 %v366, %v1420
      %v1429 = vmul.f32 %v367, %v1420
      %v1430 = vmul.f32 %v368, %v1420
      %v1431 = vmul.f32 %v369, %v1420
      %v1432 = vmul.f32 %v370, %v1420
      %v1433 = vmul.f32 %v371, %v1420
      %v1434 = vmul.f32 %v372, %v1420
      %v1435 = vmul.f32 %v373, %v1420
      %v1436 = vmul.f32 %v374, %v1420
      %v1437 = vmul.f32 %v375, %v1420
      %v1438 = vmul.f32 %v376, %v1420
      %v1439 = vmul.f32 %v377, %v1420
      %v1440 = vmul.f32 %v378, %v1420
      %v1441 = vmul.f32 %v379, %v1420
      %v1442 = vmul.f32 %v380, %v1420
      %v1443 = vmul.f32 %v381, %v1420
      %v1444 = vmul.f32 %v382, %v1420
      %v1445 = vmul.f32 %v383, %v1420
      %v1446 = vmul.f32 %v384, %v1420
      %v1447 = vmul.f32 %v385, %v1420
      %v1448 = vmul.f32 %v386, %v1420
      %v1449 = vmul.f32 %v387, %v1420
      %v1479 = vrot.slane %v1421, 2
      %v1480 = vrot.slane %v1422, 2
      %v1481 = vsel %vm658, %v1479, %v1480
      %v1482 = vrot.slane %v1423, 2
      %v1483 = vsel %vm658, %v1480, %v1482
      %v1484 = vrot.slane %v1424, 2
      %v1485 = vsel %vm658, %v1482, %v1484
      %v1486 = vrot.slane %v1425, 2
      %v1487 = vsel %vm658, %v1484, %v1486
      %v1488 = vrot.slane %v1426, 2
      %v1489 = vsel %vm658, %v1486, %v1488
      %v1490 = vrot.slane %v1427, 2
      %v1491 = vsel %vm658, %v1488, %v1490
      %v1492 = vrot.slane %v1428, 2
      %v1493 = vsel %vm658, %v1490, %v1492
      %v1494 = vrot.slane %v1429, 2
      %v1495 = vsel %vm658, %v1492, %v1494
      %v1496 = vrot.slane %v1430, 2
      %v1497 = vsel %vm658, %v1494, %v1496
      %v1498 = vrot.slane %v1431, 2
      %v1499 = vsel %vm658, %v1496, %v1498
      %v1500 = vrot.slane %v1432, 2
      %v1501 = vsel %vm658, %v1498, %v1500
      %v1502 = vrot.slane %v1433, 2
      %v1503 = vsel %vm658, %v1500, %v1502
      %v1504 = vrot.slane %v1434, 2
      %v1505 = vsel %vm658, %v1502, %v1504
      %v1506 = vrot.slane %v1435, 2
      %v1507 = vsel %vm658, %v1504, %v1506
      %v1508 = vrot.slane %v1436, 2
      %v1509 = vsel %vm658, %v1506, %v1508
      %v1510 = vrot.slane %v1437, 2
      %v1511 = vsel %vm658, %v1508, %v1510
      %v1512 = vrot.slane %v1438, 2
      %v1513 = vsel %vm658, %v1510, %v1512
      %v1514 = vrot.slane %v1439, 2
      %v1515 = vsel %vm658, %v1512, %v1514
      %v1516 = vrot.slane %v1440, 2
      %v1517 = vsel %vm658, %v1514, %v1516
      %v1518 = vrot.slane %v1441, 2
      %v1519 = vsel %vm658, %v1516, %v1518
      %v1520 = vrot.slane %v1442, 2
      %v1521 = vsel %vm658, %v1518, %v1520
      %v1522 = vrot.slane %v1443, 2
      %v1523 = vsel %vm658, %v1520, %v1522
      %v1524 = vrot.slane %v1444, 2
      %v1525 = vsel %vm658, %v1522, %v1524
      %v1526 = vrot.slane %v1445, 2
      %v1527 = vsel %vm658, %v1524, %v1526
      %v1528 = vrot.slane %v1446, 2
      %v1529 = vsel %vm658, %v1526, %v1528
      %v1530 = vrot.slane %v1447, 2
      %v1531 = vsel %vm658, %v1528, %v1530
      %v1532 = vrot.slane %v1448, 2
      %v1533 = vsel %vm658, %v1530, %v1532
      %v1534 = vrot.slane %v1449, 2
      %v1535 = vsel %vm658, %v1532, %v1534
      %v1564 = vadd.f32 %v1389, %v1481
      %v1565 = vadd.f32 %v1390, %v1483
      %v1566 = vadd.f32 %v1391, %v1485
      %v1567 = vadd.f32 %v1392, %v1487
      %v1568 = vadd.f32 %v1393, %v1489
      %v1569 = vadd.f32 %v1394, %v1491
      %v1570 = vadd.f32 %v1395, %v1493
      %v1571 = vadd.f32 %v1396, %v1495
      %v1572 = vadd.f32 %v1397, %v1497
      %v1573 = vadd.f32 %v1398, %v1499
      %v1574 = vadd.f32 %v1399, %v1501
      %v1575 = vadd.f32 %v1400, %v1503
      %v1576 = vadd.f32 %v1401, %v1505
      %v1577 = vadd.f32 %v1402, %v1507
      %v1578 = vadd.f32 %v1403, %v1509
      %v1579 = vadd.f32 %v1404, %v1511
      %v1580 = vadd.f32 %v1405, %v1513
      %v1581 = vadd.f32 %v1406, %v1515
      %v1582 = vadd.f32 %v1407, %v1517
      %v1583 = vadd.f32 %v1408, %v1519
      %v1584 = vadd.f32 %v1409, %v1521
      %v1585 = vadd.f32 %v1410, %v1523
      %v1586 = vadd.f32 %v1411, %v1525
      %v1587 = vadd.f32 %v1412, %v1527
      %v1588 = vadd.f32 %v1413, %v1529
      %v1589 = vadd.f32 %v1414, %v1531
      %v1590 = vadd.f32 %v1415, %v1533
      %v1591 = vadd.f32 %v1416, %v1535
      %v1593 = vlaneseq
      %v1594 = vshrl.u32 %v1593, 7
      %v1595 = vsub.s32 0, %v1594
      %v1596 = vrot.slane %v282, %v1595
      %v1598 = vmul.f32 %v1564, %v1596
      %v1599 = vmul.f32 %v1565, %v1596
      %v1600 = vmul.f32 %v1566, %v1596
      %v1601 = vmul.f32 %v1567, %v1596
      %v1602 = vmul.f32 %v1568, %v1596
      %v1603 = vmul.f32 %v1569, %v1596
      %v1604 = vmul.f32 %v1570, %v1596
      %v1605 = vmul.f32 %v1571, %v1596
      %v1606 = vmul.f32 %v1572, %v1596
      %v1607 = vmul.f32 %v1573, %v1596
      %v1608 = vmul.f32 %v1574, %v1596
      %v1609 = vmul.f32 %v1575, %v1596
      %v1610 = vmul.f32 %v1576, %v1596
      %v1611 = vmul.f32 %v1577, %v1596
      %v1612 = vmul.f32 %v1578, %v1596
      %v1613 = vmul.f32 %v1579, %v1596
      %v1614 = vmul.f32 %v1580, %v1596
      %v1615 = vmul.f32 %v1581, %v1596
      %v1616 = vmul.f32 %v1582, %v1596
      %v1617 = vmul.f32 %v1583, %v1596
      %v1618 = vmul.f32 %v1584, %v1596
      %v1619 = vmul.f32 %v1585, %v1596
      %v1620 = vmul.f32 %v1586, %v1596
      %v1621 = vmul.f32 %v1587, %v1596
      %v1622 = vmul.f32 %v1588, %v1596
      %v1623 = vmul.f32 %v1589, %v1596
      %v1624 = vmul.f32 %v1590, %v1596
      %v1625 = vmul.f32 %v1591, %v1596
      %v1627 = vlaneseq
      %v1628 = vshrl.u32 %v1627, 7
      %v1629 = vsub.s32 0, %v1628
      %v1630 = vrot.slane %v283, %v1629
      %v1632 = vadd.f32 %v1598, %v1630
      %v1633 = vadd.f32 %v1599, %v1630
      %v1634 = vadd.f32 %v1600, %v1630
      %v1635 = vadd.f32 %v1601, %v1630
      %v1636 = vadd.f32 %v1602, %v1630
      %v1637 = vadd.f32 %v1603, %v1630
      %v1638 = vadd.f32 %v1604, %v1630
      %v1639 = vadd.f32 %v1605, %v1630
      %v1640 = vadd.f32 %v1606, %v1630
      %v1641 = vadd.f32 %v1607, %v1630
      %v1642 = vadd.f32 %v1608, %v1630
      %v1643 = vadd.f32 %v1609, %v1630
      %v1644 = vadd.f32 %v1610, %v1630
      %v1645 = vadd.f32 %v1611, %v1630
      %v1646 = vadd.f32 %v1612, %v1630
      %v1647 = vadd.f32 %v1613, %v1630
      %v1648 = vadd.f32 %v1614, %v1630
      %v1649 = vadd.f32 %v1615, %v1630
      %v1650 = vadd.f32 %v1616, %v1630
      %v1651 = vadd.f32 %v1617, %v1630
      %v1652 = vadd.f32 %v1618, %v1630
      %v1653 = vadd.f32 %v1619, %v1630
      %v1654 = vadd.f32 %v1620, %v1630
      %v1655 = vadd.f32 %v1621, %v1630
      %v1656 = vadd.f32 %v1622, %v1630
      %v1657 = vadd.f32 %v1623, %v1630
      %v1658 = vadd.f32 %v1624, %v1630
      %v1659 = vadd.f32 %v1625, %v1630
      %v1660 = vmax.f32 %v1632, 0.0
      %v1661 = vmax.f32 %v1633, 0.0
      %v1662 = vmax.f32 %v1634, 0.0
      %v1663 = vmax.f32 %v1635, 0.0
      %v1664 = vmax.f32 %v1636, 0.0
      %v1665 = vmax.f32 %v1637, 0.0
      %v1666 = vmax.f32 %v1638, 0.0
      %v1667 = vmax.f32 %v1639, 0.0
      %v1668 = vmax.f32 %v1640, 0.0
      %v1669 = vmax.f32 %v1641, 0.0
      %v1670 = vmax.f32 %v1642, 0.0
      %v1671 = vmax.f32 %v1643, 0.0
      %v1672 = vmax.f32 %v1644, 0.0
      %v1673 = vmax.f32 %v1645, 0.0
      %v1674 = vmax.f32 %v1646, 0.0
      %v1675 = vmax.f32 %v1647, 0.0
      %v1676 = vmax.f32 %v1648, 0.0
      %v1677 = vmax.f32 %v1649, 0.0
      %v1678 = vmax.f32 %v1650, 0.0
      %v1679 = vmax.f32 %v1651, 0.0
      %v1680 = vmax.f32 %v1652, 0.0
      %v1681 = vmax.f32 %v1653, 0.0
      %v1682 = vmax.f32 %v1654, 0.0
      %v1683 = vmax.f32 %v1655, 0.0
      %v1684 = vmax.f32 %v1656, 0.0
      %v1685 = vmax.f32 %v1657, 0.0
      %v1686 = vmax.f32 %v1658, 0.0
      %v1687 = vmax.f32 %v1659, 0.0
      %v1688 = vpack.c.bf16 %v1661, %v1660
      %v1689 = vpack.c.bf16 %v1663, %v1662
      %v1690 = vpack.c.bf16 %v1665, %v1664
      %v1691 = vpack.c.bf16 %v1667, %v1666
      %v1692 = vpack.c.bf16 %v1669, %v1668
      %v1693 = vpack.c.bf16 %v1671, %v1670
      %v1694 = vpack.c.bf16 %v1673, %v1672
      %v1695 = vpack.c.bf16 %v1675, %v1674
      %v1696 = vpack.c.bf16 %v1677, %v1676
      %v1697 = vpack.c.bf16 %v1679, %v1678
      %v1698 = vpack.c.bf16 %v1681, %v1680
      %v1699 = vpack.c.bf16 %v1683, %v1682
      %v1700 = vpack.c.bf16 %v1685, %v1684
      %v1701 = vpack.c.bf16 %v1687, %v1686
      %vm1702 = vcmask 64512
      %v1704 = vsel %vm1702, %v1688, 0
      %v1707 = vsel %vm1702, %v1689, 0
      %v1710 = vsel %vm1702, %v1690, 0
      %v1713 = vsel %vm1702, %v1691, 0
      %v1716 = vsel %vm1702, %v1692, 0
      %v1719 = vsel %vm1702, %v1693, 0
      %v1722 = vsel %vm1702, %v1694, 0
      %v1725 = vsel %vm1702, %v1695, 0
      %v1728 = vsel %vm1702, %v1696, 0
      %v1731 = vsel %vm1702, %v1697, 0
      %v1734 = vsel %vm1702, %v1698, 0
      %v1737 = vsel %vm1702, %v1699, 0
      %v1740 = vsel %vm1702, %v1700, 0
      %v1743 = vsel %vm1702, %v1701, 0
      %vm1745 = vcmask 1043456
      %v1747 = vsel %vm1745, %v284, 0
      %1749 = vmatprep.subr.bf16.mxu0 0
      %1750 = vmatpush1.bf16.msra.mxu0 0
      %1751 = vmatprep.subr.bf16.mxu0 0
      %1752 = vmatpush1.bf16.msra.mxu0 0
      %1753 = vmatprep.subr.bf16.mxu0 0
      %1754 = vmatpush1.bf16.msra.mxu0 0
      %1755 = vmatprep.subr.bf16.mxu0 0
      %1756 = vmatpush1.bf16.msra.mxu0 0
      %1757 = vmatprep.subr.bf16.mxu0 0
      %1758 = vmatpush1.bf16.msra.mxu0 0
      %1759 = vmatprep.subr.bf16.mxu0 0
      %1760 = vmatpush1.bf16.msra.mxu0 0
      %1761 = vmatprep.subr.bf16.mxu0 0
      %1762 = vmatpush1.bf16.msra.mxu0 0
      %1763 = vmatprep.subr.bf16.mxu0 0
      %1764 = vmatpush1.bf16.msra.mxu0 %v1747
      %1765 = vmatprep.subr.bf16.mxu0 0
      %1766 = vmatpush2.bf16.msra.mxu0 0
      %1767 = vmatprep.subr.bf16.mxu0 0
      %1768 = vmatpush2.bf16.msra.mxu0 0
      %1769 = vmatprep.subr.bf16.mxu0 0
      %1770 = vmatpush2.bf16.msra.mxu0 0
      %1771 = vmatprep.subr.bf16.mxu0 0
      %1772 = vmatpush2.bf16.msra.mxu0 0
      %1773 = vmatprep.subr.bf16.mxu0 0
      %1774 = vmatpush2.bf16.msra.mxu0 0
      %1775 = vmatprep.subr.bf16.mxu0 0
      %1776 = vmatpush2.bf16.msra.mxu0 0
      %1777 = vmatprep.subr.bf16.mxu0 0
      %1778 = vmatpush2.bf16.msra.mxu0 0
      %1779 = vmatprep.subr.bf16.mxu0 0
      %1780 = vmatpush2.bf16.msra.mxu0 0
      %1781 = vmatprep.mubr.bf16.mxu0 0
      %1782 = vmatmul.mubr.bf16.gmra.mxu0 %v1704
      %v1783 = vpop.f32.mrf.mxu0
      %v1784 = vadd.f32 0.0, %v1783
      %v1785 = vpop.f32.mrf.mxu0
      %v1786 = vpop.f32.mrf.mxu0
      %v1787 = vadd.f32 0.0, %v1786
      %v1788 = vpop.f32.mrf.mxu0
      %1789 = vmatprep.mubr.bf16.mxu0 0
      %1790 = vmatmul.mubr.bf16.gmra.mxu0 %v1707
      %v1791 = vpop.f32.mrf.mxu0
      %v1792 = vadd.f32 0.0, %v1791
      %v1793 = vpop.f32.mrf.mxu0
      %v1794 = vpop.f32.mrf.mxu0
      %v1795 = vadd.f32 0.0, %v1794
      %v1796 = vpop.f32.mrf.mxu0
      %1797 = vmatprep.mubr.bf16.mxu0 0
      %1798 = vmatmul.mubr.bf16.gmra.mxu0 %v1710
      %v1799 = vpop.f32.mrf.mxu0
      %v1800 = vadd.f32 0.0, %v1799
      %v1801 = vpop.f32.mrf.mxu0
      %v1802 = vpop.f32.mrf.mxu0
      %v1803 = vadd.f32 0.0, %v1802
      %v1804 = vpop.f32.mrf.mxu0
      %1805 = vmatprep.mubr.bf16.mxu0 0
      %1806 = vmatmul.mubr.bf16.gmra.mxu0 %v1713
      %v1807 = vpop.f32.mrf.mxu0
      %v1808 = vadd.f32 0.0, %v1807
      %v1809 = vpop.f32.mrf.mxu0
      %v1810 = vpop.f32.mrf.mxu0
      %v1811 = vadd.f32 0.0, %v1810
      %v1812 = vpop.f32.mrf.mxu0
      %1813 = vmatprep.mubr.bf16.mxu0 0
      %1814 = vmatmul.mubr.bf16.gmra.mxu0 %v1716
      %v1815 = vpop.f32.mrf.mxu0
      %v1816 = vadd.f32 0.0, %v1815
      %v1817 = vpop.f32.mrf.mxu0
      %v1818 = vpop.f32.mrf.mxu0
      %v1819 = vadd.f32 0.0, %v1818
      %v1820 = vpop.f32.mrf.mxu0
      %1821 = vmatprep.mubr.bf16.mxu0 0
      %1822 = vmatmul.mubr.bf16.gmra.mxu0 %v1719
      %v1823 = vpop.f32.mrf.mxu0
      %v1824 = vadd.f32 0.0, %v1823
      %v1825 = vpop.f32.mrf.mxu0
      %v1826 = vpop.f32.mrf.mxu0
      %v1827 = vadd.f32 0.0, %v1826
      %v1828 = vpop.f32.mrf.mxu0
      %1829 = vmatprep.mubr.bf16.mxu0 0
      %1830 = vmatmul.mubr.bf16.gmra.mxu0 %v1722
      %v1831 = vpop.f32.mrf.mxu0
      %v1832 = vadd.f32 0.0, %v1831
      %v1833 = vpop.f32.mrf.mxu0
      %v1834 = vpop.f32.mrf.mxu0
      %v1835 = vadd.f32 0.0, %v1834
      %v1836 = vpop.f32.mrf.mxu0
      %1837 = vmatprep.mubr.bf16.mxu0 0
      %1838 = vmatmul.mubr.bf16.gmra.mxu0 %v1725
      %v1839 = vpop.f32.mrf.mxu0
      %v1840 = vadd.f32 0.0, %v1839
      %v1841 = vpop.f32.mrf.mxu0
      %v1842 = vpop.f32.mrf.mxu0
      %v1843 = vadd.f32 0.0, %v1842
      %v1844 = vpop.f32.mrf.mxu0
      %1845 = vmatprep.mubr.bf16.mxu0 0
      %1846 = vmatmul.mubr.bf16.gmra.mxu0 %v1728
      %v1847 = vpop.f32.mrf.mxu0
      %v1848 = vadd.f32 0.0, %v1847
      %v1849 = vpop.f32.mrf.mxu0
      %v1850 = vpop.f32.mrf.mxu0
      %v1851 = vadd.f32 0.0, %v1850
      %v1852 = vpop.f32.mrf.mxu0
      %1853 = vmatprep.mubr.bf16.mxu0 0
      %1854 = vmatmul.mubr.bf16.gmra.mxu0 %v1731
      %v1855 = vpop.f32.mrf.mxu0
      %v1856 = vadd.f32 0.0, %v1855
      %v1857 = vpop.f32.mrf.mxu0
      %v1858 = vpop.f32.mrf.mxu0
      %v1859 = vadd.f32 0.0, %v1858
      %v1860 = vpop.f32.mrf.mxu0
      %1861 = vmatprep.mubr.bf16.mxu0 0
      %1862 = vmatmul.mubr.bf16.gmra.mxu0 %v1734
      %v1863 = vpop.f32.mrf.mxu0
      %v1864 = vadd.f32 0.0, %v1863
      %v1865 = vpop.f32.mrf.mxu0
      %v1866 = vpop.f32.mrf.mxu0
      %v1867 = vadd.f32 0.0, %v1866
      %v1868 = vpop.f32.mrf.mxu0
      %1869 = vmatprep.mubr.bf16.mxu0 0
      %1870 = vmatmul.mubr.bf16.gmra.mxu0 %v1737
      %v1871 = vpop.f32.mrf.mxu0
      %v1872 = vadd.f32 0.0, %v1871
      %v1873 = vpop.f32.mrf.mxu0
      %v1874 = vpop.f32.mrf.mxu0
      %v1875 = vadd.f32 0.0, %v1874
      %v1876 = vpop.f32.mrf.mxu0
      %1877 = vmatprep.mubr.bf16.mxu0 0
      %1878 = vmatmul.mubr.bf16.gmra.mxu0 %v1740
      %v1879 = vpop.f32.mrf.mxu0
      %v1880 = vadd.f32 0.0, %v1879
      %v1881 = vpop.f32.mrf.mxu0
      %v1882 = vpop.f32.mrf.mxu0
      %v1883 = vadd.f32 0.0, %v1882
      %v1884 = vpop.f32.mrf.mxu0
      %1885 = vmatprep.mubr.bf16.mxu0 0
      %1886 = vmatmul.mubr.bf16.gmra.mxu0 %v1743
      %v1887 = vpop.f32.mrf.mxu0
      %v1888 = vadd.f32 0.0, %v1887
      %v1889 = vpop.f32.mrf.mxu0
      %v1890 = vpop.f32.mrf.mxu0
      %v1891 = vadd.f32 0.0, %v1890
      %v1892 = vpop.f32.mrf.mxu0
      %1893 = vdwg.mxu0
      %v1895 = vlaneseq
      %v1896 = vshrl.u32 %v1895, 7
      %v1897 = vsub.s32 0, %v1896
      %v1898 = vrot.slane %v285, %v1897
      %v1900 = vmul.f32 %v1784, %v1898
      %v1901 = vmul.f32 %v1787, %v1898
      %v1902 = vmul.f32 %v1792, %v1898
      %v1903 = vmul.f32 %v1795, %v1898
      %v1904 = vmul.f32 %v1800, %v1898
      %v1905 = vmul.f32 %v1803, %v1898
      %v1906 = vmul.f32 %v1808, %v1898
      %v1907 = vmul.f32 %v1811, %v1898
      %v1908 = vmul.f32 %v1816, %v1898
      %v1909 = vmul.f32 %v1819, %v1898
      %v1910 = vmul.f32 %v1824, %v1898
      %v1911 = vmul.f32 %v1827, %v1898
      %v1912 = vmul.f32 %v1832, %v1898
      %v1913 = vmul.f32 %v1835, %v1898
      %v1914 = vmul.f32 %v1840, %v1898
      %v1915 = vmul.f32 %v1843, %v1898
      %v1916 = vmul.f32 %v1848, %v1898
      %v1917 = vmul.f32 %v1851, %v1898
      %v1918 = vmul.f32 %v1856, %v1898
      %v1919 = vmul.f32 %v1859, %v1898
      %v1920 = vmul.f32 %v1864, %v1898
      %v1921 = vmul.f32 %v1867, %v1898
      %v1922 = vmul.f32 %v1872, %v1898
      %v1923 = vmul.f32 %v1875, %v1898
      %v1924 = vmul.f32 %v1880, %v1898
      %v1925 = vmul.f32 %v1883, %v1898
      %v1926 = vmul.f32 %v1888, %v1898
      %v1927 = vmul.f32 %v1891, %v1898
      %v1929 = vlaneseq
      %v1930 = vshrl.u32 %v1929, 7
      %v1931 = vsub.s32 0, %v1930
      %v1932 = vrot.slane %v286, %v1931
      %v1934 = vadd.f32 %v1900, %v1932
      %v1935 = vadd.f32 %v1901, %v1932
      %v1936 = vadd.f32 %v1902, %v1932
      %v1937 = vadd.f32 %v1903, %v1932
      %v1938 = vadd.f32 %v1904, %v1932
      %v1939 = vadd.f32 %v1905, %v1932
      %v1940 = vadd.f32 %v1906, %v1932
      %v1941 = vadd.f32 %v1907, %v1932
      %v1942 = vadd.f32 %v1908, %v1932
      %v1943 = vadd.f32 %v1909, %v1932
      %v1944 = vadd.f32 %v1910, %v1932
      %v1945 = vadd.f32 %v1911, %v1932
      %v1946 = vadd.f32 %v1912, %v1932
      %v1947 = vadd.f32 %v1913, %v1932
      %v1948 = vadd.f32 %v1914, %v1932
      %v1949 = vadd.f32 %v1915, %v1932
      %v1950 = vadd.f32 %v1916, %v1932
      %v1951 = vadd.f32 %v1917, %v1932
      %v1952 = vadd.f32 %v1918, %v1932
      %v1953 = vadd.f32 %v1919, %v1932
      %v1954 = vadd.f32 %v1920, %v1932
      %v1955 = vadd.f32 %v1921, %v1932
      %v1956 = vadd.f32 %v1922, %v1932
      %v1957 = vadd.f32 %v1923, %v1932
      %v1958 = vadd.f32 %v1924, %v1932
      %v1959 = vadd.f32 %v1925, %v1932
      %v1960 = vadd.f32 %v1926, %v1932
      %v1961 = vadd.f32 %v1927, %v1932
      %v1962 = vmax.f32 %v1934, 0.0
      %v1963 = vmax.f32 %v1935, 0.0
      %v1964 = vmax.f32 %v1936, 0.0
      %v1965 = vmax.f32 %v1937, 0.0
      %v1966 = vmax.f32 %v1938, 0.0
      %v1967 = vmax.f32 %v1939, 0.0
      %v1968 = vmax.f32 %v1940, 0.0
      %v1969 = vmax.f32 %v1941, 0.0
      %v1970 = vmax.f32 %v1942, 0.0
      %v1971 = vmax.f32 %v1943, 0.0
      %v1972 = vmax.f32 %v1944, 0.0
      %v1973 = vmax.f32 %v1945, 0.0
      %v1974 = vmax.f32 %v1946, 0.0
      %v1975 = vmax.f32 %v1947, 0.0
      %v1976 = vmax.f32 %v1948, 0.0
      %v1977 = vmax.f32 %v1949, 0.0
      %v1978 = vmax.f32 %v1950, 0.0
      %v1979 = vmax.f32 %v1951, 0.0
      %v1980 = vmax.f32 %v1952, 0.0
      %v1981 = vmax.f32 %v1953, 0.0
      %v1982 = vmax.f32 %v1954, 0.0
      %v1983 = vmax.f32 %v1955, 0.0
      %v1984 = vmax.f32 %v1956, 0.0
      %v1985 = vmax.f32 %v1957, 0.0
      %v1986 = vmax.f32 %v1958, 0.0
      %v1987 = vmax.f32 %v1959, 0.0
      %v1988 = vmax.f32 %v1960, 0.0
      %v1989 = vmax.f32 %v1961, 0.0
      %v1990 = vpack.c.bf16 %v1963, %v1962
      %v1991 = vpack.c.bf16 %v1965, %v1964
      %v1992 = vpack.c.bf16 %v1967, %v1966
      %v1993 = vpack.c.bf16 %v1969, %v1968
      %v1994 = vpack.c.bf16 %v1971, %v1970
      %v1995 = vpack.c.bf16 %v1973, %v1972
      %v1996 = vpack.c.bf16 %v1975, %v1974
      %v1997 = vpack.c.bf16 %v1977, %v1976
      %v1998 = vpack.c.bf16 %v1979, %v1978
      %v1999 = vpack.c.bf16 %v1981, %v1980
      %v2000 = vpack.c.bf16 %v1983, %v1982
      %v2001 = vpack.c.bf16 %v1985, %v1984
      %v2002 = vpack.c.bf16 %v1987, %v1986
      %v2003 = vpack.c.bf16 %v1989, %v1988
      %v2018 = vunpack.c.l.b16 %v1990
      %v2019 = vunpack.c.h.b16 %v1990
      %v2020 = vunpack.c.l.b16 %v1991
      %v2021 = vunpack.c.h.b16 %v1991
      %v2022 = vunpack.c.l.b16 %v1992
      %v2023 = vunpack.c.h.b16 %v1992
      %v2024 = vunpack.c.l.b16 %v1993
      %v2025 = vunpack.c.h.b16 %v1993
      %v2026 = vunpack.c.l.b16 %v1994
      %v2027 = vunpack.c.h.b16 %v1994
      %v2028 = vunpack.c.l.b16 %v1995
      %v2029 = vunpack.c.h.b16 %v1995
      %v2030 = vunpack.c.l.b16 %v1996
      %v2031 = vunpack.c.h.b16 %v1996
      %v2032 = vunpack.c.l.b16 %v1997
      %v2033 = vunpack.c.h.b16 %v1997
      %v2034 = vunpack.c.l.b16 %v1998
      %v2035 = vunpack.c.h.b16 %v1998
      %v2036 = vunpack.c.l.b16 %v1999
      %v2037 = vunpack.c.h.b16 %v1999
      %v2038 = vunpack.c.l.b16 %v2000
      %v2039 = vunpack.c.h.b16 %v2000
      %v2040 = vunpack.c.l.b16 %v2001
      %v2041 = vunpack.c.h.b16 %v2001
      %v2042 = vunpack.c.l.b16 %v2002
      %v2043 = vunpack.c.h.b16 %v2002
      %v2044 = vunpack.c.l.b16 %v2003
      %v2045 = vunpack.c.h.b16 %v2003
      %v2046 = vpack.c.b16 %v2018, %v2018
      %v2047 = vpack.c.b16 %v2019, %v2019
      %v2048 = vpack.c.b16 %v2020, %v2020
      %v2049 = vpack.c.b16 %v2021, %v2021
      %v2050 = vpack.c.b16 %v2022, %v2022
      %v2051 = vpack.c.b16 %v2023, %v2023
      %v2052 = vpack.c.b16 %v2024, %v2024
      %v2053 = vpack.c.b16 %v2025, %v2025
      %v2054 = vpack.c.b16 %v2026, %v2026
      %v2055 = vpack.c.b16 %v2027, %v2027
      %v2056 = vpack.c.b16 %v2028, %v2028
      %v2057 = vpack.c.b16 %v2029, %v2029
      %v2058 = vpack.c.b16 %v2030, %v2030
      %v2059 = vpack.c.b16 %v2031, %v2031
      %v2060 = vpack.c.b16 %v2032, %v2032
      %v2061 = vpack.c.b16 %v2033, %v2033
      %v2062 = vpack.c.b16 %v2034, %v2034
      %v2063 = vpack.c.b16 %v2035, %v2035
      %v2064 = vpack.c.b16 %v2036, %v2036
      %v2065 = vpack.c.b16 %v2037, %v2037
      %v2066 = vpack.c.b16 %v2038, %v2038
      %v2067 = vpack.c.b16 %v2039, %v2039
      %v2068 = vpack.c.b16 %v2040, %v2040
      %v2069 = vpack.c.b16 %v2041, %v2041
      %v2070 = vpack.c.b16 %v2042, %v2042
      %v2071 = vpack.c.b16 %v2043, %v2043
      %v2072 = vpack.c.b16 %v2044, %v2044
      %v2073 = vpack.c.b16 %v2045, %v2045
      %vm2074 = vsmask.f32 256
      %vm2075 = vsmask.f32 4368
      %vm2076 = vmor %vm2074, %vm2075
      %v2078 = vshrl.u32 %v2046, 16
      %v2080 = vrot.slane %v2078, 7
      %v2081 = vshll.u32 %v2046, 16
      %v2083 = vor.u32 %v2080, %v2081
      %v2084 = vrot.slane %v2080, 4
      %v2086 = vshrl.u32 %v2047, 16
      %v2088 = vrot.slane %v2086, 7
      %v2089 = vshll.u32 %v2047, 16
      %v2091 = vor.u32 %v2088, %v2089
      %v2092 = vsel %vm2076, %v2084, %v2091
      %v2094 = vshrl.u32 %v2048, 16
      %v2096 = vrot.slane %v2094, 7
      %v2097 = vshll.u32 %v2048, 16
      %v2099 = vor.u32 %v2096, %v2097
      %v2100 = vrot.slane %v2096, 4
      %v2102 = vshrl.u32 %v2049, 16
      %v2104 = vrot.slane %v2102, 7
      %v2105 = vshll.u32 %v2049, 16
      %v2107 = vor.u32 %v2104, %v2105
      %v2108 = vsel %vm2076, %v2100, %v2107
      %v2110 = vshrl.u32 %v2050, 16
      %v2112 = vrot.slane %v2110, 7
      %v2113 = vshll.u32 %v2050, 16
      %v2115 = vor.u32 %v2112, %v2113
      %v2116 = vrot.slane %v2112, 4
      %v2118 = vshrl.u32 %v2051, 16
      %v2120 = vrot.slane %v2118, 7
      %v2121 = vshll.u32 %v2051, 16
      %v2123 = vor.u32 %v2120, %v2121
      %v2124 = vsel %vm2076, %v2116, %v2123
      %v2126 = vshrl.u32 %v2052, 16
      %v2128 = vrot.slane %v2126, 7
      %v2129 = vshll.u32 %v2052, 16
      %v2131 = vor.u32 %v2128, %v2129
      %v2132 = vrot.slane %v2128, 4
      %v2134 = vshrl.u32 %v2053, 16
      %v2136 = vrot.slane %v2134, 7
      %v2137 = vshll.u32 %v2053, 16
      %v2139 = vor.u32 %v2136, %v2137
      %v2140 = vsel %vm2076, %v2132, %v2139
      %v2142 = vshrl.u32 %v2054, 16
      %v2144 = vrot.slane %v2142, 7
      %v2145 = vshll.u32 %v2054, 16
      %v2147 = vor.u32 %v2144, %v2145
      %v2148 = vrot.slane %v2144, 4
      %v2150 = vshrl.u32 %v2055, 16
      %v2152 = vrot.slane %v2150, 7
      %v2153 = vshll.u32 %v2055, 16
      %v2155 = vor.u32 %v2152, %v2153
      %v2156 = vsel %vm2076, %v2148, %v2155
      %v2158 = vshrl.u32 %v2056, 16
      %v2160 = vrot.slane %v2158, 7
      %v2161 = vshll.u32 %v2056, 16
      %v2163 = vor.u32 %v2160, %v2161
      %v2164 = vrot.slane %v2160, 4
      %v2166 = vshrl.u32 %v2057, 16
      %v2168 = vrot.slane %v2166, 7
      %v2169 = vshll.u32 %v2057, 16
      %v2171 = vor.u32 %v2168, %v2169
      %v2172 = vsel %vm2076, %v2164, %v2171
      %v2174 = vshrl.u32 %v2058, 16
      %v2176 = vrot.slane %v2174, 7
      %v2177 = vshll.u32 %v2058, 16
      %v2179 = vor.u32 %v2176, %v2177
      %v2180 = vrot.slane %v2176, 4
      %v2182 = vshrl.u32 %v2059, 16
      %v2184 = vrot.slane %v2182, 7
      %v2185 = vshll.u32 %v2059, 16
      %v2187 = vor.u32 %v2184, %v2185
      %v2188 = vsel %vm2076, %v2180, %v2187
      %v2190 = vshrl.u32 %v2060, 16
      %v2192 = vrot.slane %v2190, 7
      %v2193 = vshll.u32 %v2060, 16
      %v2195 = vor.u32 %v2192, %v2193
      %v2196 = vrot.slane %v2192, 4
      %v2198 = vshrl.u32 %v2061, 16
      %v2200 = vrot.slane %v2198, 7
      %v2201 = vshll.u32 %v2061, 16
      %v2203 = vor.u32 %v2200, %v2201
      %v2204 = vsel %vm2076, %v2196, %v2203
      %v2206 = vshrl.u32 %v2062, 16
      %v2208 = vrot.slane %v2206, 7
      %v2209 = vshll.u32 %v2062, 16
      %v2211 = vor.u32 %v2208, %v2209
      %v2212 = vrot.slane %v2208, 4
      %v2214 = vshrl.u32 %v2063, 16
      %v2216 = vrot.slane %v2214, 7
      %v2217 = vshll.u32 %v2063, 16
      %v2219 = vor.u32 %v2216, %v2217
      %v2220 = vsel %vm2076, %v2212, %v2219
      %v2222 = vshrl.u32 %v2064, 16
      %v2224 = vrot.slane %v2222, 7
      %v2225 = vshll.u32 %v2064, 16
      %v2227 = vor.u32 %v2224, %v2225
      %v2228 = vrot.slane %v2224, 4
      %v2230 = vshrl.u32 %v2065, 16
      %v2232 = vrot.slane %v2230, 7
      %v2233 = vshll.u32 %v2065, 16
      %v2235 = vor.u32 %v2232, %v2233
      %v2236 = vsel %vm2076, %v2228, %v2235
      %v2238 = vshrl.u32 %v2066, 16
      %v2240 = vrot.slane %v2238, 7
      %v2241 = vshll.u32 %v2066, 16
      %v2243 = vor.u32 %v2240, %v2241
      %v2244 = vrot.slane %v2240, 4
      %v2246 = vshrl.u32 %v2067, 16
      %v2248 = vrot.slane %v2246, 7
      %v2249 = vshll.u32 %v2067, 16
      %v2251 = vor.u32 %v2248, %v2249
      %v2252 = vsel %vm2076, %v2244, %v2251
      %v2254 = vshrl.u32 %v2068, 16
      %v2256 = vrot.slane %v2254, 7
      %v2257 = vshll.u32 %v2068, 16
      %v2259 = vor.u32 %v2256, %v2257
      %v2260 = vrot.slane %v2256, 4
      %v2262 = vshrl.u32 %v2069, 16
      %v2264 = vrot.slane %v2262, 7
      %v2265 = vshll.u32 %v2069, 16
      %v2267 = vor.u32 %v2264, %v2265
      %v2268 = vsel %vm2076, %v2260, %v2267
      %v2270 = vshrl.u32 %v2070, 16
      %v2272 = vrot.slane %v2270, 7
      %v2273 = vshll.u32 %v2070, 16
      %v2275 = vor.u32 %v2272, %v2273
      %v2276 = vrot.slane %v2272, 4
      %v2278 = vshrl.u32 %v2071, 16
      %v2280 = vrot.slane %v2278, 7
      %v2281 = vshll.u32 %v2071, 16
      %v2283 = vor.u32 %v2280, %v2281
      %v2284 = vsel %vm2076, %v2276, %v2283
      %v2286 = vshrl.u32 %v2072, 16
      %v2288 = vrot.slane %v2286, 7
      %v2289 = vshll.u32 %v2072, 16
      %v2291 = vor.u32 %v2288, %v2289
      %v2292 = vrot.slane %v2288, 4
      %v2294 = vshrl.u32 %v2073, 16
      %v2296 = vrot.slane %v2294, 7
      %v2297 = vshll.u32 %v2073, 16
      %v2299 = vor.u32 %v2296, %v2297
      %v2300 = vsel %vm2076, %v2292, %v2299
      %s2329 = scalar_lea.vmem %s278, 8
      %vm2330 = vcmask 125952
      %vm2331 = vsmask.f32 7938
      %vm2332 = vmand %vm2330, %vm2331
      %v2333 = vld [vmem:[%s2329] sm:$0xf]
      %v2334 = vsel %vm2332, %v2083, %v2333
      %2335 = vst [vmem:[%s2329] sm:$0xf] %v2334
      %vm2336 = vsmask.f32 3328
      %vm2337 = vmand %vm2330, %vm2336
      %v2338 = vld [vmem:[%s2329 + $0x4] sm:$0xf]
      %v2339 = vsel %vm2337, %v2092, %v2338
      %2340 = vst [vmem:[%s2329 + $0x4] sm:$0xf] %v2339
      %v2341 = vld [vmem:[%s2329 + $0x8] sm:$0xf]
      %v2342 = vsel %vm2332, %v2099, %v2341
      %2343 = vst [vmem:[%s2329 + $0x8] sm:$0xf] %v2342
      %v2344 = vld [vmem:[%s2329 + $0xc] sm:$0xf]
      %v2345 = vsel %vm2337, %v2108, %v2344
      %2346 = vst [vmem:[%s2329 + $0xc] sm:$0xf] %v2345
      %v2347 = vld [vmem:[%s2329 + $0x10] sm:$0xf]
      %v2348 = vsel %vm2332, %v2115, %v2347
      %2349 = vst [vmem:[%s2329 + $0x10] sm:$0xf] %v2348
      %v2350 = vld [vmem:[%s2329 + $0x14] sm:$0xf]
      %v2351 = vsel %vm2337, %v2124, %v2350
      %2352 = vst [vmem:[%s2329 + $0x14] sm:$0xf] %v2351
      %v2353 = vld [vmem:[%s2329 + $0x18] sm:$0xf]
      %v2354 = vsel %vm2332, %v2131, %v2353
      %2355 = vst [vmem:[%s2329 + $0x18] sm:$0xf] %v2354
      %v2356 = vld [vmem:[%s2329 + $0x1c] sm:$0xf]
      %v2357 = vsel %vm2337, %v2140, %v2356
      %2358 = vst [vmem:[%s2329 + $0x1c] sm:$0xf] %v2357
      %v2359 = vld [vmem:[%s2329 + $0x20] sm:$0xf]
      %v2360 = vsel %vm2332, %v2147, %v2359
      %2361 = vst [vmem:[%s2329 + $0x20] sm:$0xf] %v2360
      %v2362 = vld [vmem:[%s2329 + $0x24] sm:$0xf]
      %v2363 = vsel %vm2337, %v2156, %v2362
      %2364 = vst [vmem:[%s2329 + $0x24] sm:$0xf] %v2363
      %v2365 = vld [vmem:[%s2329 + $0x28] sm:$0xf]
      %v2366 = vsel %vm2332, %v2163, %v2365
      %2367 = vst [vmem:[%s2329 + $0x28] sm:$0xf] %v2366
      %v2368 = vld [vmem:[%s2329 + $0x2c] sm:$0xf]
      %v2369 = vsel %vm2337, %v2172, %v2368
      %2370 = vst [vmem:[%s2329 + $0x2c] sm:$0xf] %v2369
      %v2371 = vld [vmem:[%s2329 + $0x30] sm:$0xf]
      %v2372 = vsel %vm2332, %v2179, %v2371
      %2373 = vst [vmem:[%s2329 + $0x30] sm:$0xf] %v2372
      %v2374 = vld [vmem:[%s2329 + $0x34] sm:$0xf]
      %v2375 = vsel %vm2337, %v2188, %v2374
      %2376 = vst [vmem:[%s2329 + $0x34] sm:$0xf] %v2375
      %v2377 = vld [vmem:[%s2329 + $0x38] sm:$0xf]
      %v2378 = vsel %vm2332, %v2195, %v2377
      %2379 = vst [vmem:[%s2329 + $0x38] sm:$0xf] %v2378
      %v2380 = vld [vmem:[%s2329 + $0x3c] sm:$0xf]
      %v2381 = vsel %vm2337, %v2204, %v2380
      %2382 = vst [vmem:[%s2329 + $0x3c] sm:$0xf] %v2381
      %v2383 = vld [vmem:[%s2329 + $0x40] sm:$0xf]
      %v2384 = vsel %vm2332, %v2211, %v2383
      %2385 = vst [vmem:[%s2329 + $0x40] sm:$0xf] %v2384
      %v2386 = vld [vmem:[%s2329 + $0x44] sm:$0xf]
      %v2387 = vsel %vm2337, %v2220, %v2386
      %2388 = vst [vmem:[%s2329 + $0x44] sm:$0xf] %v2387
      %v2389 = vld [vmem:[%s2329 + $0x48] sm:$0xf]
      %v2390 = vsel %vm2332, %v2227, %v2389
      %2391 = vst [vmem:[%s2329 + $0x48] sm:$0xf] %v2390
      %v2392 = vld [vmem:[%s2329 + $0x4c] sm:$0xf]
      %v2393 = vsel %vm2337, %v2236, %v2392
      %2394 = vst [vmem:[%s2329 + $0x4c] sm:$0xf] %v2393
      %v2395 = vld [vmem:[%s2329 + $0x50] sm:$0xf]
      %v2396 = vsel %vm2332, %v2243, %v2395
      %2397 = vst [vmem:[%s2329 + $0x50] sm:$0xf] %v2396
      %v2398 = vld [vmem:[%s2329 + $0x54] sm:$0xf]
      %v2399 = vsel %vm2337, %v2252, %v2398
      %2400 = vst [vmem:[%s2329 + $0x54] sm:$0xf] %v2399
      %v2401 = vld [vmem:[%s2329 + $0x58] sm:$0xf]
      %v2402 = vsel %vm2332, %v2259, %v2401
      %2403 = vst [vmem:[%s2329 + $0x58] sm:$0xf] %v2402
      %v2404 = vld [vmem:[%s2329 + $0x5c] sm:$0xf]
      %v2405 = vsel %vm2337, %v2268, %v2404
      %2406 = vst [vmem:[%s2329 + $0x5c] sm:$0xf] %v2405
      %v2407 = vld [vmem:[%s2329 + $0x60] sm:$0xf]
      %v2408 = vsel %vm2332, %v2275, %v2407
      %2409 = vst [vmem:[%s2329 + $0x60] sm:$0xf] %v2408
      %v2410 = vld [vmem:[%s2329 + $0x64] sm:$0xf]
      %v2411 = vsel %vm2337, %v2284, %v2410
      %2412 = vst [vmem:[%s2329 + $0x64] sm:$0xf] %v2411
      %v2413 = vld [vmem:[%s2329 + $0x68] sm:$0xf]
      %v2414 = vsel %vm2332, %v2291, %v2413
      %2415 = vst [vmem:[%s2329 + $0x68] sm:$0xf] %v2414
      %v2416 = vld [vmem:[%s2329 + $0x6c] sm:$0xf]
      %v2417 = vsel %vm2337, %v2300, %v2416
      %2418 = vst [vmem:[%s2329 + $0x6c] sm:$0xf] %v2417
      %p2419 = scmp.lt.s32.totalorder %s18, 1
      %s2420 = scalar_select %p2419, %s18, 1
      %s2421 = smul.addr %s2420, 34
      %s2422 = smul.addr %s2421, 4
      %s2423 = scalar_lea.vmem %s7, %s2422
      // Predicated region
      $region49: #{mobilenet_forward.5} parent=47 // pred_check
        %p2424 = pneg %p188
      $region50: #{mobilenet_forward.5} parent=47 // pred_check_branch
        %2426 = sbr.rel (%p2424) target = $region52
      $region51: #{mobilenet_forward.5} parent=47 // pred_region
        _
      $region52: #{mobilenet_forward.5} parent=47 // pred_fallthru
        _
    $region48: #{mobilenet_forward.5} parent=5 // pred_fallthru
      _
    %p2427 = scmp.le.s32.totalorder 2, %s13
    // Predicated region
    $region53: #{mobilenet_forward.5} parent=5 // pred_check
      %p2428 = pneg %p2427
    $region54: #{mobilenet_forward.5} parent=5 // pred_check_branch
      %2430 = sbr.rel (%p2428) target = $region56
    $region55: #{mobilenet_forward.5} parent=5 // pred_region
      %s2431 = ssub.s32 %s13, 2
      // Predicated region
      $region57: #{mobilenet_forward.5} parent=55 // pred_check
        %p2432 = pneg %p194
      $region58: #{mobilenet_forward.5} parent=55 // pred_check_branch
        %2434 = sbr.rel (%p2432) target = $region60
      $region59: #{mobilenet_forward.5} parent=55 // pred_region
        %p2435 = scmp.lt.s32.totalorder %s19, 1
        %s2436 = scalar_select %p2435, %s19, 1
        %s2437 = smul.addr %s2436, 34
        %s2438 = smul.addr %s2437, 4
        %s2439 = scalar_lea.vmem %s7, %s2438
      $region60: #{mobilenet_forward.5} parent=55 // pred_fallthru
        _
    $region56: #{mobilenet_forward.5} parent=5 // pred_fallthru
      _
  $region6: #{mobilenet_forward.5} parent=0 // loop_footer
    %s17 = sadd.s32 1, %s13
  $region7: #{mobilenet_forward.5} parent=0 // loop_footer_branch
    %12 = sbr.rel target = $region3
  $region8: #{mobilenet_forward.5} parent=0 // loop_exit
    _

// kernel: mobilenet_forward.7
$region0: #{mobilenet_forward.7}
  #allocation0 [shape = 'u32[]', space=smem, size = 0x4, offset = 0x4, fixed_abs, tag = 'smem constant byte address 0x4 - core index']
  #allocation1 [shape = 'u32[144,128]{1,0:T(1,128)}', space=vmem, size = 0x12000, scoped, tag = 'internal scratch']
  %s0 = inlined_call_operand.vmem [shape: bf16[2,49,32], index: 0, kind: input, shape index: {}]
  %s1 = inlined_call_operand.vmem [shape: bf16[32,1024], index: 1, kind: input, shape index: {}]
  %s2 = inlined_call_operand.vmem [shape: f32[1,1024], index: 2, kind: input, shape index: {}]
  %s3 = inlined_call_operand.hbm [shape: f32[2,1024], index: 3, kind: output, shape index: {}]
  %s4 = sld [smem:[#allocation0]]
  $region22: #{mobilenet_forward.7} parent=0
    _
  %s6 = ssub.s32 1, %s4
  %s7 = scalar_select 0, %s6, %s4
  $region1: #{mobilenet_forward.7} parent=0
    #allocation2 [shape = 'u8[8192]{0}', space=vmem, size = 0x2000, scoped, tag = 'output window, operand 0, single buffered']
    #allocation3 [shape = 's32[1]{0}', space=sflag, size = 0x4, scoped, tag = 'scoped memory for mobilenet_forward.7']
    %8 = vsyncpa [#allocation3], 0
    // Predicated region
    $region2: #{mobilenet_forward.7} parent=1 // pred_check
      _
    $region3: #{mobilenet_forward.7} parent=1 // pred_check_branch
      %10 = sbr.rel (0) target = $region5
    $region4: #{mobilenet_forward.7} parent=1 // pred_region
      _
    $region5: #{mobilenet_forward.7} parent=1 // pred_fallthru
      _
    // Predicated region
    $region6: #{mobilenet_forward.7} parent=1 // pred_check
      _
    $region7: #{mobilenet_forward.7} parent=1 // pred_check_branch
      %12 = sbr.rel (0) target = $region9
    $region8: #{mobilenet_forward.7} parent=1 // pred_region
      _
    $region9: #{mobilenet_forward.7} parent=1 // pred_fallthru
      _
    // Predicated region
    $region10: #{mobilenet_forward.7} parent=1 // pred_check
      _
    $region11: #{mobilenet_forward.7} parent=1 // pred_check_branch
      %14 = sbr.rel (0) target = $region13
    $region12: #{mobilenet_forward.7} parent=1 // pred_region
      _
    $region13: #{mobilenet_forward.7} parent=1 // pred_fallthru
      _
    %v16 = vld [vmem:[%s0] sm:$0xf]
    %v17 = vld [vmem:[%s0 + $0x4] sm:$0xf]
    %v18 = vld [vmem:[%s0 + $0x8] sm:$0xf]
    %v19 = vld [vmem:[%s0 + $0xc] sm:$0xf]
    %v20 = vld [vmem:[%s0 + $0x10] sm:$0xf]
    %v21 = vld [vmem:[%s0 + $0x14] sm:$0xf]
    %v22 = vld [vmem:[%s0 + $0x18] sm:$0x1]
    %v23 = vld [vmem:[%s0 + $0x1c] sm:$0xf]
    %v24 = vld [vmem:[%s0 + $0x20] sm:$0xf]
    %v25 = vld [vmem:[%s0 + $0x24] sm:$0xf]
    %v26 = vld [vmem:[%s0 + $0x28] sm:$0xf]
    %v27 = vld [vmem:[%s0 + $0x2c] sm:$0xf]
    %v28 = vld [vmem:[%s0 + $0x30] sm:$0xf]
    %v29 = vld [vmem:[%s0 + $0x34] sm:$0x1]
    %v30 = vunpack.c.l.bf16 %v16
    %v31 = vunpack.c.l.bf16 %v17
    %v32 = vunpack.c.l.bf16 %v18
    %v33 = vunpack.c.l.bf16 %v19
    %v34 = vunpack.c.l.bf16 %v20
    %v35 = vunpack.c.l.bf16 %v21
    %v36 = vunpack.c.l.bf16 %v22
    %v37 = vunpack.c.l.bf16 %v23
    %v38 = vunpack.c.l.bf16 %v24
    %v39 = vunpack.c.l.bf16 %v25
    %v40 = vunpack.c.l.bf16 %v26
    %v41 = vunpack.c.l.bf16 %v27
    %v42 = vunpack.c.l.bf16 %v28
    %v43 = vunpack.c.l.bf16 %v29
    %vm44 = vcmask 261120
    %v45 = vsel %vm44, %v30, 0.0
    %v46 = vsel %vm44, %v31, 0.0
    %v47 = vadd.f32 %v45, %v46
    %v48 = vsel %vm44, %v32, 0.0
    %v49 = vadd.f32 %v47, %v48
    %v50 = vsel %vm44, %v33, 0.0
    %v51 = vadd.f32 %v49, %v50
    %v52 = vsel %vm44, %v34, 0.0
    %v53 = vadd.f32 %v51, %v52
    %v54 = vsel %vm44, %v35, 0.0
    %v55 = vadd.f32 %v53, %v54
    %vm56 = vcmask 253952
    %v57 = vsel %vm56, %v36, 0.0
    %v58 = vadd.f32 %v55, %v57
    %v59 = vrot.slane %v58, 4
    %v60 = vadd.f32 %v58, %v59
    %v61 = vrot.slane %v60, 2
    %v62 = vadd.f32 %v60, %v61
    %v63 = vrot.slane %v62, 1
    %v64 = vadd.f32 %v62, %v63
    %v65 = vsel %vm44, %v37, 0.0
    %v66 = vsel %vm44, %v38, 0.0
    %v67 = vadd.f32 %v65, %v66
    %v68 = vsel %vm44, %v39, 0.0
    %v69 = vadd.f32 %v67, %v68
    %v70 = vsel %vm44, %v40, 0.0
    %v71 = vadd.f32 %v69, %v70
    %v72 = vsel %vm44, %v41, 0.0
    %v73 = vadd.f32 %v71, %v72
    %v74 = vsel %vm44, %v42, 0.0
    %v75 = vadd.f32 %v73, %v74
    %v76 = vsel %vm56, %v43, 0.0
    %v77 = vadd.f32 %v75, %v76
    %v78 = vrot.slane %v77, 4
    %v79 = vadd.f32 %v77, %v78
    %v80 = vrot.slane %v79, 2
    %v81 = vadd.f32 %v79, %v80
    %v82 = vrot.slane %v81, 1
    %v83 = vadd.f32 %v81, %v82
    %v84 = vrcp.pop 49.0
    %v85 = vmul.f32 %v64, %v84
    %v86 = vmul.f32 %v83, %v84
    %v87 = vpack.c.bf16 %v85, %v85
    %v88 = vpack.c.bf16 %v86, %v86
    %v89 = vld [vmem:[%s1] sm:$0xff]
    %v90 = vld [vmem:[%s1 + $0x8] sm:$0xff]
    %v91 = vld [vmem:[%s1 + $0x10] sm:$0xff]
    %v92 = vld [vmem:[%s1 + $0x18] sm:$0xff]
    %v93 = vld [vmem:[%s1 + $0x20] sm:$0xff]
    %v94 = vld [vmem:[%s1 + $0x28] sm:$0xff]
    %v95 = vld [vmem:[%s1 + $0x30] sm:$0xff]
    %v96 = vld [vmem:[%s1 + $0x38] sm:$0xff]
    %v97 = vld [vmem:[%s1 + $0x40] sm:$0xff]
    %v98 = vld [vmem:[%s1 + $0x48] sm:$0xff]
    %v99 = vld [vmem:[%s1 + $0x50] sm:$0xff]
    %v100 = vld [vmem:[%s1 + $0x58] sm:$0xff]
    %v101 = vld [vmem:[%s1 + $0x60] sm:$0xff]
    %v102 = vld [vmem:[%s1 + $0x68] sm:$0xff]
    %v103 = vld [vmem:[%s1 + $0x70] sm:$0xff]
    %v104 = vld [vmem:[%s1 + $0x78] sm:$0xff]
    %v105 = vld [vmem:[%s2] sm:$0xff]
    %v107 = vlaneseq
    %v108 = vshrl.u32 %v107, 7
    %v109 = vsub.s32 0, %v108
    %v110 = vrot.slane %v105, %v109
    %v111 = vlaneseq
    %v112 = vshrl.u32 %v111, 7
    %v113 = vsub.s32 1, %v112
    %v114 = vrot.slane %v105, %v113
    %v115 = vlaneseq
    %v116 = vshrl.u32 %v115, 7
    %v117 = vsub.s32 2, %v116
    %v118 = vrot.slane %v105, %v117
    %v119 = vlaneseq
    %v120 = vshrl.u32 %v119, 7
    %v121 = vsub.s32 3, %v120
    %v122 = vrot.slane %v105, %v121
    %v123 = vlaneseq
    %v124 = vshrl.u32 %v123, 7
    %v125 = vsub.s32 4, %v124
    %v126 = vrot.slane %v105, %v125
    %v127 = vlaneseq
    %v128 = vshrl.u32 %v127, 7
    %v129 = vsub.s32 5, %v128
    %v130 = vrot.slane %v105, %v129
    %v131 = vlaneseq
    %v132 = vshrl.u32 %v131, 7
    %v133 = vsub.s32 6, %v132
    %v134 = vrot.slane %v105, %v133
    %v135 = vlaneseq
    %v136 = vshrl.u32 %v135, 7
    %v137 = vsub.s32 7, %v136
    %v138 = vrot.slane %v105, %v137
    %v149 = vunpack.c.l.b16 %v87
    %v150 = vunpack.c.l.b16 %v88
    %vm151 = vcmask 1041409
    %v152 = vsel %vm151, %v150, %v149
    %v153 = vpack.c.b16 %v152, %v152
    %v170 = vunpack.c.l.b16 %v89
    %v171 = vunpack.c.h.b16 %v89
    %v172 = vunpack.c.l.b16 %v90
    %v173 = vunpack.c.h.b16 %v90
    %v174 = vunpack.c.l.b16 %v91
    %v175 = vunpack.c.h.b16 %v91
    %v176 = vunpack.c.l.b16 %v92
    %v177 = vunpack.c.h.b16 %v92
    %v178 = vunpack.c.l.b16 %v93
    %v179 = vunpack.c.h.b16 %v93
    %v180 = vunpack.c.l.b16 %v94
    %v181 = vunpack.c.h.b16 %v94
    %v182 = vunpack.c.l.b16 %v95
    %v183 = vunpack.c.h.b16 %v95
    %v184 = vunpack.c.l.b16 %v96
    %v185 = vunpack.c.h.b16 %v96
    %v186 = vunpack.c.l.b16 %v97
    %v187 = vunpack.c.h.b16 %v97
    %v188 = vunpack.c.l.b16 %v98
    %v189 = vunpack.c.h.b16 %v98
    %v190 = vunpack.c.l.b16 %v99
    %v191 = vunpack.c.h.b16 %v99
    %v192 = vunpack.c.l.b16 %v100
    %v193 = vunpack.c.h.b16 %v100
    %v194 = vunpack.c.l.b16 %v101
    %v195 = vunpack.c.h.b16 %v101
    %v196 = vunpack.c.l.b16 %v102
    %v197 = vunpack.c.h.b16 %v102
    %v198 = vunpack.c.l.b16 %v103
    %v199 = vunpack.c.h.b16 %v103
    %v200 = vunpack.c.l.b16 %v104
    %v201 = vunpack.c.h.b16 %v104
    %v202 = vpack.c.b16 %v178, %v170
    %v203 = vpack.c.b16 %v179, %v171
    %v204 = vpack.c.b16 %v180, %v172
    %v205 = vpack.c.b16 %v181, %v173
    %v206 = vpack.c.b16 %v182, %v174
    %v207 = vpack.c.b16 %v183, %v175
    %v208 = vpack.c.b16 %v184, %v176
    %v209 = vpack.c.b16 %v185, %v177
    %v210 = vpack.c.b16 %v194, %v186
    %v211 = vpack.c.b16 %v195, %v187
    %v212 = vpack.c.b16 %v196, %v188
    %v213 = vpack.c.b16 %v197, %v189
    %v214 = vpack.c.b16 %v198, %v190
    %v215 = vpack.c.b16 %v199, %v191
    %v216 = vpack.c.b16 %v200, %v192
    %v217 = vpack.c.b16 %v201, %v193
    %v235 = vsel %vm44, %v153, 0
    %237 = vmatprep.subr.bf16.mxu0 0
    %238 = vmatpush1.bf16.msra.mxu0 0
    %239 = vmatprep.subr.bf16.mxu0 0
    %240 = vmatpush1.bf16.msra.mxu0 0
    %241 = vmatprep.subr.bf16.mxu0 0
    %242 = vmatpush1.bf16.msra.mxu0 0
    %243 = vmatprep.subr.bf16.mxu0 0
    %244 = vmatpush1.bf16.msra.mxu0 0
    %245 = vmatprep.subr.bf16.mxu0 0
    %246 = vmatpush1.bf16.msra.mxu0 0
    %247 = vmatprep.subr.bf16.mxu0 0
    %248 = vmatpush1.bf16.msra.mxu0 0
    %249 = vmatprep.subr.bf16.mxu0 %v211
    %250 = vmatpush1.bf16.msra.mxu0 %v210
    %251 = vmatprep.subr.bf16.mxu0 %v203
    %252 = vmatpush1.bf16.msra.mxu0 %v202
    %253 = vmatprep.subr.bf16.mxu0 0
    %254 = vmatpush2.bf16.msra.mxu0 0
    %255 = vmatprep.subr.bf16.mxu0 0
    %256 = vmatpush2.bf16.msra.mxu0 0
    %257 = vmatprep.subr.bf16.mxu0 0
    %258 = vmatpush2.bf16.msra.mxu0 0
    %259 = vmatprep.subr.bf16.mxu0 0
    %260 = vmatpush2.bf16.msra.mxu0 0
    %261 = vmatprep.subr.bf16.mxu0 0
    %262 = vmatpush2.bf16.msra.mxu0 0
    %263 = vmatprep.subr.bf16.mxu0 0
    %264 = vmatpush2.bf16.msra.mxu0 0
    %265 = vmatprep.subr.bf16.mxu0 0
    %266 = vmatpush2.bf16.msra.mxu0 0
    %267 = vmatprep.subr.bf16.mxu0 0
    %268 = vmatpush2.bf16.msra.mxu0 0
    %269 = vmatprep.mubr.bf16.mxu0 0
    %270 = vmatmul.mubr.bf16.gmra.mxu0 %v235
    %v271 = vpop.f32.mrf.mxu0
    %v272 = vadd.f32 %v110, %v271
    %v273 = vpop.f32.mrf.mxu0
    %v274 = vadd.f32 %v114, %v273
    %v275 = vpop.f32.mrf.mxu0
    %v276 = vpop.f32.mrf.mxu0
    %277 = vdwg.mxu0
    %278 = vmatprep.subr.bf16.mxu0 0
    %279 = vmatpush1.bf16.msra.mxu0 0
    %280 = vmatprep.subr.bf16.mxu0 0
    %281 = vmatpush1.bf16.msra.mxu0 0
    %282 = vmatprep.subr.bf16.mxu0 0
    %283 = vmatpush1.bf16.msra.mxu0 0
    %284 = vmatprep.subr.bf16.mxu0 0
    %285 = vmatpush1.bf16.msra.mxu0 0
    %286 = vmatprep.subr.bf16.mxu0 0
    %287 = vmatpush1.bf16.msra.mxu0 0
    %288 = vmatprep.subr.bf16.mxu0 0
    %289 = vmatpush1.bf16.msra.mxu0 0
    %290 = vmatprep.subr.bf16.mxu0 %v213
    %291 = vmatpush1.bf16.msra.mxu0 %v212
    %292 = vmatprep.subr.bf16.mxu0 %v205
    %293 = vmatpush1.bf16.msra.mxu0 %v204
    %294 = vmatprep.subr.bf16.mxu0 0
    %295 = vmatpush2.bf16.msra.mxu0 0
    %296 = vmatprep.subr.bf16.mxu0 0
    %297 = vmatpush2.bf16.msra.mxu0 0
    %298 = vmatprep.subr.bf16.mxu0 0
    %299 = vmatpush2.bf16.msra.mxu0 0
    %300 = vmatprep.subr.bf16.mxu0 0
    %301 = vmatpush2.bf16.msra.mxu0 0
    %302 = vmatprep.subr.bf16.mxu0 0
    %303 = vmatpush2.bf16.msra.mxu0 0
    %304 = vmatprep.subr.bf16.mxu0 0
    %305 = vmatpush2.bf16.msra.mxu0 0
    %306 = vmatprep.subr.bf16.mxu0 0
    %307 = vmatpush2.bf16.msra.mxu0 0
    %308 = vmatprep.subr.bf16.mxu0 0
    %309 = vmatpush2.bf16.msra.mxu0 0
    %310 = vmatprep.mubr.bf16.mxu0 0
    %311 = vmatmul.mubr.bf16.gmra.mxu0 %v235
    %v312 = vpop.f32.mrf.mxu0
    %v313 = vadd.f32 %v118, %v312
    %v314 = vpop.f32.mrf.mxu0
    %v315 = vadd.f32 %v122, %v314
    %v316 = vpop.f32.mrf.mxu0
    %v317 = vpop.f32.mrf.mxu0
    %318 = vdwg.mxu0
    %319 = vmatprep.subr.bf16.mxu0 0
    %320 = vmatpush1.bf16.msra.mxu0 0
    %321 = vmatprep.subr.bf16.mxu0 0
    %322 = vmatpush1.bf16.msra.mxu0 0
    %323 = vmatprep.subr.bf16.mxu0 0
    %324 = vmatpush1.bf16.msra.mxu0 0
    %325 = vmatprep.subr.bf16.mxu0 0
    %326 = vmatpush1.bf16.msra.mxu0 0
    %327 = vmatprep.subr.bf16.mxu0 0
    %328 = vmatpush1.bf16.msra.mxu0 0
    %329 = vmatprep.subr.bf16.mxu0 0
    %330 = vmatpush1.bf16.msra.mxu0 0
    %331 = vmatprep.subr.bf16.mxu0 %v215
    %332 = vmatpush1.bf16.msra.mxu0 %v214
    %333 = vmatprep.subr.bf16.mxu0 %v207
    %334 = vmatpush1.bf16.msra.mxu0 %v206
    %335 = vmatprep.subr.bf16.mxu0 0
    %336 = vmatpush2.bf16.msra.mxu0 0
    %337 = vmatprep.subr.bf16.mxu0 0
    %338 = vmatpush2.bf16.msra.mxu0 0
    %339 = vmatprep.subr.bf16.mxu0 0
    %340 = vmatpush2.bf16.msra.mxu0 0
    %341 = vmatprep.subr.bf16.mxu0 0
    %342 = vmatpush2.bf16.msra.mxu0 0
    %343 = vmatprep.subr.bf16.mxu0 0
    %344 = vmatpush2.bf16.msra.mxu0 0
    %345 = vmatprep.subr.bf16.mxu0 0
    %346 = vmatpush2.bf16.msra.mxu0 0
    %347 = vmatprep.subr.bf16.mxu0 0
    %348 = vmatpush2.bf16.msra.mxu0 0
    %349 = vmatprep.subr.bf16.mxu0 0
    %350 = vmatpush2.bf16.msra.mxu0 0
    %351 = vmatprep.mubr.bf16.mxu0 0
    %352 = vmatmul.mubr.bf16.gmra.mxu0 %v235
    %v353 = vpop.f32.mrf.mxu0
    %v354 = vadd.f32 %v126, %v353
    %v355 = vpop.f32.mrf.mxu0
    %v356 = vadd.f32 %v130, %v355
    %v357 = vpop.f32.mrf.mxu0
    %v358 = vpop.f32.mrf.mxu0
    %359 = vdwg.mxu0
    %360 = vmatprep.subr.bf16.mxu0 0
    %361 = vmatpush1.bf16.msra.mxu0 0
    %362 = vmatprep.subr.bf16.mxu0 0
    %363 = vmatpush1.bf16.msra.mxu0 0
    %364 = vmatprep.subr.bf16.mxu0 0
    %365 = vmatpush1.bf16.msra.mxu0 0
    %366 = vmatprep.subr.bf16.mxu0 0
    %367 = vmatpush1.bf16.msra.mxu0 0
    %368 = vmatprep.subr.bf16.mxu0 0
    %369 = vmatpush1.bf16.msra.mxu0 0
    %370 = vmatprep.subr.bf16.mxu0 0
    %371 = vmatpush1.bf16.msra.mxu0 0
    %372 = vmatprep.subr.bf16.mxu0 %v217
    %373 = vmatpush1.bf16.msra.mxu0 %v216
    %374 = vmatprep.subr.bf16.mxu0 %v209
    %375 = vmatpush1.bf16.msra.mxu0 %v208
    %376 = vmatprep.subr.bf16.mxu0 0
    %377 = vmatpush2.bf16.msra.mxu0 0
    %378 = vmatprep.subr.bf16.mxu0 0
    %379 = vmatpush2.bf16.msra.mxu0 0
    %380 = vmatprep.subr.bf16.mxu0 0
    %381 = vmatpush2.bf16.msra.mxu0 0
    %382 = vmatprep.subr.bf16.mxu0 0
    %383 = vmatpush2.bf16.msra.mxu0 0
    %384 = vmatprep.subr.bf16.mxu0 0
    %385 = vmatpush2.bf16.msra.mxu0 0
    %386 = vmatprep.subr.bf16.mxu0 0
    %387 = vmatpush2.bf16.msra.mxu0 0
    %388 = vmatprep.subr.bf16.mxu0 0
    %389 = vmatpush2.bf16.msra.mxu0 0
    %390 = vmatprep.subr.bf16.mxu0 0
    %391 = vmatpush2.bf16.msra.mxu0 0
    %392 = vmatprep.mubr.bf16.mxu0 0
    %393 = vmatmul.mubr.bf16.gmra.mxu0 %v235
    %v394 = vpop.f32.mrf.mxu0
    %v395 = vadd.f32 %v134, %v394
    %v396 = vpop.f32.mrf.mxu0
    %v397 = vadd.f32 %v138, %v396
    %v398 = vpop.f32.mrf.mxu0
    %v399 = vpop.f32.mrf.mxu0
    %400 = vdwg.mxu0
    %v409 = vcombine.low %v272, %v274
    %v410 = vcombine.low %v313, %v315
    %v412 = vunpack.c.l.s4 1983009808
    %v413 = vunpack.c.0.s8 %v412
    %v414 = vlaneseq
    %v415 = vshrl.u32 %v414, 7
    %v416 = vsub.s32 %v413, %v415
    %v417 = vrot.slane %v409, %v416
    %v419 = vunpack.c.l.s4 1983009808
    %v420 = vunpack.c.0.s8 %v419
    %v421 = vlaneseq
    %v422 = vshrl.u32 %v421, 7
    %v423 = vsub.s32 %v420, %v422
    %v424 = vrot.slane %v410, %v423
    %v425 = vcombine.low %v417, %v424
    %v426 = vcombine.low %v354, %v356
    %v427 = vcombine.low %v395, %v397
    %v429 = vunpack.c.l.s4 1983009808
    %v430 = vunpack.c.0.s8 %v429
    %v431 = vlaneseq
    %v432 = vshrl.u32 %v431, 7
    %v433 = vsub.s32 %v430, %v432
    %v434 = vrot.slane %v426, %v433
    %v436 = vunpack.c.l.s4 1983009808
    %v437 = vunpack.c.0.s8 %v436
    %v438 = vlaneseq
    %v439 = vshrl.u32 %v438, 7
    %v440 = vsub.s32 %v437, %v439
    %v441 = vrot.slane %v427, %v440
    %v442 = vcombine.low %v434, %v441
    %445 = vst [vmem:[#allocation2] sm:$0xff] %v425
    %446 = vst [vmem:[#allocation2 + $0x8] sm:$0xff] %v442
    // Predicated region
    $region14: #{mobilenet_forward.7} parent=1 // pred_check
      _
    $region15: #{mobilenet_forward.7} parent=1 // pred_check_branch
      %448 = sbr.rel (0) target = $region17
    $region16: #{mobilenet_forward.7} parent=1 // pred_region
      %s450 = ssub.s32 256, 256
      %451 = vsyncadd [#allocation3], %s450
      %s453 = sshll.u32 [#allocation2], 4
      %s454 = int_to_ptr.vmem [resolvable:$true] %s453
      %456 = dma.vmem_to_hbm [thread:$0]  %s454, 256, %s3, [#allocation3]
    $region17: #{mobilenet_forward.7} parent=1 // pred_fallthru
      _
    // Predicated region
    $region18: #{mobilenet_forward.7} parent=1 // pred_check
      _
    $region19: #{mobilenet_forward.7} parent=1 // pred_check_branch
      %458 = sbr.rel (0) target = $region21
    $region20: #{mobilenet_forward.7} parent=1 // pred_region
      %459 = dma.done [#allocation3], 256
    $region21: #{mobilenet_forward.7} parent=1 // pred_fallthru
      _
    %460 = vsyncpa [#allocation3], 1

</llo_original>
